<compile_context>
chip_gen: v7x
topology: tpu7x:2x2x1
jax: 0.10.0
libtpu: 0.0.40
codegen_flags: <defaults>
</compile_context>

<pallas_src>
import functools

import jax
import jax.numpy as jnp
from jax.experimental import pallas as pl
from jax.experimental.pallas import tpu as pltpu

INPUT_DIM = 14
HIDDEN_DIM = 32
LAYER_DIM = 2
OUTPUT_DIM = 1


def _lstm_kernel(x_ref, wih0_ref, b0_ref, wc_ref, b1_ref, wfc_ref, bfc_ref, out_ref):
    """Feature-major (batch-in-lanes) 2-layer LSTM forward.

    x_ref   : (T, D, Bb)  f32   inputs, batch in the lane dim
    wih0_ref: (4H, D)     f32   layer-0 input weights^T (i/f/o rows pre-scaled by 0.5)
    b0_ref  : (4H, 1)     f32   layer-0 bias (b_ih + b_hh, pre-scaled)
    wc_ref  : (8H, 2H)    bf16  [[whh0^T, 0], [wih1^T, whh1^T]]   (pre-scaled)
    b1_ref  : (4H, 1)     f32   layer-1 bias (pre-scaled)
    wfc_ref : (H, 1) f32, bfc_ref: (1, 1) f32
    out_ref : (1, Bb)     f32   sigmoid probabilities (lane-dense store)
    """
    T, D, Bb = x_ref.shape
    G = wih0_ref.shape[0]          # 4H
    H = G // 4

    wih0 = wih0_ref[...]
    wc = wc_ref[...]                                      # bf16
    b0 = jnp.broadcast_to(b0_ref[...], (G, Bb))           # hoisted broadcasts
    b1b = jnp.broadcast_to(b1_ref[...], (G, Bb))

    # Hoisted layer-0 input projection: T independent small MXU matmuls; only proj[0]
    # sits at the head of the serial recurrence chain.
    proj = [jnp.dot(wih0, x_ref[t], preferred_element_type=jnp.float32) + b0
            for t in range(T)]
    # Per-step addend for the fused (8H, Bb) gate slab of the skewed loop:
    #   rows 0:4H -> proj(t+1) (layer-0 gates at t+1), rows 4H:8H -> b1 (layer-1 at t).
    addend = [jnp.concatenate([proj[t + 1], b1b], axis=0) for t in range(T - 1)]

    def split_ifgo(sg, tg, base):
        # i/f/o rows were pre-scaled by 0.5 => sigmoid(x) = 0.5*tanh(x/2)+0.5; g stays tanh.
        return (sg[base:base + H], sg[base + H:base + 2 * H],
                tg[base + 2 * H:base + 3 * H], sg[base + 3 * H:base + 4 * H])

    # ---- prologue: layer-0 cell at t=0 (h0(-1)=c0(-1)=0, so no recurrent term) ----
    tg = jnp.tanh(proj[0])
    sg = 0.5 * tg + 0.5
    i0, f0, gg0, o0 = split_ifgo(sg, tg, 0)
    c0 = i0 * gg0                                          # f0 * 0 dropped
    h0 = o0 * jnp.tanh(c0)

    h1 = jnp.zeros((H, Bb), jnp.float32)
    c1 = jnp.zeros((H, Bb), jnp.float32)

    # ---- skewed main loop (fully unrolled): step t fuses layer-1(t) with layer-0(t+1).
    # Both depend only on h0(t) and h1(t-1) => one block-diagonal bf16 MXU matmul, one
    # gate tanh over (8H, Bb) and one cell tanh over (2H, Bb) per step.
    for t in range(T - 1):
        hcat = jnp.concatenate([h0, h1], axis=0).astype(wc.dtype)        # (2H, Bb) bf16
        comb = jnp.dot(wc, hcat, preferred_element_type=jnp.float32)     # (8H, Bb) f32
        tg = jnp.tanh(comb + addend[t])                                  # one EUP push
        sg = 0.5 * tg + 0.5
        i0n, f0n, gg0n, o0n = split_ifgo(sg, tg, 0)       # layer-0 gates for t+1
        i1, f1, gg1, o1 = split_ifgo(sg, tg, G)           # layer-1 gates for t
        c1 = f1 * c1 + i1 * gg1                           # c1(t)
        c0 = f0n * c0 + i0n * gg0n                        # c0(t+1)
        tc = jnp.tanh(jnp.concatenate([c0, c1], axis=0))  # one EUP push for both cells
        h0 = o0n * tc[:H]                                 # h0(t+1)
        h1 = o1 * tc[H:]                                  # h1(t)

    # ---- epilogue: layer-1 cell at t = T-1 (layer-0 rows of W_comb skipped) ----
    hcat = jnp.concatenate([h0, h1], axis=0).astype(wc.dtype)
    g1 = jnp.dot(wc[G:], hcat, preferred_element_type=jnp.float32) + b1b
    tg = jnp.tanh(g1)
    sg = 0.5 * tg + 0.5
    i1, f1, gg1, o1 = split_ifgo(sg, tg, 0)
    c1 = f1 * c1 + i1 * gg1
    h1 = o1 * jnp.tanh(c1)                                # h1(T-1)

    # final fc (H -> 1): VPU multiply + sublane reduce; lane-dense (1, Bb) output store.
    logits = jnp.sum(h1 * wfc_ref[...], axis=0, keepdims=True) + bfc_ref[...]
    out_ref[...] = jax.nn.sigmoid(logits)


def _prep_params(params):
    """Pre-transform weights for the feature-major kernel:
       - scale i/f/o gate rows by 0.5 (single-tanh sigmoid trick),
       - transpose all weights (features lead, batch in lanes inside the kernel),
       - build the block-diagonal fused recurrent matrix W_comb^T = [[whh0^T,0],[wih1^T,whh1^T]]
         and cast it to bf16 (f32 accumulation happens in the MXU)."""
    H = HIDDEN_DIM
    G = 4 * H
    half = jnp.full((H,), 0.5, jnp.float32)
    one = jnp.ones((H,), jnp.float32)
    gate_scale = jnp.concatenate([half, half, one, half])        # i | f | g | o

    wih0_t = (params["wih0"] * gate_scale).T                     # (G, D)
    b0 = (params["b0"] * gate_scale).reshape(G, 1)
    b1 = (params["b1"] * gate_scale).reshape(G, 1)

    whh0_t = (params["whh0"] * gate_scale).T                     # (G, H)
    wih1_t = (params["wih1"] * gate_scale).T                     # (G, H)
    whh1_t = (params["whh1"] * gate_scale).T                     # (G, H)
    zeros = jnp.zeros((G, H), jnp.float32)
    wc = jnp.block([[whh0_t, zeros],
                    [wih1_t, whh1_t]]).astype(jnp.bfloat16)      # (2G, 2H)

    wfc = params["wfc"].reshape(H, 1)
    bfc = params["bfc"].reshape(1, 1)
    return wih0_t, b0, wc, b1, wfc, bfc


@functools.partial(jax.jit, static_argnames=("block_b",))
def lstm_model_forward(x_btd, params, block_b=128):
    """x_btd: (B, T, D) float32. Returns (B, 1) sigmoid probabilities (eval mode).
    block_b should be a multiple of 128 (batch lives in the lane dimension)."""
    B, T, D = x_btd.shape
    H = HIDDEN_DIM
    G = 4 * H

    # Pad batch to a multiple of block_b lanes. Padding is free in vreg/VPU terms
    # (vector ops are full-width regardless) and keeps every block lane-dense.
    # One grid step for B <= 128 (no per-step overhead on single-TC v5e/v6e);
    # multiple "parallel" blocks for large B so both v7x TensorCores get work.
    n_blocks = pl.cdiv(B, block_b)
    Bp = n_blocks * block_b
    if Bp != B:
        x_btd = jnp.pad(x_btd, ((0, Bp - B), (0, 0), (0, 0)))
    x_tdb = jnp.transpose(x_btd, (1, 2, 0))          # (T, D, Bp) — layout plumbing only

    wih0, b0, wc, b1, wfc, bfc = _prep_params(params)

    def rep(shape):
        return pl.BlockSpec(shape, lambda i: (0,) * len(shape))

    out = pl.pallas_call(
        _lstm_kernel,
        out_shape=jax.ShapeDtypeStruct((1, Bp), jnp.float32),
        grid=(n_blocks,),
        in_specs=[
            pl.BlockSpec((T, D, block_b), lambda i: (0, 0, i)),
            rep((G, D)),          # wih0^T (pre-scaled)
            rep((G, 1)),          # b0
            rep((2 * G, 2 * H)),  # fused block-diagonal recurrent weights (bf16)
            rep((G, 1)),          # b1
            rep((H, 1)),          # fc weight column
            rep((1, 1)),          # fc bias
        ],
        out_specs=pl.BlockSpec((1, block_b), lambda i: (0, i)),
        compiler_params=pltpu.CompilerParams(dimension_semantics=("parallel",)),
    )(x_tdb, wih0, b0, wc, b1, wfc, bfc)
    return out[0, :B].reshape(B, OUTPUT_DIM)


def init_params(key, input_dim=INPUT_DIM, hidden_dim=HIDDEN_DIM, output_dim=OUTPUT_DIM):
    """Deterministic init mimicking PyTorch's uniform(-1/sqrt(H), 1/sqrt(H))."""
    ks = jax.random.split(key, 10)
    bound = 1.0 / jnp.sqrt(jnp.float32(hidden_dim))

    def u(k, shape):
        return jax.random.uniform(k, shape, jnp.float32, -bound, bound)

    H = hidden_dim
    return {
        # layer 0: weight_ih (4H, D) stored transposed (D, 4H); bias = b_ih + b_hh
        "wih0": u(ks[0], (input_dim, 4 * H)),
        "whh0": u(ks[1], (H, 4 * H)),
        "b0":   u(ks[2], (1, 4 * H)) + u(ks[3], (1, 4 * H)),
        # layer 1: input is hidden of layer 0
        "wih1": u(ks[4], (H, 4 * H)),
        "whh1": u(ks[5], (H, 4 * H)),
        "b1":   u(ks[6], (1, 4 * H)) + u(ks[7], (1, 4 * H)),
        # fc: PyTorch weight (1, H) stored transposed (H, 1)
        "wfc":  u(ks[8], (H, output_dim)),
        "bfc":  u(ks[9], (1, output_dim)),
    }


def _reference_forward(x_btd, params):
    """Plain-JAX f32 reference with PyTorch LSTM semantics (gate order i|f|g|o, eval mode)."""
    B, T, _ = x_btd.shape
    H = HIDDEN_DIM

    def cell(xt, h, c, wih, whh, b):
        gates = xt @ wih + h @ whh + b
        i = jax.nn.sigmoid(gates[:, 0 * H:1 * H])
        f = jax.nn.sigmoid(gates[:, 1 * H:2 * H])
        g = jnp.tanh(gates[:, 2 * H:3 * H])
        o = jax.nn.sigmoid(gates[:, 3 * H:4 * H])
        c = f * c + i * g
        h = o * jnp.tanh(c)
        return h, c

    h0 = c0 = h1 = c1 = jnp.zeros((B, H), jnp.float32)
    for t in range(T):
        xt = x_btd[:, t, :]
        h0, c0 = cell(xt, h0, c0, params["wih0"], params["whh0"], params["b0"])
        h1, c1 = cell(h0, h1, c1, params["wih1"], params["whh1"], params["b1"])
    return jax.nn.sigmoid(h1 @ params["wfc"] + params["bfc"])


if __name__ == "__main__":
    key = jax.random.PRNGKey(0)
    k_param, k_x = jax.random.split(key)

    batch, seq_len = 4, 8
    x = jax.random.normal(k_x, (batch, seq_len, INPUT_DIM), dtype=jnp.float32)
    params = init_params(k_param)

    out = lstm_model_forward(x, params)
    out = jax.block_until_ready(out)

    ref = _reference_forward(x, params)
    assert out.shape == (batch, OUTPUT_DIM)
    assert bool(jnp.all((out >= 0.0) & (out <= 1.0)))
    # Tolerance covers the bf16 recurrent-matmul operands (f32 accumulation); observed
    # error is typically ~1e-3 for sigmoid outputs vs the pure-f32 reference.
    assert bool(jnp.allclose(out, ref, atol=1e-2)), (out, ref)
    print("KERNEL_OK")
</pallas_src>

<mosaic_0001>
module attributes {stable_mosaic.version = 11 : i64} {
  func.func @_lstm_kernel(%arg0: i32, %arg1: memref<8x14x128xf32, #tpu.memory_space<vmem>>, %arg2: memref<128x14xf32, #tpu.memory_space<vmem>>, %arg3: memref<128x1xf32, #tpu.memory_space<vmem>>, %arg4: memref<256x64xbf16, #tpu.memory_space<vmem>>, %arg5: memref<128x1xf32, #tpu.memory_space<vmem>>, %arg6: memref<32x1xf32, #tpu.memory_space<vmem>>, %arg7: memref<1x1xf32, #tpu.memory_space<vmem>>, %arg8: memref<1x128xf32, #tpu.memory_space<vmem>>) attributes {dimension_semantics = [#tpu.dimension_semantics<parallel>], iteration_bounds = array<i64: 1>, scalar_prefetch = 0 : i64, scratch_operands = 0 : i64, tpu.core_type = #tpu.core_type<tc>, window_params = [{transform_indices = @transform_0, window_bounds = array<i64: 8, 14, 128>}, {pipeline_mode = #tpu.pipeline_mode<synchronous>, transform_indices = @transform_1, window_bounds = array<i64: 128, 14>}, {pipeline_mode = #tpu.pipeline_mode<synchronous>, transform_indices = @transform_2, window_bounds = array<i64: 128, 1>}, {pipeline_mode = #tpu.pipeline_mode<synchronous>, transform_indices = @transform_3, window_bounds = array<i64: 256, 64>}, {pipeline_mode = #tpu.pipeline_mode<synchronous>, transform_indices = @transform_4, window_bounds = array<i64: 128, 1>}, {pipeline_mode = #tpu.pipeline_mode<synchronous>, transform_indices = @transform_5, window_bounds = array<i64: 32, 1>}, {pipeline_mode = #tpu.pipeline_mode<synchronous>, transform_indices = @transform_6, window_bounds = array<i64: 1, 1>}, {transform_indices = @transform_7, window_bounds = array<i64: 1, 128>}]} {
    %c0 = arith.constant 0 : index
    %c0_0 = arith.constant 0 : index
    %0 = vector.load %arg2[%c0, %c0_0] : memref<128x14xf32, #tpu.memory_space<vmem>>, vector<128x14xf32>
    %c0_1 = arith.constant 0 : index
    %c0_2 = arith.constant 0 : index
    %1 = vector.load %arg4[%c0_1, %c0_2] : memref<256x64xbf16, #tpu.memory_space<vmem>>, vector<256x64xbf16>
    %c0_3 = arith.constant 0 : index
    %c0_4 = arith.constant 0 : index
    %2 = vector.load %arg3[%c0_3, %c0_4] : memref<128x1xf32, #tpu.memory_space<vmem>>, vector<128x1xf32>
    %3 = vector.shape_cast %2 : vector<128x1xf32> to vector<128x1xf32>
    %4 = vector.broadcast %3 : vector<128x1xf32> to vector<128x128xf32>
    %c0_5 = arith.constant 0 : index
    %c0_6 = arith.constant 0 : index
    %5 = vector.load %arg5[%c0_5, %c0_6] : memref<128x1xf32, #tpu.memory_space<vmem>>, vector<128x1xf32>
    %6 = vector.shape_cast %5 : vector<128x1xf32> to vector<128x1xf32>
    %7 = vector.broadcast %6 : vector<128x1xf32> to vector<128x128xf32>
    %c0_7 = arith.constant 0 : index
    %c0_8 = arith.constant 0 : index
    %c0_9 = arith.constant 0 : index
    %8 = vector.load %arg1[%c0_7, %c0_8, %c0_9] : memref<8x14x128xf32, #tpu.memory_space<vmem>>, vector<1x14x128xf32>
    %9 = vector.shape_cast %8 : vector<1x14x128xf32> to vector<14x128xf32>
    %cst = arith.constant dense<0.000000e+00> : vector<128x128xf32>
    %10 = tpu.matmul %0, %9, %cst {dimension_numbers = #tpu.dot_dimension_numbers<[1], [0], [0], [1], [0, 0, 1, 1], [], []>} : vector<128x14xf32>, vector<14x128xf32>, vector<128x128xf32> -> vector<128x128xf32>
    %11 = arith.addf %10, %4 : vector<128x128xf32>
    %c1 = arith.constant 1 : index
    %c0_10 = arith.constant 0 : index
    %c0_11 = arith.constant 0 : index
    %12 = vector.load %arg1[%c1, %c0_10, %c0_11] : memref<8x14x128xf32, #tpu.memory_space<vmem>>, vector<1x14x128xf32>
    %13 = vector.shape_cast %12 : vector<1x14x128xf32> to vector<14x128xf32>
    %cst_12 = arith.constant dense<0.000000e+00> : vector<128x128xf32>
    %14 = tpu.matmul %0, %13, %cst_12 {dimension_numbers = #tpu.dot_dimension_numbers<[1], [0], [0], [1], [0, 0, 1, 1], [], []>} : vector<128x14xf32>, vector<14x128xf32>, vector<128x128xf32> -> vector<128x128xf32>
    %15 = arith.addf %14, %4 : vector<128x128xf32>
    %c2 = arith.constant 2 : index
    %c0_13 = arith.constant 0 : index
    %c0_14 = arith.constant 0 : index
    %16 = vector.load %arg1[%c2, %c0_13, %c0_14] : memref<8x14x128xf32, #tpu.memory_space<vmem>>, vector<1x14x128xf32>
    %17 = vector.shape_cast %16 : vector<1x14x128xf32> to vector<14x128xf32>
    %cst_15 = arith.constant dense<0.000000e+00> : vector<128x128xf32>
    %18 = tpu.matmul %0, %17, %cst_15 {dimension_numbers = #tpu.dot_dimension_numbers<[1], [0], [0], [1], [0, 0, 1, 1], [], []>} : vector<128x14xf32>, vector<14x128xf32>, vector<128x128xf32> -> vector<128x128xf32>
    %19 = arith.addf %18, %4 : vector<128x128xf32>
    %c3 = arith.constant 3 : index
    %c0_16 = arith.constant 0 : index
    %c0_17 = arith.constant 0 : index
    %20 = vector.load %arg1[%c3, %c0_16, %c0_17] : memref<8x14x128xf32, #tpu.memory_space<vmem>>, vector<1x14x128xf32>
    %21 = vector.shape_cast %20 : vector<1x14x128xf32> to vector<14x128xf32>
    %cst_18 = arith.constant dense<0.000000e+00> : vector<128x128xf32>
    %22 = tpu.matmul %0, %21, %cst_18 {dimension_numbers = #tpu.dot_dimension_numbers<[1], [0], [0], [1], [0, 0, 1, 1], [], []>} : vector<128x14xf32>, vector<14x128xf32>, vector<128x128xf32> -> vector<128x128xf32>
    %23 = arith.addf %22, %4 : vector<128x128xf32>
    %c4 = arith.constant 4 : index
    %c0_19 = arith.constant 0 : index
    %c0_20 = arith.constant 0 : index
    %24 = vector.load %arg1[%c4, %c0_19, %c0_20] : memref<8x14x128xf32, #tpu.memory_space<vmem>>, vector<1x14x128xf32>
    %25 = vector.shape_cast %24 : vector<1x14x128xf32> to vector<14x128xf32>
    %cst_21 = arith.constant dense<0.000000e+00> : vector<128x128xf32>
    %26 = tpu.matmul %0, %25, %cst_21 {dimension_numbers = #tpu.dot_dimension_numbers<[1], [0], [0], [1], [0, 0, 1, 1], [], []>} : vector<128x14xf32>, vector<14x128xf32>, vector<128x128xf32> -> vector<128x128xf32>
    %27 = arith.addf %26, %4 : vector<128x128xf32>
    %c5 = arith.constant 5 : index
    %c0_22 = arith.constant 0 : index
    %c0_23 = arith.constant 0 : index
    %28 = vector.load %arg1[%c5, %c0_22, %c0_23] : memref<8x14x128xf32, #tpu.memory_space<vmem>>, vector<1x14x128xf32>
    %29 = vector.shape_cast %28 : vector<1x14x128xf32> to vector<14x128xf32>
    %cst_24 = arith.constant dense<0.000000e+00> : vector<128x128xf32>
    %30 = tpu.matmul %0, %29, %cst_24 {dimension_numbers = #tpu.dot_dimension_numbers<[1], [0], [0], [1], [0, 0, 1, 1], [], []>} : vector<128x14xf32>, vector<14x128xf32>, vector<128x128xf32> -> vector<128x128xf32>
    %31 = arith.addf %30, %4 : vector<128x128xf32>
    %c6 = arith.constant 6 : index
    %c0_25 = arith.constant 0 : index
    %c0_26 = arith.constant 0 : index
    %32 = vector.load %arg1[%c6, %c0_25, %c0_26] : memref<8x14x128xf32, #tpu.memory_space<vmem>>, vector<1x14x128xf32>
    %33 = vector.shape_cast %32 : vector<1x14x128xf32> to vector<14x128xf32>
    %cst_27 = arith.constant dense<0.000000e+00> : vector<128x128xf32>
    %34 = tpu.matmul %0, %33, %cst_27 {dimension_numbers = #tpu.dot_dimension_numbers<[1], [0], [0], [1], [0, 0, 1, 1], [], []>} : vector<128x14xf32>, vector<14x128xf32>, vector<128x128xf32> -> vector<128x128xf32>
    %35 = arith.addf %34, %4 : vector<128x128xf32>
    %c7 = arith.constant 7 : index
    %c0_28 = arith.constant 0 : index
    %c0_29 = arith.constant 0 : index
    %36 = vector.load %arg1[%c7, %c0_28, %c0_29] : memref<8x14x128xf32, #tpu.memory_space<vmem>>, vector<1x14x128xf32>
    %37 = vector.shape_cast %36 : vector<1x14x128xf32> to vector<14x128xf32>
    %cst_30 = arith.constant dense<0.000000e+00> : vector<128x128xf32>
    %38 = tpu.matmul %0, %37, %cst_30 {dimension_numbers = #tpu.dot_dimension_numbers<[1], [0], [0], [1], [0, 0, 1, 1], [], []>} : vector<128x14xf32>, vector<14x128xf32>, vector<128x128xf32> -> vector<128x128xf32>
    %39 = arith.addf %38, %4 : vector<128x128xf32>
    %40 = tpu.concatenate %15, %7 in 0 : vector<128x128xf32>, vector<128x128xf32> -> vector<256x128xf32>
    %41 = tpu.concatenate %19, %7 in 0 : vector<128x128xf32>, vector<128x128xf32> -> vector<256x128xf32>
    %42 = tpu.concatenate %23, %7 in 0 : vector<128x128xf32>, vector<128x128xf32> -> vector<256x128xf32>
    %43 = tpu.concatenate %27, %7 in 0 : vector<128x128xf32>, vector<128x128xf32> -> vector<256x128xf32>
    %44 = tpu.concatenate %31, %7 in 0 : vector<128x128xf32>, vector<128x128xf32> -> vector<256x128xf32>
    %45 = tpu.concatenate %35, %7 in 0 : vector<128x128xf32>, vector<128x128xf32> -> vector<256x128xf32>
    %46 = tpu.concatenate %39, %7 in 0 : vector<128x128xf32>, vector<128x128xf32> -> vector<256x128xf32>
    %47 = math.tanh %11 : vector<128x128xf32>
    %cst_31 = arith.constant 5.000000e-01 : f32
    %48 = vector.broadcast %cst_31 : f32 to vector<128x128xf32>
    %49 = arith.mulf %48, %47 : vector<128x128xf32>
    %cst_32 = arith.constant 5.000000e-01 : f32
    %50 = vector.broadcast %cst_32 : f32 to vector<128x128xf32>
    %51 = arith.addf %49, %50 : vector<128x128xf32>
    %52 = vector.extract_strided_slice %51 {offsets = [0, 0], sizes = [32, 128], strides = [1, 1]} : vector<128x128xf32> to vector<32x128xf32>
    %53 = vector.extract_strided_slice %47 {offsets = [64, 0], sizes = [32, 128], strides = [1, 1]} : vector<128x128xf32> to vector<32x128xf32>
    %54 = vector.extract_strided_slice %51 {offsets = [96, 0], sizes = [32, 128], strides = [1, 1]} : vector<128x128xf32> to vector<32x128xf32>
    %55 = arith.mulf %52, %53 : vector<32x128xf32>
    %56 = math.tanh %55 : vector<32x128xf32>
    %57 = arith.mulf %54, %56 : vector<32x128xf32>
    %cst_33 = arith.constant 0.000000e+00 : f32
    %58 = vector.broadcast %cst_33 : f32 to vector<32x128xf32>
    %cst_34 = arith.constant 0.000000e+00 : f32
    %59 = vector.broadcast %cst_34 : f32 to vector<32x128xf32>
    %60 = tpu.concatenate %57, %58 in 0 : vector<32x128xf32>, vector<32x128xf32> -> vector<64x128xf32>
    %61 = arith.truncf %60 : vector<64x128xf32> to vector<64x128xbf16>
    %cst_35 = arith.constant dense<0.000000e+00> : vector<256x128xf32>
    %62 = tpu.matmul %1, %61, %cst_35 {dimension_numbers = #tpu.dot_dimension_numbers<[1], [0], [0], [1], [0, 0, 1, 1], [], []>} : vector<256x64xbf16>, vector<64x128xbf16>, vector<256x128xf32> -> vector<256x128xf32>
    %63 = arith.addf %62, %40 : vector<256x128xf32>
    %64 = math.tanh %63 : vector<256x128xf32>
    %cst_36 = arith.constant 5.000000e-01 : f32
    %65 = vector.broadcast %cst_36 : f32 to vector<256x128xf32>
    %66 = arith.mulf %65, %64 : vector<256x128xf32>
    %cst_37 = arith.constant 5.000000e-01 : f32
    %67 = vector.broadcast %cst_37 : f32 to vector<256x128xf32>
    %68 = arith.addf %66, %67 : vector<256x128xf32>
    %69 = vector.extract_strided_slice %68 {offsets = [0, 0], sizes = [32, 128], strides = [1, 1]} : vector<256x128xf32> to vector<32x128xf32>
    %70 = vector.extract_strided_slice %68 {offsets = [32, 0], sizes = [32, 128], strides = [1, 1]} : vector<256x128xf32> to vector<32x128xf32>
    %71 = vector.extract_strided_slice %64 {offsets = [64, 0], sizes = [32, 128], strides = [1, 1]} : vector<256x128xf32> to vector<32x128xf32>
    %72 = vector.extract_strided_slice %68 {offsets = [96, 0], sizes = [32, 128], strides = [1, 1]} : vector<256x128xf32> to vector<32x128xf32>
    %73 = vector.extract_strided_slice %68 {offsets = [128, 0], sizes = [32, 128], strides = [1, 1]} : vector<256x128xf32> to vector<32x128xf32>
    %74 = vector.extract_strided_slice %68 {offsets = [160, 0], sizes = [32, 128], strides = [1, 1]} : vector<256x128xf32> to vector<32x128xf32>
    %75 = vector.extract_strided_slice %64 {offsets = [192, 0], sizes = [32, 128], strides = [1, 1]} : vector<256x128xf32> to vector<32x128xf32>
    %76 = vector.extract_strided_slice %68 {offsets = [224, 0], sizes = [32, 128], strides = [1, 1]} : vector<256x128xf32> to vector<32x128xf32>
    %77 = arith.mulf %74, %59 : vector<32x128xf32>
    %78 = arith.mulf %73, %75 : vector<32x128xf32>
    %79 = arith.addf %77, %78 : vector<32x128xf32>
    %80 = arith.mulf %70, %55 : vector<32x128xf32>
    %81 = arith.mulf %69, %71 : vector<32x128xf32>
    %82 = arith.addf %80, %81 : vector<32x128xf32>
    %83 = tpu.concatenate %82, %79 in 0 : vector<32x128xf32>, vector<32x128xf32> -> vector<64x128xf32>
    %84 = math.tanh %83 : vector<64x128xf32>
    %85 = vector.extract_strided_slice %84 {offsets = [0, 0], sizes = [32, 128], strides = [1, 1]} : vector<64x128xf32> to vector<32x128xf32>
    %86 = arith.mulf %72, %85 : vector<32x128xf32>
    %87 = vector.extract_strided_slice %84 {offsets = [32, 0], sizes = [32, 128], strides = [1, 1]} : vector<64x128xf32> to vector<32x128xf32>
    %88 = arith.mulf %76, %87 : vector<32x128xf32>
    %89 = tpu.concatenate %86, %88 in 0 : vector<32x128xf32>, vector<32x128xf32> -> vector<64x128xf32>
    %90 = arith.truncf %89 : vector<64x128xf32> to vector<64x128xbf16>
    %cst_38 = arith.constant dense<0.000000e+00> : vector<256x128xf32>
    %91 = tpu.matmul %1, %90, %cst_38 {dimension_numbers = #tpu.dot_dimension_numbers<[1], [0], [0], [1], [0, 0, 1, 1], [], []>} : vector<256x64xbf16>, vector<64x128xbf16>, vector<256x128xf32> -> vector<256x128xf32>
    %92 = arith.addf %91, %41 : vector<256x128xf32>
    %93 = math.tanh %92 : vector<256x128xf32>
    %cst_39 = arith.constant 5.000000e-01 : f32
    %94 = vector.broadcast %cst_39 : f32 to vector<256x128xf32>
    %95 = arith.mulf %94, %93 : vector<256x128xf32>
    %cst_40 = arith.constant 5.000000e-01 : f32
    %96 = vector.broadcast %cst_40 : f32 to vector<256x128xf32>
    %97 = arith.addf %95, %96 : vector<256x128xf32>
    %98 = vector.extract_strided_slice %97 {offsets = [0, 0], sizes = [32, 128], strides = [1, 1]} : vector<256x128xf32> to vector<32x128xf32>
    %99 = vector.extract_strided_slice %97 {offsets = [32, 0], sizes = [32, 128], strides = [1, 1]} : vector<256x128xf32> to vector<32x128xf32>
    %100 = vector.extract_strided_slice %93 {offsets = [64, 0], sizes = [32, 128], strides = [1, 1]} : vector<256x128xf32> to vector<32x128xf32>
    %101 = vector.extract_strided_slice %97 {offsets = [96, 0], sizes = [32, 128], strides = [1, 1]} : vector<256x128xf32> to vector<32x128xf32>
    %102 = vector.extract_strided_slice %97 {offsets = [128, 0], sizes = [32, 128], strides = [1, 1]} : vector<256x128xf32> to vector<32x128xf32>
    %103 = vector.extract_strided_slice %97 {offsets = [160, 0], sizes = [32, 128], strides = [1, 1]} : vector<256x128xf32> to vector<32x128xf32>
    %104 = vector.extract_strided_slice %93 {offsets = [192, 0], sizes = [32, 128], strides = [1, 1]} : vector<256x128xf32> to vector<32x128xf32>
    %105 = vector.extract_strided_slice %97 {offsets = [224, 0], sizes = [32, 128], strides = [1, 1]} : vector<256x128xf32> to vector<32x128xf32>
    %106 = arith.mulf %103, %79 : vector<32x128xf32>
    %107 = arith.mulf %102, %104 : vector<32x128xf32>
    %108 = arith.addf %106, %107 : vector<32x128xf32>
    %109 = arith.mulf %99, %82 : vector<32x128xf32>
    %110 = arith.mulf %98, %100 : vector<32x128xf32>
    %111 = arith.addf %109, %110 : vector<32x128xf32>
    %112 = tpu.concatenate %111, %108 in 0 : vector<32x128xf32>, vector<32x128xf32> -> vector<64x128xf32>
    %113 = math.tanh %112 : vector<64x128xf32>
    %114 = vector.extract_strided_slice %113 {offsets = [0, 0], sizes = [32, 128], strides = [1, 1]} : vector<64x128xf32> to vector<32x128xf32>
    %115 = arith.mulf %101, %114 : vector<32x128xf32>
    %116 = vector.extract_strided_slice %113 {offsets = [32, 0], sizes = [32, 128], strides = [1, 1]} : vector<64x128xf32> to vector<32x128xf32>
    %117 = arith.mulf %105, %116 : vector<32x128xf32>
    %118 = tpu.concatenate %115, %117 in 0 : vector<32x128xf32>, vector<32x128xf32> -> vector<64x128xf32>
    %119 = arith.truncf %118 : vector<64x128xf32> to vector<64x128xbf16>
    %cst_41 = arith.constant dense<0.000000e+00> : vector<256x128xf32>
    %120 = tpu.matmul %1, %119, %cst_41 {dimension_numbers = #tpu.dot_dimension_numbers<[1], [0], [0], [1], [0, 0, 1, 1], [], []>} : vector<256x64xbf16>, vector<64x128xbf16>, vector<256x128xf32> -> vector<256x128xf32>
    %121 = arith.addf %120, %42 : vector<256x128xf32>
    %122 = math.tanh %121 : vector<256x128xf32>
    %cst_42 = arith.constant 5.000000e-01 : f32
    %123 = vector.broadcast %cst_42 : f32 to vector<256x128xf32>
    %124 = arith.mulf %123, %122 : vector<256x128xf32>
    %cst_43 = arith.constant 5.000000e-01 : f32
    %125 = vector.broadcast %cst_43 : f32 to vector<256x128xf32>
    %126 = arith.addf %124, %125 : vector<256x128xf32>
    %127 = vector.extract_strided_slice %126 {offsets = [0, 0], sizes = [32, 128], strides = [1, 1]} : vector<256x128xf32> to vector<32x128xf32>
    %128 = vector.extract_strided_slice %126 {offsets = [32, 0], sizes = [32, 128], strides = [1, 1]} : vector<256x128xf32> to vector<32x128xf32>
    %129 = vector.extract_strided_slice %122 {offsets = [64, 0], sizes = [32, 128], strides = [1, 1]} : vector<256x128xf32> to vector<32x128xf32>
    %130 = vector.extract_strided_slice %126 {offsets = [96, 0], sizes = [32, 128], strides = [1, 1]} : vector<256x128xf32> to vector<32x128xf32>
    %131 = vector.extract_strided_slice %126 {offsets = [128, 0], sizes = [32, 128], strides = [1, 1]} : vector<256x128xf32> to vector<32x128xf32>
    %132 = vector.extract_strided_slice %126 {offsets = [160, 0], sizes = [32, 128], strides = [1, 1]} : vector<256x128xf32> to vector<32x128xf32>
    %133 = vector.extract_strided_slice %122 {offsets = [192, 0], sizes = [32, 128], strides = [1, 1]} : vector<256x128xf32> to vector<32x128xf32>
    %134 = vector.extract_strided_slice %126 {offsets = [224, 0], sizes = [32, 128], strides = [1, 1]} : vector<256x128xf32> to vector<32x128xf32>
    %135 = arith.mulf %132, %108 : vector<32x128xf32>
    %136 = arith.mulf %131, %133 : vector<32x128xf32>
    %137 = arith.addf %135, %136 : vector<32x128xf32>
    %138 = arith.mulf %128, %111 : vector<32x128xf32>
    %139 = arith.mulf %127, %129 : vector<32x128xf32>
    %140 = arith.addf %138, %139 : vector<32x128xf32>
    %141 = tpu.concatenate %140, %137 in 0 : vector<32x128xf32>, vector<32x128xf32> -> vector<64x128xf32>
    %142 = math.tanh %141 : vector<64x128xf32>
    %143 = vector.extract_strided_slice %142 {offsets = [0, 0], sizes = [32, 128], strides = [1, 1]} : vector<64x128xf32> to vector<32x128xf32>
    %144 = arith.mulf %130, %143 : vector<32x128xf32>
    %145 = vector.extract_strided_slice %142 {offsets = [32, 0], sizes = [32, 128], strides = [1, 1]} : vector<64x128xf32> to vector<32x128xf32>
    %146 = arith.mulf %134, %145 : vector<32x128xf32>
    %147 = tpu.concatenate %144, %146 in 0 : vector<32x128xf32>, vector<32x128xf32> -> vector<64x128xf32>
    %148 = arith.truncf %147 : vector<64x128xf32> to vector<64x128xbf16>
    %cst_44 = arith.constant dense<0.000000e+00> : vector<256x128xf32>
    %149 = tpu.matmul %1, %148, %cst_44 {dimension_numbers = #tpu.dot_dimension_numbers<[1], [0], [0], [1], [0, 0, 1, 1], [], []>} : vector<256x64xbf16>, vector<64x128xbf16>, vector<256x128xf32> -> vector<256x128xf32>
    %150 = arith.addf %149, %43 : vector<256x128xf32>
    %151 = math.tanh %150 : vector<256x128xf32>
    %cst_45 = arith.constant 5.000000e-01 : f32
    %152 = vector.broadcast %cst_45 : f32 to vector<256x128xf32>
    %153 = arith.mulf %152, %151 : vector<256x128xf32>
    %cst_46 = arith.constant 5.000000e-01 : f32
    %154 = vector.broadcast %cst_46 : f32 to vector<256x128xf32>
    %155 = arith.addf %153, %154 : vector<256x128xf32>
    %156 = vector.extract_strided_slice %155 {offsets = [0, 0], sizes = [32, 128], strides = [1, 1]} : vector<256x128xf32> to vector<32x128xf32>
    %157 = vector.extract_strided_slice %155 {offsets = [32, 0], sizes = [32, 128], strides = [1, 1]} : vector<256x128xf32> to vector<32x128xf32>
    %158 = vector.extract_strided_slice %151 {offsets = [64, 0], sizes = [32, 128], strides = [1, 1]} : vector<256x128xf32> to vector<32x128xf32>
    %159 = vector.extract_strided_slice %155 {offsets = [96, 0], sizes = [32, 128], strides = [1, 1]} : vector<256x128xf32> to vector<32x128xf32>
    %160 = vector.extract_strided_slice %155 {offsets = [128, 0], sizes = [32, 128], strides = [1, 1]} : vector<256x128xf32> to vector<32x128xf32>
    %161 = vector.extract_strided_slice %155 {offsets = [160, 0], sizes = [32, 128], strides = [1, 1]} : vector<256x128xf32> to vector<32x128xf32>
    %162 = vector.extract_strided_slice %151 {offsets = [192, 0], sizes = [32, 128], strides = [1, 1]} : vector<256x128xf32> to vector<32x128xf32>
    %163 = vector.extract_strided_slice %155 {offsets = [224, 0], sizes = [32, 128], strides = [1, 1]} : vector<256x128xf32> to vector<32x128xf32>
    %164 = arith.mulf %161, %137 : vector<32x128xf32>
    %165 = arith.mulf %160, %162 : vector<32x128xf32>
    %166 = arith.addf %164, %165 : vector<32x128xf32>
    %167 = arith.mulf %157, %140 : vector<32x128xf32>
    %168 = arith.mulf %156, %158 : vector<32x128xf32>
    %169 = arith.addf %167, %168 : vector<32x128xf32>
    %170 = tpu.concatenate %169, %166 in 0 : vector<32x128xf32>, vector<32x128xf32> -> vector<64x128xf32>
    %171 = math.tanh %170 : vector<64x128xf32>
    %172 = vector.extract_strided_slice %171 {offsets = [0, 0], sizes = [32, 128], strides = [1, 1]} : vector<64x128xf32> to vector<32x128xf32>
    %173 = arith.mulf %159, %172 : vector<32x128xf32>
    %174 = vector.extract_strided_slice %171 {offsets = [32, 0], sizes = [32, 128], strides = [1, 1]} : vector<64x128xf32> to vector<32x128xf32>
    %175 = arith.mulf %163, %174 : vector<32x128xf32>
    %176 = tpu.concatenate %173, %175 in 0 : vector<32x128xf32>, vector<32x128xf32> -> vector<64x128xf32>
    %177 = arith.truncf %176 : vector<64x128xf32> to vector<64x128xbf16>
    %cst_47 = arith.constant dense<0.000000e+00> : vector<256x128xf32>
    %178 = tpu.matmul %1, %177, %cst_47 {dimension_numbers = #tpu.dot_dimension_numbers<[1], [0], [0], [1], [0, 0, 1, 1], [], []>} : vector<256x64xbf16>, vector<64x128xbf16>, vector<256x128xf32> -> vector<256x128xf32>
    %179 = arith.addf %178, %44 : vector<256x128xf32>
    %180 = math.tanh %179 : vector<256x128xf32>
    %cst_48 = arith.constant 5.000000e-01 : f32
    %181 = vector.broadcast %cst_48 : f32 to vector<256x128xf32>
    %182 = arith.mulf %181, %180 : vector<256x128xf32>
    %cst_49 = arith.constant 5.000000e-01 : f32
    %183 = vector.broadcast %cst_49 : f32 to vector<256x128xf32>
    %184 = arith.addf %182, %183 : vector<256x128xf32>
    %185 = vector.extract_strided_slice %184 {offsets = [0, 0], sizes = [32, 128], strides = [1, 1]} : vector<256x128xf32> to vector<32x128xf32>
    %186 = vector.extract_strided_slice %184 {offsets = [32, 0], sizes = [32, 128], strides = [1, 1]} : vector<256x128xf32> to vector<32x128xf32>
    %187 = vector.extract_strided_slice %180 {offsets = [64, 0], sizes = [32, 128], strides = [1, 1]} : vector<256x128xf32> to vector<32x128xf32>
    %188 = vector.extract_strided_slice %184 {offsets = [96, 0], sizes = [32, 128], strides = [1, 1]} : vector<256x128xf32> to vector<32x128xf32>
    %189 = vector.extract_strided_slice %184 {offsets = [128, 0], sizes = [32, 128], strides = [1, 1]} : vector<256x128xf32> to vector<32x128xf32>
    %190 = vector.extract_strided_slice %184 {offsets = [160, 0], sizes = [32, 128], strides = [1, 1]} : vector<256x128xf32> to vector<32x128xf32>
    %191 = vector.extract_strided_slice %180 {offsets = [192, 0], sizes = [32, 128], strides = [1, 1]} : vector<256x128xf32> to vector<32x128xf32>
    %192 = vector.extract_strided_slice %184 {offsets = [224, 0], sizes = [32, 128], strides = [1, 1]} : vector<256x128xf32> to vector<32x128xf32>
    %193 = arith.mulf %190, %166 : vector<32x128xf32>
    %194 = arith.mulf %189, %191 : vector<32x128xf32>
    %195 = arith.addf %193, %194 : vector<32x128xf32>
    %196 = arith.mulf %186, %169 : vector<32x128xf32>
    %197 = arith.mulf %185, %187 : vector<32x128xf32>
    %198 = arith.addf %196, %197 : vector<32x128xf32>
    %199 = tpu.concatenate %198, %195 in 0 : vector<32x128xf32>, vector<32x128xf32> -> vector<64x128xf32>
    %200 = math.tanh %199 : vector<64x128xf32>
    %201 = vector.extract_strided_slice %200 {offsets = [0, 0], sizes = [32, 128], strides = [1, 1]} : vector<64x128xf32> to vector<32x128xf32>
    %202 = arith.mulf %188, %201 : vector<32x128xf32>
    %203 = vector.extract_strided_slice %200 {offsets = [32, 0], sizes = [32, 128], strides = [1, 1]} : vector<64x128xf32> to vector<32x128xf32>
    %204 = arith.mulf %192, %203 : vector<32x128xf32>
    %205 = tpu.concatenate %202, %204 in 0 : vector<32x128xf32>, vector<32x128xf32> -> vector<64x128xf32>
    %206 = arith.truncf %205 : vector<64x128xf32> to vector<64x128xbf16>
    %cst_50 = arith.constant dense<0.000000e+00> : vector<256x128xf32>
    %207 = tpu.matmul %1, %206, %cst_50 {dimension_numbers = #tpu.dot_dimension_numbers<[1], [0], [0], [1], [0, 0, 1, 1], [], []>} : vector<256x64xbf16>, vector<64x128xbf16>, vector<256x128xf32> -> vector<256x128xf32>
    %208 = arith.addf %207, %45 : vector<256x128xf32>
    %209 = math.tanh %208 : vector<256x128xf32>
    %cst_51 = arith.constant 5.000000e-01 : f32
    %210 = vector.broadcast %cst_51 : f32 to vector<256x128xf32>
    %211 = arith.mulf %210, %209 : vector<256x128xf32>
    %cst_52 = arith.constant 5.000000e-01 : f32
    %212 = vector.broadcast %cst_52 : f32 to vector<256x128xf32>
    %213 = arith.addf %211, %212 : vector<256x128xf32>
    %214 = vector.extract_strided_slice %213 {offsets = [0, 0], sizes = [32, 128], strides = [1, 1]} : vector<256x128xf32> to vector<32x128xf32>
    %215 = vector.extract_strided_slice %213 {offsets = [32, 0], sizes = [32, 128], strides = [1, 1]} : vector<256x128xf32> to vector<32x128xf32>
    %216 = vector.extract_strided_slice %209 {offsets = [64, 0], sizes = [32, 128], strides = [1, 1]} : vector<256x128xf32> to vector<32x128xf32>
    %217 = vector.extract_strided_slice %213 {offsets = [96, 0], sizes = [32, 128], strides = [1, 1]} : vector<256x128xf32> to vector<32x128xf32>
    %218 = vector.extract_strided_slice %213 {offsets = [128, 0], sizes = [32, 128], strides = [1, 1]} : vector<256x128xf32> to vector<32x128xf32>
    %219 = vector.extract_strided_slice %213 {offsets = [160, 0], sizes = [32, 128], strides = [1, 1]} : vector<256x128xf32> to vector<32x128xf32>
    %220 = vector.extract_strided_slice %209 {offsets = [192, 0], sizes = [32, 128], strides = [1, 1]} : vector<256x128xf32> to vector<32x128xf32>
    %221 = vector.extract_strided_slice %213 {offsets = [224, 0], sizes = [32, 128], strides = [1, 1]} : vector<256x128xf32> to vector<32x128xf32>
    %222 = arith.mulf %219, %195 : vector<32x128xf32>
    %223 = arith.mulf %218, %220 : vector<32x128xf32>
    %224 = arith.addf %222, %223 : vector<32x128xf32>
    %225 = arith.mulf %215, %198 : vector<32x128xf32>
    %226 = arith.mulf %214, %216 : vector<32x128xf32>
    %227 = arith.addf %225, %226 : vector<32x128xf32>
    %228 = tpu.concatenate %227, %224 in 0 : vector<32x128xf32>, vector<32x128xf32> -> vector<64x128xf32>
    %229 = math.tanh %228 : vector<64x128xf32>
    %230 = vector.extract_strided_slice %229 {offsets = [0, 0], sizes = [32, 128], strides = [1, 1]} : vector<64x128xf32> to vector<32x128xf32>
    %231 = arith.mulf %217, %230 : vector<32x128xf32>
    %232 = vector.extract_strided_slice %229 {offsets = [32, 0], sizes = [32, 128], strides = [1, 1]} : vector<64x128xf32> to vector<32x128xf32>
    %233 = arith.mulf %221, %232 : vector<32x128xf32>
    %234 = tpu.concatenate %231, %233 in 0 : vector<32x128xf32>, vector<32x128xf32> -> vector<64x128xf32>
    %235 = arith.truncf %234 : vector<64x128xf32> to vector<64x128xbf16>
    %cst_53 = arith.constant dense<0.000000e+00> : vector<256x128xf32>
    %236 = tpu.matmul %1, %235, %cst_53 {dimension_numbers = #tpu.dot_dimension_numbers<[1], [0], [0], [1], [0, 0, 1, 1], [], []>} : vector<256x64xbf16>, vector<64x128xbf16>, vector<256x128xf32> -> vector<256x128xf32>
    %237 = arith.addf %236, %46 : vector<256x128xf32>
    %238 = math.tanh %237 : vector<256x128xf32>
    %cst_54 = arith.constant 5.000000e-01 : f32
    %239 = vector.broadcast %cst_54 : f32 to vector<256x128xf32>
    %240 = arith.mulf %239, %238 : vector<256x128xf32>
    %cst_55 = arith.constant 5.000000e-01 : f32
    %241 = vector.broadcast %cst_55 : f32 to vector<256x128xf32>
    %242 = arith.addf %240, %241 : vector<256x128xf32>
    %243 = vector.extract_strided_slice %242 {offsets = [0, 0], sizes = [32, 128], strides = [1, 1]} : vector<256x128xf32> to vector<32x128xf32>
    %244 = vector.extract_strided_slice %242 {offsets = [32, 0], sizes = [32, 128], strides = [1, 1]} : vector<256x128xf32> to vector<32x128xf32>
    %245 = vector.extract_strided_slice %238 {offsets = [64, 0], sizes = [32, 128], strides = [1, 1]} : vector<256x128xf32> to vector<32x128xf32>
    %246 = vector.extract_strided_slice %242 {offsets = [96, 0], sizes = [32, 128], strides = [1, 1]} : vector<256x128xf32> to vector<32x128xf32>
    %247 = vector.extract_strided_slice %242 {offsets = [128, 0], sizes = [32, 128], strides = [1, 1]} : vector<256x128xf32> to vector<32x128xf32>
    %248 = vector.extract_strided_slice %242 {offsets = [160, 0], sizes = [32, 128], strides = [1, 1]} : vector<256x128xf32> to vector<32x128xf32>
    %249 = vector.extract_strided_slice %238 {offsets = [192, 0], sizes = [32, 128], strides = [1, 1]} : vector<256x128xf32> to vector<32x128xf32>
    %250 = vector.extract_strided_slice %242 {offsets = [224, 0], sizes = [32, 128], strides = [1, 1]} : vector<256x128xf32> to vector<32x128xf32>
    %251 = arith.mulf %248, %224 : vector<32x128xf32>
    %252 = arith.mulf %247, %249 : vector<32x128xf32>
    %253 = arith.addf %251, %252 : vector<32x128xf32>
    %254 = arith.mulf %244, %227 : vector<32x128xf32>
    %255 = arith.mulf %243, %245 : vector<32x128xf32>
    %256 = arith.addf %254, %255 : vector<32x128xf32>
    %257 = tpu.concatenate %256, %253 in 0 : vector<32x128xf32>, vector<32x128xf32> -> vector<64x128xf32>
    %258 = math.tanh %257 : vector<64x128xf32>
    %259 = vector.extract_strided_slice %258 {offsets = [0, 0], sizes = [32, 128], strides = [1, 1]} : vector<64x128xf32> to vector<32x128xf32>
    %260 = arith.mulf %246, %259 : vector<32x128xf32>
    %261 = vector.extract_strided_slice %258 {offsets = [32, 0], sizes = [32, 128], strides = [1, 1]} : vector<64x128xf32> to vector<32x128xf32>
    %262 = arith.mulf %250, %261 : vector<32x128xf32>
    %263 = tpu.concatenate %260, %262 in 0 : vector<32x128xf32>, vector<32x128xf32> -> vector<64x128xf32>
    %264 = arith.truncf %263 : vector<64x128xf32> to vector<64x128xbf16>
    %265 = vector.extract_strided_slice %1 {offsets = [128, 0], sizes = [128, 64], strides = [1, 1]} : vector<256x64xbf16> to vector<128x64xbf16>
    %cst_56 = arith.constant dense<0.000000e+00> : vector<128x128xf32>
    %266 = tpu.matmul %265, %264, %cst_56 {dimension_numbers = #tpu.dot_dimension_numbers<[1], [0], [0], [1], [0, 0, 1, 1], [], []>} : vector<128x64xbf16>, vector<64x128xbf16>, vector<128x128xf32> -> vector<128x128xf32>
    %267 = arith.addf %266, %7 : vector<128x128xf32>
    %268 = math.tanh %267 : vector<128x128xf32>
    %cst_57 = arith.constant 5.000000e-01 : f32
    %269 = vector.broadcast %cst_57 : f32 to vector<128x128xf32>
    %270 = arith.mulf %269, %268 : vector<128x128xf32>
    %cst_58 = arith.constant 5.000000e-01 : f32
    %271 = vector.broadcast %cst_58 : f32 to vector<128x128xf32>
    %272 = arith.addf %270, %271 : vector<128x128xf32>
    %273 = vector.extract_strided_slice %272 {offsets = [0, 0], sizes = [32, 128], strides = [1, 1]} : vector<128x128xf32> to vector<32x128xf32>
    %274 = vector.extract_strided_slice %272 {offsets = [32, 0], sizes = [32, 128], strides = [1, 1]} : vector<128x128xf32> to vector<32x128xf32>
    %275 = vector.extract_strided_slice %268 {offsets = [64, 0], sizes = [32, 128], strides = [1, 1]} : vector<128x128xf32> to vector<32x128xf32>
    %276 = vector.extract_strided_slice %272 {offsets = [96, 0], sizes = [32, 128], strides = [1, 1]} : vector<128x128xf32> to vector<32x128xf32>
    %277 = arith.mulf %274, %253 : vector<32x128xf32>
    %278 = arith.mulf %273, %275 : vector<32x128xf32>
    %279 = arith.addf %277, %278 : vector<32x128xf32>
    %280 = math.tanh %279 : vector<32x128xf32>
    %281 = arith.mulf %276, %280 : vector<32x128xf32>
    %c0_59 = arith.constant 0 : index
    %c0_60 = arith.constant 0 : index
    %282 = vector.load %arg6[%c0_59, %c0_60] : memref<32x1xf32, #tpu.memory_space<vmem>>, vector<32x1xf32>
    %283 = vector.broadcast %282 : vector<32x1xf32> to vector<32x128xf32>
    %284 = arith.mulf %281, %283 : vector<32x128xf32>
    %cst_61 = arith.constant dense<0.000000e+00> : vector<128xf32>
    %285 = vector.multi_reduction <add>, %284, %cst_61 [0] : vector<32x128xf32> to vector<128xf32>
    %286 = vector.shape_cast %285 : vector<128xf32> to vector<1x128xf32>
    %c0_62 = arith.constant 0 : index
    %c0_63 = arith.constant 0 : index
    %287 = vector.load %arg7[%c0_62, %c0_63] : memref<1x1xf32, #tpu.memory_space<vmem>>, vector<1x1xf32>
    %288 = vector.broadcast %287 : vector<1x1xf32> to vector<1x128xf32>
    %289 = arith.addf %286, %288 : vector<1x128xf32>
    %290 = arith.negf %289 : vector<1x128xf32>
    %291 = math.exp %290 : vector<1x128xf32>
    %cst_64 = arith.constant 1.000000e+00 : f32
    %292 = vector.broadcast %cst_64 : f32 to vector<1x128xf32>
    %293 = arith.addf %292, %291 : vector<1x128xf32>
    %294 = arith.divf %292, %293 : vector<1x128xf32>
    %c0_65 = arith.constant 0 : index
    %c0_66 = arith.constant 0 : index
    %295 = vector.load %arg8[%c0_65, %c0_66] : memref<1x128xf32, #tpu.memory_space<vmem>>, vector<1x128xf32>
    tpu.vector_store %arg8[%c0_65, %c0_66], %294 {strides = array<i32>} : memref<1x128xf32, #tpu.memory_space<vmem>>, vector<1x128xf32>,
    return
  }
  func.func @transform_0(%arg0: i32) -> (i32, i32, i32) {
    %c0_i32 = arith.constant 0 : i32
    %c0_i32_0 = arith.constant 0 : i32
    %c0_i32_1 = arith.constant 0 : i32
    return %c0_i32, %c0_i32_0, %arg0 : i32, i32, i32
  }
  func.func @transform_1(%arg0: i32) -> (i32, i32) {
    %c0_i32 = arith.constant 0 : i32
    %c0_i32_0 = arith.constant 0 : i32
    %c0_i32_1 = arith.constant 0 : i32
    return %c0_i32, %c0_i32_0 : i32, i32
  }
  func.func @transform_2(%arg0: i32) -> (i32, i32) {
    %c0_i32 = arith.constant 0 : i32
    %c0_i32_0 = arith.constant 0 : i32
    %c0_i32_1 = arith.constant 0 : i32
    return %c0_i32, %c0_i32_0 : i32, i32
  }
  func.func @transform_3(%arg0: i32) -> (i32, i32) {
    %c0_i32 = arith.constant 0 : i32
    %c0_i32_0 = arith.constant 0 : i32
    %c0_i32_1 = arith.constant 0 : i32
    return %c0_i32, %c0_i32_0 : i32, i32
  }
  func.func @transform_4(%arg0: i32) -> (i32, i32) {
    %c0_i32 = arith.constant 0 : i32
    %c0_i32_0 = arith.constant 0 : i32
    %c0_i32_1 = arith.constant 0 : i32
    return %c0_i32, %c0_i32_0 : i32, i32
  }
  func.func @transform_5(%arg0: i32) -> (i32, i32) {
    %c0_i32 = arith.constant 0 : i32
    %c0_i32_0 = arith.constant 0 : i32
    %c0_i32_1 = arith.constant 0 : i32
    return %c0_i32, %c0_i32_0 : i32, i32
  }
  func.func @transform_6(%arg0: i32) -> (i32, i32) {
    %c0_i32 = arith.constant 0 : i32
    %c0_i32_0 = arith.constant 0 : i32
    %c0_i32_1 = arith.constant 0 : i32
    return %c0_i32, %c0_i32_0 : i32, i32
  }
  func.func @transform_7(%arg0: i32) -> (i32, i32) {
    %c0_i32 = arith.constant 0 : i32
    %c0_i32_0 = arith.constant 0 : i32
    return %c0_i32, %arg0 : i32, i32
  }
}

</mosaic_0001>

<llo_original>
// kernel: lstm_model_forward.1
$region0: #{lstm_model_forward.1}
  #allocation0 [shape = 'u32[]', space=smem, size = 0x4, offset = 0x4, fixed_abs, tag = 'smem constant byte address 0x4 - core index']
  #allocation1 [shape = 'u32[144,128]{1,0:T(1,128)}', space=vmem, size = 0x12000, scoped, tag = 'internal scratch']
  #allocation2 [shape = 'f32[1,1]{1,0:T(1,128)S(1)}', space=vmem, size = 0x200, scoped, tag = 'scoped memory for lstm_model_forward.1']
  %s0 = inlined_call_operand.vmem [shape: f32[8,14,128], index: 0, kind: input, shape index: {}]
  %s1 = inlined_call_operand.vmem [shape: f32[128,14], index: 1, kind: input, shape index: {}]
  %s2 = inlined_call_operand.vmem [shape: f32[128,1], index: 2, kind: input, shape index: {}]
  %s3 = inlined_call_operand.vmem [shape: bf16[256,64], index: 3, kind: input, shape index: {}]
  %s4 = inlined_call_operand.vmem [shape: f32[128,1], index: 4, kind: input, shape index: {}]
  %s5 = inlined_call_operand.vmem [shape: f32[32,1], index: 5, kind: input, shape index: {}]
  %s6 = inlined_call_operand.<no memory space> [shape: f32[1,1], index: 6, kind: input, shape index: {}]
  %s7 = inlined_call_operand.vmem [shape: f32[1,128], index: 7, kind: output, shape index: {}]
  %s8 = sld [smem:[#allocation0]]
  $region38: #{lstm_model_forward.1} parent=0
    _
  %s10 = ssub.s32 1, %s8
  %s11 = scalar_select 0, %s10, %s8
  %v12 = vstv %s6
  %13 = vst [vmem:[#allocation2] sm:$0x1] %v12
  // Predicated region
  $region2: #{lstm_model_forward.1} parent=0 // pred_check
    _
  $region3: #{lstm_model_forward.1} parent=0 // pred_check_branch
    %15 = sbr.rel (0) target = $region5
  $region4: #{lstm_model_forward.1} parent=0 // pred_region
    _
  $region5: #{lstm_model_forward.1} parent=0 // pred_fallthru
    _
  // Predicated region
  $region6: #{lstm_model_forward.1} parent=0 // pred_check
    _
  $region7: #{lstm_model_forward.1} parent=0 // pred_check_branch
    %17 = sbr.rel (0) target = $region9
  $region8: #{lstm_model_forward.1} parent=0 // pred_region
    _
  $region9: #{lstm_model_forward.1} parent=0 // pred_fallthru
    _
  // Predicated region
  $region10: #{lstm_model_forward.1} parent=0 // pred_check
    _
  $region11: #{lstm_model_forward.1} parent=0 // pred_check_branch
    %19 = sbr.rel (0) target = $region13
  $region12: #{lstm_model_forward.1} parent=0 // pred_region
    _
  $region13: #{lstm_model_forward.1} parent=0 // pred_fallthru
    _
  // Predicated region
  $region14: #{lstm_model_forward.1} parent=0 // pred_check
    _
  $region15: #{lstm_model_forward.1} parent=0 // pred_check_branch
    %21 = sbr.rel (0) target = $region17
  $region16: #{lstm_model_forward.1} parent=0 // pred_region
    _
  $region17: #{lstm_model_forward.1} parent=0 // pred_fallthru
    _
  // Predicated region
  $region18: #{lstm_model_forward.1} parent=0 // pred_check
    _
  $region19: #{lstm_model_forward.1} parent=0 // pred_check_branch
    %23 = sbr.rel (0) target = $region21
  $region20: #{lstm_model_forward.1} parent=0 // pred_region
    _
  $region21: #{lstm_model_forward.1} parent=0 // pred_fallthru
    _
  // Predicated region
  $region22: #{lstm_model_forward.1} parent=0 // pred_check
    _
  $region23: #{lstm_model_forward.1} parent=0 // pred_check_branch
    %25 = sbr.rel (0) target = $region25
  $region24: #{lstm_model_forward.1} parent=0 // pred_region
    _
  $region25: #{lstm_model_forward.1} parent=0 // pred_fallthru
    _
  // Predicated region
  $region26: #{lstm_model_forward.1} parent=0 // pred_check
    _
  $region27: #{lstm_model_forward.1} parent=0 // pred_check_branch
    %27 = sbr.rel (0) target = $region29
  $region28: #{lstm_model_forward.1} parent=0 // pred_region
    _
  $region29: #{lstm_model_forward.1} parent=0 // pred_fallthru
    _
  %v29 = vld [vmem:[%s1] sm:$0xff]
  %v30 = vld [vmem:[%s1 + $0x8] sm:$0xff]
  %v31 = vld [vmem:[%s1 + $0x10] sm:$0xff]
  %v32 = vld [vmem:[%s1 + $0x18] sm:$0xff]
  %v33 = vld [vmem:[%s1 + $0x20] sm:$0xff]
  %v34 = vld [vmem:[%s1 + $0x28] sm:$0xff]
  %v35 = vld [vmem:[%s1 + $0x30] sm:$0xff]
  %v36 = vld [vmem:[%s1 + $0x38] sm:$0xff]
  %v37 = vld [vmem:[%s1 + $0x40] sm:$0xff]
  %v38 = vld [vmem:[%s1 + $0x48] sm:$0xff]
  %v39 = vld [vmem:[%s1 + $0x50] sm:$0xff]
  %v40 = vld [vmem:[%s1 + $0x58] sm:$0xff]
  %v41 = vld [vmem:[%s1 + $0x60] sm:$0xff]
  %v42 = vld [vmem:[%s1 + $0x68] sm:$0xff]
  %v43 = vld [vmem:[%s1 + $0x70] sm:$0xff]
  %v44 = vld [vmem:[%s1 + $0x78] sm:$0xff]
  %v45 = vld [vmem:[%s3] sm:$0xf]
  %v46 = vld [vmem:[%s3 + $0x4] sm:$0xf]
  %v47 = vld [vmem:[%s3 + $0x8] sm:$0xf]
  %v48 = vld [vmem:[%s3 + $0xc] sm:$0xf]
  %v49 = vld [vmem:[%s3 + $0x10] sm:$0xf]
  %v50 = vld [vmem:[%s3 + $0x14] sm:$0xf]
  %v51 = vld [vmem:[%s3 + $0x18] sm:$0xf]
  %v52 = vld [vmem:[%s3 + $0x1c] sm:$0xf]
  %v53 = vld [vmem:[%s3 + $0x20] sm:$0xf]
  %v54 = vld [vmem:[%s3 + $0x24] sm:$0xf]
  %v55 = vld [vmem:[%s3 + $0x28] sm:$0xf]
  %v56 = vld [vmem:[%s3 + $0x2c] sm:$0xf]
  %v57 = vld [vmem:[%s3 + $0x30] sm:$0xf]
  %v58 = vld [vmem:[%s3 + $0x34] sm:$0xf]
  %v59 = vld [vmem:[%s3 + $0x38] sm:$0xf]
  %v60 = vld [vmem:[%s3 + $0x3c] sm:$0xf]
  %v61 = vld [vmem:[%s3 + $0x40] sm:$0xf]
  %v62 = vld [vmem:[%s3 + $0x44] sm:$0xf]
  %v63 = vld [vmem:[%s3 + $0x48] sm:$0xf]
  %v64 = vld [vmem:[%s3 + $0x4c] sm:$0xf]
  %v65 = vld [vmem:[%s3 + $0x50] sm:$0xf]
  %v66 = vld [vmem:[%s3 + $0x54] sm:$0xf]
  %v67 = vld [vmem:[%s3 + $0x58] sm:$0xf]
  %v68 = vld [vmem:[%s3 + $0x5c] sm:$0xf]
  %v69 = vld [vmem:[%s3 + $0x60] sm:$0xf]
  %v70 = vld [vmem:[%s3 + $0x64] sm:$0xf]
  %v71 = vld [vmem:[%s3 + $0x68] sm:$0xf]
  %v72 = vld [vmem:[%s3 + $0x6c] sm:$0xf]
  %v73 = vld [vmem:[%s3 + $0x70] sm:$0xf]
  %v74 = vld [vmem:[%s3 + $0x74] sm:$0xf]
  %v75 = vld [vmem:[%s3 + $0x78] sm:$0xf]
  %v76 = vld [vmem:[%s3 + $0x7c] sm:$0xf]
  %v77 = vld [vmem:[%s2] sm:$0xff]
  %v78 = vld [vmem:[%s2 + $0x8] sm:$0xff]
  %v79 = vld [vmem:[%s2 + $0x10] sm:$0xff]
  %v80 = vld [vmem:[%s2 + $0x18] sm:$0xff]
  %v81 = vld [vmem:[%s2 + $0x20] sm:$0xff]
  %v82 = vld [vmem:[%s2 + $0x28] sm:$0xff]
  %v83 = vld [vmem:[%s2 + $0x30] sm:$0xff]
  %v84 = vld [vmem:[%s2 + $0x38] sm:$0xff]
  %v85 = vld [vmem:[%s2 + $0x40] sm:$0xff]
  %v86 = vld [vmem:[%s2 + $0x48] sm:$0xff]
  %v87 = vld [vmem:[%s2 + $0x50] sm:$0xff]
  %v88 = vld [vmem:[%s2 + $0x58] sm:$0xff]
  %v89 = vld [vmem:[%s2 + $0x60] sm:$0xff]
  %v90 = vld [vmem:[%s2 + $0x68] sm:$0xff]
  %v91 = vld [vmem:[%s2 + $0x70] sm:$0xff]
  %v92 = vld [vmem:[%s2 + $0x78] sm:$0xff]
  %94 = vset.pattern.permute.xlu0 0
  %95 = vperm.xlu0 %94, %v77
  %v96 = vpop.permute.xlu0 %95
  %99 = vset.pattern.permute.xlu0 0
  %100 = vperm.xlu0 %99, %v78
  %v101 = vpop.permute.xlu0 %100
  %104 = vset.pattern.permute.xlu0 0
  %105 = vperm.xlu0 %104, %v79
  %v106 = vpop.permute.xlu0 %105
  %109 = vset.pattern.permute.xlu0 0
  %110 = vperm.xlu0 %109, %v80
  %v111 = vpop.permute.xlu0 %110
  %114 = vset.pattern.permute.xlu0 0
  %115 = vperm.xlu0 %114, %v81
  %v116 = vpop.permute.xlu0 %115
  %119 = vset.pattern.permute.xlu0 0
  %120 = vperm.xlu0 %119, %v82
  %v121 = vpop.permute.xlu0 %120
  %124 = vset.pattern.permute.xlu0 0
  %125 = vperm.xlu0 %124, %v83
  %v126 = vpop.permute.xlu0 %125
  %129 = vset.pattern.permute.xlu0 0
  %130 = vperm.xlu0 %129, %v84
  %v131 = vpop.permute.xlu0 %130
  %134 = vset.pattern.permute.xlu0 0
  %135 = vperm.xlu0 %134, %v85
  %v136 = vpop.permute.xlu0 %135
  %139 = vset.pattern.permute.xlu0 0
  %140 = vperm.xlu0 %139, %v86
  %v141 = vpop.permute.xlu0 %140
  %144 = vset.pattern.permute.xlu0 0
  %145 = vperm.xlu0 %144, %v87
  %v146 = vpop.permute.xlu0 %145
  %149 = vset.pattern.permute.xlu0 0
  %150 = vperm.xlu0 %149, %v88
  %v151 = vpop.permute.xlu0 %150
  %154 = vset.pattern.permute.xlu0 0
  %155 = vperm.xlu0 %154, %v89
  %v156 = vpop.permute.xlu0 %155
  %159 = vset.pattern.permute.xlu0 0
  %160 = vperm.xlu0 %159, %v90
  %v161 = vpop.permute.xlu0 %160
  %164 = vset.pattern.permute.xlu0 0
  %165 = vperm.xlu0 %164, %v91
  %v166 = vpop.permute.xlu0 %165
  %169 = vset.pattern.permute.xlu0 0
  %170 = vperm.xlu0 %169, %v92
  %v171 = vpop.permute.xlu0 %170
  %v173 = vld [vmem:[%s4] sm:$0xff]
  %v174 = vld [vmem:[%s4 + $0x8] sm:$0xff]
  %v175 = vld [vmem:[%s4 + $0x10] sm:$0xff]
  %v176 = vld [vmem:[%s4 + $0x18] sm:$0xff]
  %v177 = vld [vmem:[%s4 + $0x20] sm:$0xff]
  %v178 = vld [vmem:[%s4 + $0x28] sm:$0xff]
  %v179 = vld [vmem:[%s4 + $0x30] sm:$0xff]
  %v180 = vld [vmem:[%s4 + $0x38] sm:$0xff]
  %v181 = vld [vmem:[%s4 + $0x40] sm:$0xff]
  %v182 = vld [vmem:[%s4 + $0x48] sm:$0xff]
  %v183 = vld [vmem:[%s4 + $0x50] sm:$0xff]
  %v184 = vld [vmem:[%s4 + $0x58] sm:$0xff]
  %v185 = vld [vmem:[%s4 + $0x60] sm:$0xff]
  %v186 = vld [vmem:[%s4 + $0x68] sm:$0xff]
  %v187 = vld [vmem:[%s4 + $0x70] sm:$0xff]
  %v188 = vld [vmem:[%s4 + $0x78] sm:$0xff]
  %190 = vset.pattern.permute.xlu0 0
  %191 = vperm.xlu0 %190, %v173
  %v192 = vpop.permute.xlu0 %191
  %195 = vset.pattern.permute.xlu0 0
  %196 = vperm.xlu0 %195, %v174
  %v197 = vpop.permute.xlu0 %196
  %200 = vset.pattern.permute.xlu0 0
  %201 = vperm.xlu0 %200, %v175
  %v202 = vpop.permute.xlu0 %201
  %205 = vset.pattern.permute.xlu0 0
  %206 = vperm.xlu0 %205, %v176
  %v207 = vpop.permute.xlu0 %206
  %210 = vset.pattern.permute.xlu0 0
  %211 = vperm.xlu0 %210, %v177
  %v212 = vpop.permute.xlu0 %211
  %215 = vset.pattern.permute.xlu0 0
  %216 = vperm.xlu0 %215, %v178
  %v217 = vpop.permute.xlu0 %216
  %220 = vset.pattern.permute.xlu0 0
  %221 = vperm.xlu0 %220, %v179
  %v222 = vpop.permute.xlu0 %221
  %225 = vset.pattern.permute.xlu0 0
  %226 = vperm.xlu0 %225, %v180
  %v227 = vpop.permute.xlu0 %226
  %230 = vset.pattern.permute.xlu0 0
  %231 = vperm.xlu0 %230, %v181
  %v232 = vpop.permute.xlu0 %231
  %235 = vset.pattern.permute.xlu0 0
  %236 = vperm.xlu0 %235, %v182
  %v237 = vpop.permute.xlu0 %236
  %240 = vset.pattern.permute.xlu0 0
  %241 = vperm.xlu0 %240, %v183
  %v242 = vpop.permute.xlu0 %241
  %245 = vset.pattern.permute.xlu0 0
  %246 = vperm.xlu0 %245, %v184
  %v247 = vpop.permute.xlu0 %246
  %250 = vset.pattern.permute.xlu0 0
  %251 = vperm.xlu0 %250, %v185
  %v252 = vpop.permute.xlu0 %251
  %255 = vset.pattern.permute.xlu0 0
  %256 = vperm.xlu0 %255, %v186
  %v257 = vpop.permute.xlu0 %256
  %260 = vset.pattern.permute.xlu0 0
  %261 = vperm.xlu0 %260, %v187
  %v262 = vpop.permute.xlu0 %261
  %265 = vset.pattern.permute.xlu0 0
  %266 = vperm.xlu0 %265, %v188
  %v267 = vpop.permute.xlu0 %266
  %v269 = vld [vmem:[%s0] sm:$0xff]
  %v270 = vld [vmem:[%s0 + $0x8] sm:$0x3f]
  %vm271 = vcmask 113664
  %v273 = vsel %vm271, %v29, 0
  %v276 = vsel %vm271, %v30, 0
  %v279 = vsel %vm271, %v31, 0
  %v282 = vsel %vm271, %v32, 0
  %v285 = vsel %vm271, %v33, 0
  %v288 = vsel %vm271, %v34, 0
  %v291 = vsel %vm271, %v35, 0
  %v294 = vsel %vm271, %v36, 0
  %v297 = vsel %vm271, %v37, 0
  %v300 = vsel %vm271, %v38, 0
  %v303 = vsel %vm271, %v39, 0
  %v306 = vsel %vm271, %v40, 0
  %v309 = vsel %vm271, %v41, 0
  %v312 = vsel %vm271, %v42, 0
  %v315 = vsel %vm271, %v43, 0
  %v318 = vsel %vm271, %v44, 0
  %vm320 = vcmask 1045504
  %v322 = vsel %vm320, %v270, 0
  %324 = vmatprep.subr.mxu0 0.0
  %325 = vmatpush1.msra.mxu0 %v269
  %326 = vmatprep.subr.mxu0 0.0
  %327 = vmatpush1.msra.mxu0 %v322
  %328 = vmatprep.subr.mxu0 0.0
  %329 = vmatpush1.msra.mxu0 0.0
  %330 = vmatprep.subr.mxu0 0.0
  %331 = vmatpush1.msra.mxu0 0.0
  %332 = vmatprep.subr.mxu0 0.0
  %333 = vmatpush1.msra.mxu0 0.0
  %334 = vmatprep.subr.mxu0 0.0
  %335 = vmatpush1.msra.mxu0 0.0
  %336 = vmatprep.subr.mxu0 0.0
  %337 = vmatpush1.msra.mxu0 0.0
  %338 = vmatprep.subr.mxu0 0.0
  %339 = vmatpush1.msra.mxu0 0.0
  %340 = vmatprep.subr.mxu0 0.0
  %341 = vmatpush1.msra.mxu0 0.0
  %342 = vmatprep.subr.mxu0 0.0
  %343 = vmatpush1.msra.mxu0 0.0
  %344 = vmatprep.subr.mxu0 0.0
  %345 = vmatpush1.msra.mxu0 0.0
  %346 = vmatprep.subr.mxu0 0.0
  %347 = vmatpush1.msra.mxu0 0.0
  %348 = vmatprep.subr.mxu0 0.0
  %349 = vmatpush1.msra.mxu0 0.0
  %350 = vmatprep.subr.mxu0 0.0
  %351 = vmatpush1.msra.mxu0 0.0
  %352 = vmatprep.subr.mxu0 0.0
  %353 = vmatpush1.msra.mxu0 0.0
  %354 = vmatprep.subr.mxu0 0.0
  %355 = vmatpush1.msra.mxu0 0.0
  %356 = vmatprep.subr.mxu0 0.0
  %357 = vmatpush1.msra.mxu0 0.0
  %358 = vmatprep.subr.mxu0 0.0
  %359 = vmatpush1.msra.mxu0 0.0
  %360 = vmatprep.subr.mxu0 0.0
  %361 = vmatpush1.msra.mxu0 0.0
  %362 = vmatprep.subr.mxu0 0.0
  %363 = vmatpush1.msra.mxu0 0.0
  %364 = vmatprep.subr.mxu0 0.0
  %365 = vmatpush1.msra.mxu0 0.0
  %366 = vmatprep.subr.mxu0 0.0
  %367 = vmatpush1.msra.mxu0 0.0
  %368 = vmatprep.subr.mxu0 0.0
  %369 = vmatpush1.msra.mxu0 0.0
  %370 = vmatprep.subr.mxu0 0.0
  %371 = vmatpush1.msra.mxu0 0.0
  %372 = vmatprep.subr.mxu0 0.0
  %373 = vmatpush1.msra.mxu0 0.0
  %374 = vmatprep.subr.mxu0 0.0
  %375 = vmatpush1.msra.mxu0 0.0
  %376 = vmatprep.subr.mxu0 0.0
  %377 = vmatpush1.msra.mxu0 0.0
  %378 = vmatprep.subr.mxu0 0.0
  %379 = vmatpush1.msra.mxu0 0.0
  %380 = vmatprep.subr.mxu0 0.0
  %381 = vmatpush1.msra.mxu0 0.0
  %382 = vmatprep.subr.mxu0 0.0
  %383 = vmatpush1.msra.mxu0 0.0
  %384 = vmatprep.subr.mxu0 0.0
  %385 = vmatpush1.msra.mxu0 0.0
  %386 = vmatprep.subr.mxu0 0.0
  %387 = vmatpush1.msra.mxu0 0.0
  %388 = vmatprep.mubr.f32.mxu0 0.0
  %389 = vmatmul.mubr.f32.gmra.mrb[0].mxu0 %v273
  %v390 = vpop.f32.mrb[0].mxu0
  %v391 = vadd.f32 %v96, %v390
  %v392 = vpop.f32.mrb[0].mxu0
  %393 = vmatprep.mubr.f32.mxu0 0.0
  %394 = vmatmul.mubr.f32.gmra.mrb[0].mxu0 %v276
  %v395 = vpop.f32.mrb[0].mxu0
  %v396 = vadd.f32 %v101, %v395
  %v397 = vpop.f32.mrb[0].mxu0
  %398 = vmatprep.mubr.f32.mxu0 0.0
  %399 = vmatmul.mubr.f32.gmra.mrb[0].mxu0 %v279
  %v400 = vpop.f32.mrb[0].mxu0
  %v401 = vadd.f32 %v106, %v400
  %v402 = vpop.f32.mrb[0].mxu0
  %403 = vmatprep.mubr.f32.mxu0 0.0
  %404 = vmatmul.mubr.f32.gmra.mrb[0].mxu0 %v282
  %v405 = vpop.f32.mrb[0].mxu0
  %v406 = vadd.f32 %v111, %v405
  %v407 = vpop.f32.mrb[0].mxu0
  %408 = vmatprep.mubr.f32.mxu0 0.0
  %409 = vmatmul.mubr.f32.gmra.mrb[0].mxu0 %v285
  %v410 = vpop.f32.mrb[0].mxu0
  %v411 = vpop.f32.mrb[0].mxu0
  %412 = vmatprep.mubr.f32.mxu0 0.0
  %413 = vmatmul.mubr.f32.gmra.mrb[0].mxu0 %v288
  %v414 = vpop.f32.mrb[0].mxu0
  %v415 = vpop.f32.mrb[0].mxu0
  %416 = vmatprep.mubr.f32.mxu0 0.0
  %417 = vmatmul.mubr.f32.gmra.mrb[0].mxu0 %v291
  %v418 = vpop.f32.mrb[0].mxu0
  %v419 = vpop.f32.mrb[0].mxu0
  %420 = vmatprep.mubr.f32.mxu0 0.0
  %421 = vmatmul.mubr.f32.gmra.mrb[0].mxu0 %v294
  %v422 = vpop.f32.mrb[0].mxu0
  %v423 = vpop.f32.mrb[0].mxu0
  %424 = vmatprep.mubr.f32.mxu0 0.0
  %425 = vmatmul.mubr.f32.gmra.mrb[0].mxu0 %v297
  %v426 = vpop.f32.mrb[0].mxu0
  %v427 = vadd.f32 %v136, %v426
  %v428 = vpop.f32.mrb[0].mxu0
  %429 = vmatprep.mubr.f32.mxu0 0.0
  %430 = vmatmul.mubr.f32.gmra.mrb[0].mxu0 %v300
  %v431 = vpop.f32.mrb[0].mxu0
  %v432 = vadd.f32 %v141, %v431
  %v433 = vpop.f32.mrb[0].mxu0
  %434 = vmatprep.mubr.f32.mxu0 0.0
  %435 = vmatmul.mubr.f32.gmra.mrb[0].mxu0 %v303
  %v436 = vpop.f32.mrb[0].mxu0
  %v437 = vadd.f32 %v146, %v436
  %v438 = vpop.f32.mrb[0].mxu0
  %439 = vmatprep.mubr.f32.mxu0 0.0
  %440 = vmatmul.mubr.f32.gmra.mrb[0].mxu0 %v306
  %v441 = vpop.f32.mrb[0].mxu0
  %v442 = vadd.f32 %v151, %v441
  %v443 = vpop.f32.mrb[0].mxu0
  %444 = vmatprep.mubr.f32.mxu0 0.0
  %445 = vmatmul.mubr.f32.gmra.mrb[0].mxu0 %v309
  %v446 = vpop.f32.mrb[0].mxu0
  %v447 = vadd.f32 %v156, %v446
  %v448 = vpop.f32.mrb[0].mxu0
  %449 = vmatprep.mubr.f32.mxu0 0.0
  %450 = vmatmul.mubr.f32.gmra.mrb[0].mxu0 %v312
  %v451 = vpop.f32.mrb[0].mxu0
  %v452 = vadd.f32 %v161, %v451
  %v453 = vpop.f32.mrb[0].mxu0
  %454 = vmatprep.mubr.f32.mxu0 0.0
  %455 = vmatmul.mubr.f32.gmra.mrb[0].mxu0 %v315
  %v456 = vpop.f32.mrb[0].mxu0
  %v457 = vadd.f32 %v166, %v456
  %v458 = vpop.f32.mrb[0].mxu0
  %459 = vmatprep.mubr.f32.mxu0 0.0
  %460 = vmatmul.mubr.f32.gmra.mrb[0].mxu0 %v318
  %v461 = vpop.f32.mrb[0].mxu0
  %v462 = vadd.f32 %v171, %v461
  %v463 = vpop.f32.mrb[0].mxu0
  %464 = vdwg.mxu0
  %s465 = scalar_lea.vmem %s0, 16
  %v466 = vld [vmem:[%s465] sm:$0xff]
  %v467 = vld [vmem:[%s465 + $0x8] sm:$0x3f]
  %v469 = vsel %vm320, %v467, 0
  %471 = vmatprep.subr.mxu0 0.0
  %472 = vmatpush1.msra.mxu0 %v466
  %473 = vmatprep.subr.mxu0 0.0
  %474 = vmatpush1.msra.mxu0 %v469
  %475 = vmatprep.subr.mxu0 0.0
  %476 = vmatpush1.msra.mxu0 0.0
  %477 = vmatprep.subr.mxu0 0.0
  %478 = vmatpush1.msra.mxu0 0.0
  %479 = vmatprep.subr.mxu0 0.0
  %480 = vmatpush1.msra.mxu0 0.0
  %481 = vmatprep.subr.mxu0 0.0
  %482 = vmatpush1.msra.mxu0 0.0
  %483 = vmatprep.subr.mxu0 0.0
  %484 = vmatpush1.msra.mxu0 0.0
  %485 = vmatprep.subr.mxu0 0.0
  %486 = vmatpush1.msra.mxu0 0.0
  %487 = vmatprep.subr.mxu0 0.0
  %488 = vmatpush1.msra.mxu0 0.0
  %489 = vmatprep.subr.mxu0 0.0
  %490 = vmatpush1.msra.mxu0 0.0
  %491 = vmatprep.subr.mxu0 0.0
  %492 = vmatpush1.msra.mxu0 0.0
  %493 = vmatprep.subr.mxu0 0.0
  %494 = vmatpush1.msra.mxu0 0.0
  %495 = vmatprep.subr.mxu0 0.0
  %496 = vmatpush1.msra.mxu0 0.0
  %497 = vmatprep.subr.mxu0 0.0
  %498 = vmatpush1.msra.mxu0 0.0
  %499 = vmatprep.subr.mxu0 0.0
  %500 = vmatpush1.msra.mxu0 0.0
  %501 = vmatprep.subr.mxu0 0.0
  %502 = vmatpush1.msra.mxu0 0.0
  %503 = vmatprep.subr.mxu0 0.0
  %504 = vmatpush1.msra.mxu0 0.0
  %505 = vmatprep.subr.mxu0 0.0
  %506 = vmatpush1.msra.mxu0 0.0
  %507 = vmatprep.subr.mxu0 0.0
  %508 = vmatpush1.msra.mxu0 0.0
  %509 = vmatprep.subr.mxu0 0.0
  %510 = vmatpush1.msra.mxu0 0.0
  %511 = vmatprep.subr.mxu0 0.0
  %512 = vmatpush1.msra.mxu0 0.0
  %513 = vmatprep.subr.mxu0 0.0
  %514 = vmatpush1.msra.mxu0 0.0
  %515 = vmatprep.subr.mxu0 0.0
  %516 = vmatpush1.msra.mxu0 0.0
  %517 = vmatprep.subr.mxu0 0.0
  %518 = vmatpush1.msra.mxu0 0.0
  %519 = vmatprep.subr.mxu0 0.0
  %520 = vmatpush1.msra.mxu0 0.0
  %521 = vmatprep.subr.mxu0 0.0
  %522 = vmatpush1.msra.mxu0 0.0
  %523 = vmatprep.subr.mxu0 0.0
  %524 = vmatpush1.msra.mxu0 0.0
  %525 = vmatprep.subr.mxu0 0.0
  %526 = vmatpush1.msra.mxu0 0.0
  %527 = vmatprep.subr.mxu0 0.0
  %528 = vmatpush1.msra.mxu0 0.0
  %529 = vmatprep.subr.mxu0 0.0
  %530 = vmatpush1.msra.mxu0 0.0
  %531 = vmatprep.subr.mxu0 0.0
  %532 = vmatpush1.msra.mxu0 0.0
  %533 = vmatprep.subr.mxu0 0.0
  %534 = vmatpush1.msra.mxu0 0.0
  %535 = vmatprep.mubr.f32.mxu0 0.0
  %536 = vmatmul.mubr.f32.gmra.mrb[0].mxu0 %v273
  %v537 = vpop.f32.mrb[0].mxu0
  %v538 = vadd.f32 %v96, %v537
  %v539 = vpop.f32.mrb[0].mxu0
  %540 = vmatprep.mubr.f32.mxu0 0.0
  %541 = vmatmul.mubr.f32.gmra.mrb[0].mxu0 %v276
  %v542 = vpop.f32.mrb[0].mxu0
  %v543 = vadd.f32 %v101, %v542
  %v544 = vpop.f32.mrb[0].mxu0
  %545 = vmatprep.mubr.f32.mxu0 0.0
  %546 = vmatmul.mubr.f32.gmra.mrb[0].mxu0 %v279
  %v547 = vpop.f32.mrb[0].mxu0
  %v548 = vadd.f32 %v106, %v547
  %v549 = vpop.f32.mrb[0].mxu0
  %550 = vmatprep.mubr.f32.mxu0 0.0
  %551 = vmatmul.mubr.f32.gmra.mrb[0].mxu0 %v282
  %v552 = vpop.f32.mrb[0].mxu0
  %v553 = vadd.f32 %v111, %v552
  %v554 = vpop.f32.mrb[0].mxu0
  %555 = vmatprep.mubr.f32.mxu0 0.0
  %556 = vmatmul.mubr.f32.gmra.mrb[0].mxu0 %v285
  %v557 = vpop.f32.mrb[0].mxu0
  %v558 = vadd.f32 %v116, %v557
  %v559 = vpop.f32.mrb[0].mxu0
  %560 = vmatprep.mubr.f32.mxu0 0.0
  %561 = vmatmul.mubr.f32.gmra.mrb[0].mxu0 %v288
  %v562 = vpop.f32.mrb[0].mxu0
  %v563 = vadd.f32 %v121, %v562
  %v564 = vpop.f32.mrb[0].mxu0
  %565 = vmatprep.mubr.f32.mxu0 0.0
  %566 = vmatmul.mubr.f32.gmra.mrb[0].mxu0 %v291
  %v567 = vpop.f32.mrb[0].mxu0
  %v568 = vadd.f32 %v126, %v567
  %v569 = vpop.f32.mrb[0].mxu0
  %570 = vmatprep.mubr.f32.mxu0 0.0
  %571 = vmatmul.mubr.f32.gmra.mrb[0].mxu0 %v294
  %v572 = vpop.f32.mrb[0].mxu0
  %v573 = vadd.f32 %v131, %v572
  %v574 = vpop.f32.mrb[0].mxu0
  %575 = vmatprep.mubr.f32.mxu0 0.0
  %576 = vmatmul.mubr.f32.gmra.mrb[0].mxu0 %v297
  %v577 = vpop.f32.mrb[0].mxu0
  %v578 = vadd.f32 %v136, %v577
  %v579 = vpop.f32.mrb[0].mxu0
  %580 = vmatprep.mubr.f32.mxu0 0.0
  %581 = vmatmul.mubr.f32.gmra.mrb[0].mxu0 %v300
  %v582 = vpop.f32.mrb[0].mxu0
  %v583 = vadd.f32 %v141, %v582
  %v584 = vpop.f32.mrb[0].mxu0
  %585 = vmatprep.mubr.f32.mxu0 0.0
  %586 = vmatmul.mubr.f32.gmra.mrb[0].mxu0 %v303
  %v587 = vpop.f32.mrb[0].mxu0
  %v588 = vadd.f32 %v146, %v587
  %v589 = vpop.f32.mrb[0].mxu0
  %590 = vmatprep.mubr.f32.mxu0 0.0
  %591 = vmatmul.mubr.f32.gmra.mrb[0].mxu0 %v306
  %v592 = vpop.f32.mrb[0].mxu0
  %v593 = vadd.f32 %v151, %v592
  %v594 = vpop.f32.mrb[0].mxu0
  %595 = vmatprep.mubr.f32.mxu0 0.0
  %596 = vmatmul.mubr.f32.gmra.mrb[0].mxu0 %v309
  %v597 = vpop.f32.mrb[0].mxu0
  %v598 = vadd.f32 %v156, %v597
  %v599 = vpop.f32.mrb[0].mxu0
  %600 = vmatprep.mubr.f32.mxu0 0.0
  %601 = vmatmul.mubr.f32.gmra.mrb[0].mxu0 %v312
  %v602 = vpop.f32.mrb[0].mxu0
  %v603 = vadd.f32 %v161, %v602
  %v604 = vpop.f32.mrb[0].mxu0
  %605 = vmatprep.mubr.f32.mxu0 0.0
  %606 = vmatmul.mubr.f32.gmra.mrb[0].mxu0 %v315
  %v607 = vpop.f32.mrb[0].mxu0
  %v608 = vadd.f32 %v166, %v607
  %v609 = vpop.f32.mrb[0].mxu0
  %610 = vmatprep.mubr.f32.mxu0 0.0
  %611 = vmatmul.mubr.f32.gmra.mrb[0].mxu0 %v318
  %v612 = vpop.f32.mrb[0].mxu0
  %v613 = vadd.f32 %v171, %v612
  %v614 = vpop.f32.mrb[0].mxu0
  %615 = vdwg.mxu0
  %s616 = scalar_lea.vmem %s0, 32
  %v617 = vld [vmem:[%s616] sm:$0xff]
  %v618 = vld [vmem:[%s616 + $0x8] sm:$0x3f]
  %v620 = vsel %vm320, %v618, 0
  %622 = vmatprep.subr.mxu0 0.0
  %623 = vmatpush1.msra.mxu0 %v617
  %624 = vmatprep.subr.mxu0 0.0
  %625 = vmatpush1.msra.mxu0 %v620
  %626 = vmatprep.subr.mxu0 0.0
  %627 = vmatpush1.msra.mxu0 0.0
  %628 = vmatprep.subr.mxu0 0.0
  %629 = vmatpush1.msra.mxu0 0.0
  %630 = vmatprep.subr.mxu0 0.0
  %631 = vmatpush1.msra.mxu0 0.0
  %632 = vmatprep.subr.mxu0 0.0
  %633 = vmatpush1.msra.mxu0 0.0
  %634 = vmatprep.subr.mxu0 0.0
  %635 = vmatpush1.msra.mxu0 0.0
  %636 = vmatprep.subr.mxu0 0.0
  %637 = vmatpush1.msra.mxu0 0.0
  %638 = vmatprep.subr.mxu0 0.0
  %639 = vmatpush1.msra.mxu0 0.0
  %640 = vmatprep.subr.mxu0 0.0
  %641 = vmatpush1.msra.mxu0 0.0
  %642 = vmatprep.subr.mxu0 0.0
  %643 = vmatpush1.msra.mxu0 0.0
  %644 = vmatprep.subr.mxu0 0.0
  %645 = vmatpush1.msra.mxu0 0.0
  %646 = vmatprep.subr.mxu0 0.0
  %647 = vmatpush1.msra.mxu0 0.0
  %648 = vmatprep.subr.mxu0 0.0
  %649 = vmatpush1.msra.mxu0 0.0
  %650 = vmatprep.subr.mxu0 0.0
  %651 = vmatpush1.msra.mxu0 0.0
  %652 = vmatprep.subr.mxu0 0.0
  %653 = vmatpush1.msra.mxu0 0.0
  %654 = vmatprep.subr.mxu0 0.0
  %655 = vmatpush1.msra.mxu0 0.0
  %656 = vmatprep.subr.mxu0 0.0
  %657 = vmatpush1.msra.mxu0 0.0
  %658 = vmatprep.subr.mxu0 0.0
  %659 = vmatpush1.msra.mxu0 0.0
  %660 = vmatprep.subr.mxu0 0.0
  %661 = vmatpush1.msra.mxu0 0.0
  %662 = vmatprep.subr.mxu0 0.0
  %663 = vmatpush1.msra.mxu0 0.0
  %664 = vmatprep.subr.mxu0 0.0
  %665 = vmatpush1.msra.mxu0 0.0
  %666 = vmatprep.subr.mxu0 0.0
  %667 = vmatpush1.msra.mxu0 0.0
  %668 = vmatprep.subr.mxu0 0.0
  %669 = vmatpush1.msra.mxu0 0.0
  %670 = vmatprep.subr.mxu0 0.0
  %671 = vmatpush1.msra.mxu0 0.0
  %672 = vmatprep.subr.mxu0 0.0
  %673 = vmatpush1.msra.mxu0 0.0
  %674 = vmatprep.subr.mxu0 0.0
  %675 = vmatpush1.msra.mxu0 0.0
  %676 = vmatprep.subr.mxu0 0.0
  %677 = vmatpush1.msra.mxu0 0.0
  %678 = vmatprep.subr.mxu0 0.0
  %679 = vmatpush1.msra.mxu0 0.0
  %680 = vmatprep.subr.mxu0 0.0
  %681 = vmatpush1.msra.mxu0 0.0
  %682 = vmatprep.subr.mxu0 0.0
  %683 = vmatpush1.msra.mxu0 0.0
  %684 = vmatprep.subr.mxu0 0.0
  %685 = vmatpush1.msra.mxu0 0.0
  %686 = vmatprep.mubr.f32.mxu0 0.0
  %687 = vmatmul.mubr.f32.gmra.mrb[0].mxu0 %v273
  %v688 = vpop.f32.mrb[0].mxu0
  %v689 = vadd.f32 %v96, %v688
  %v690 = vpop.f32.mrb[0].mxu0
  %691 = vmatprep.mubr.f32.mxu0 0.0
  %692 = vmatmul.mubr.f32.gmra.mrb[0].mxu0 %v276
  %v693 = vpop.f32.mrb[0].mxu0
  %v694 = vadd.f32 %v101, %v693
  %v695 = vpop.f32.mrb[0].mxu0
  %696 = vmatprep.mubr.f32.mxu0 0.0
  %697 = vmatmul.mubr.f32.gmra.mrb[0].mxu0 %v279
  %v698 = vpop.f32.mrb[0].mxu0
  %v699 = vadd.f32 %v106, %v698
  %v700 = vpop.f32.mrb[0].mxu0
  %701 = vmatprep.mubr.f32.mxu0 0.0
  %702 = vmatmul.mubr.f32.gmra.mrb[0].mxu0 %v282
  %v703 = vpop.f32.mrb[0].mxu0
  %v704 = vadd.f32 %v111, %v703
  %v705 = vpop.f32.mrb[0].mxu0
  %706 = vmatprep.mubr.f32.mxu0 0.0
  %707 = vmatmul.mubr.f32.gmra.mrb[0].mxu0 %v285
  %v708 = vpop.f32.mrb[0].mxu0
  %v709 = vadd.f32 %v116, %v708
  %v710 = vpop.f32.mrb[0].mxu0
  %711 = vmatprep.mubr.f32.mxu0 0.0
  %712 = vmatmul.mubr.f32.gmra.mrb[0].mxu0 %v288
  %v713 = vpop.f32.mrb[0].mxu0
  %v714 = vadd.f32 %v121, %v713
  %v715 = vpop.f32.mrb[0].mxu0
  %716 = vmatprep.mubr.f32.mxu0 0.0
  %717 = vmatmul.mubr.f32.gmra.mrb[0].mxu0 %v291
  %v718 = vpop.f32.mrb[0].mxu0
  %v719 = vadd.f32 %v126, %v718
  %v720 = vpop.f32.mrb[0].mxu0
  %721 = vmatprep.mubr.f32.mxu0 0.0
  %722 = vmatmul.mubr.f32.gmra.mrb[0].mxu0 %v294
  %v723 = vpop.f32.mrb[0].mxu0
  %v724 = vadd.f32 %v131, %v723
  %v725 = vpop.f32.mrb[0].mxu0
  %726 = vmatprep.mubr.f32.mxu0 0.0
  %727 = vmatmul.mubr.f32.gmra.mrb[0].mxu0 %v297
  %v728 = vpop.f32.mrb[0].mxu0
  %v729 = vadd.f32 %v136, %v728
  %v730 = vpop.f32.mrb[0].mxu0
  %731 = vmatprep.mubr.f32.mxu0 0.0
  %732 = vmatmul.mubr.f32.gmra.mrb[0].mxu0 %v300
  %v733 = vpop.f32.mrb[0].mxu0
  %v734 = vadd.f32 %v141, %v733
  %v735 = vpop.f32.mrb[0].mxu0
  %736 = vmatprep.mubr.f32.mxu0 0.0
  %737 = vmatmul.mubr.f32.gmra.mrb[0].mxu0 %v303
  %v738 = vpop.f32.mrb[0].mxu0
  %v739 = vadd.f32 %v146, %v738
  %v740 = vpop.f32.mrb[0].mxu0
  %741 = vmatprep.mubr.f32.mxu0 0.0
  %742 = vmatmul.mubr.f32.gmra.mrb[0].mxu0 %v306
  %v743 = vpop.f32.mrb[0].mxu0
  %v744 = vadd.f32 %v151, %v743
  %v745 = vpop.f32.mrb[0].mxu0
  %746 = vmatprep.mubr.f32.mxu0 0.0
  %747 = vmatmul.mubr.f32.gmra.mrb[0].mxu0 %v309
  %v748 = vpop.f32.mrb[0].mxu0
  %v749 = vadd.f32 %v156, %v748
  %v750 = vpop.f32.mrb[0].mxu0
  %751 = vmatprep.mubr.f32.mxu0 0.0
  %752 = vmatmul.mubr.f32.gmra.mrb[0].mxu0 %v312
  %v753 = vpop.f32.mrb[0].mxu0
  %v754 = vadd.f32 %v161, %v753
  %v755 = vpop.f32.mrb[0].mxu0
  %756 = vmatprep.mubr.f32.mxu0 0.0
  %757 = vmatmul.mubr.f32.gmra.mrb[0].mxu0 %v315
  %v758 = vpop.f32.mrb[0].mxu0
  %v759 = vadd.f32 %v166, %v758
  %v760 = vpop.f32.mrb[0].mxu0
  %761 = vmatprep.mubr.f32.mxu0 0.0
  %762 = vmatmul.mubr.f32.gmra.mrb[0].mxu0 %v318
  %v763 = vpop.f32.mrb[0].mxu0
  %v764 = vadd.f32 %v171, %v763
  %v765 = vpop.f32.mrb[0].mxu0
  %766 = vdwg.mxu0
  %s767 = scalar_lea.vmem %s0, 48
  %v768 = vld [vmem:[%s767] sm:$0xff]
  %v769 = vld [vmem:[%s767 + $0x8] sm:$0x3f]
  %v771 = vsel %vm320, %v769, 0
  %773 = vmatprep.subr.mxu0 0.0
  %774 = vmatpush1.msra.mxu0 %v768
  %775 = vmatprep.subr.mxu0 0.0
  %776 = vmatpush1.msra.mxu0 %v771
  %777 = vmatprep.subr.mxu0 0.0
  %778 = vmatpush1.msra.mxu0 0.0
  %779 = vmatprep.subr.mxu0 0.0
  %780 = vmatpush1.msra.mxu0 0.0
  %781 = vmatprep.subr.mxu0 0.0
  %782 = vmatpush1.msra.mxu0 0.0
  %783 = vmatprep.subr.mxu0 0.0
  %784 = vmatpush1.msra.mxu0 0.0
  %785 = vmatprep.subr.mxu0 0.0
  %786 = vmatpush1.msra.mxu0 0.0
  %787 = vmatprep.subr.mxu0 0.0
  %788 = vmatpush1.msra.mxu0 0.0
  %789 = vmatprep.subr.mxu0 0.0
  %790 = vmatpush1.msra.mxu0 0.0
  %791 = vmatprep.subr.mxu0 0.0
  %792 = vmatpush1.msra.mxu0 0.0
  %793 = vmatprep.subr.mxu0 0.0
  %794 = vmatpush1.msra.mxu0 0.0
  %795 = vmatprep.subr.mxu0 0.0
  %796 = vmatpush1.msra.mxu0 0.0
  %797 = vmatprep.subr.mxu0 0.0
  %798 = vmatpush1.msra.mxu0 0.0
  %799 = vmatprep.subr.mxu0 0.0
  %800 = vmatpush1.msra.mxu0 0.0
  %801 = vmatprep.subr.mxu0 0.0
  %802 = vmatpush1.msra.mxu0 0.0
  %803 = vmatprep.subr.mxu0 0.0
  %804 = vmatpush1.msra.mxu0 0.0
  %805 = vmatprep.subr.mxu0 0.0
  %806 = vmatpush1.msra.mxu0 0.0
  %807 = vmatprep.subr.mxu0 0.0
  %808 = vmatpush1.msra.mxu0 0.0
  %809 = vmatprep.subr.mxu0 0.0
  %810 = vmatpush1.msra.mxu0 0.0
  %811 = vmatprep.subr.mxu0 0.0
  %812 = vmatpush1.msra.mxu0 0.0
  %813 = vmatprep.subr.mxu0 0.0
  %814 = vmatpush1.msra.mxu0 0.0
  %815 = vmatprep.subr.mxu0 0.0
  %816 = vmatpush1.msra.mxu0 0.0
  %817 = vmatprep.subr.mxu0 0.0
  %818 = vmatpush1.msra.mxu0 0.0
  %819 = vmatprep.subr.mxu0 0.0
  %820 = vmatpush1.msra.mxu0 0.0
  %821 = vmatprep.subr.mxu0 0.0
  %822 = vmatpush1.msra.mxu0 0.0
  %823 = vmatprep.subr.mxu0 0.0
  %824 = vmatpush1.msra.mxu0 0.0
  %825 = vmatprep.subr.mxu0 0.0
  %826 = vmatpush1.msra.mxu0 0.0
  %827 = vmatprep.subr.mxu0 0.0
  %828 = vmatpush1.msra.mxu0 0.0
  %829 = vmatprep.subr.mxu0 0.0
  %830 = vmatpush1.msra.mxu0 0.0
  %831 = vmatprep.subr.mxu0 0.0
  %832 = vmatpush1.msra.mxu0 0.0
  %833 = vmatprep.subr.mxu0 0.0
  %834 = vmatpush1.msra.mxu0 0.0
  %835 = vmatprep.subr.mxu0 0.0
  %836 = vmatpush1.msra.mxu0 0.0
  %837 = vmatprep.mubr.f32.mxu0 0.0
  %838 = vmatmul.mubr.f32.gmra.mrb[0].mxu0 %v273
  %v839 = vpop.f32.mrb[0].mxu0
  %v840 = vadd.f32 %v96, %v839
  %v841 = vpop.f32.mrb[0].mxu0
  %842 = vmatprep.mubr.f32.mxu0 0.0
  %843 = vmatmul.mubr.f32.gmra.mrb[0].mxu0 %v276
  %v844 = vpop.f32.mrb[0].mxu0
  %v845 = vadd.f32 %v101, %v844
  %v846 = vpop.f32.mrb[0].mxu0
  %847 = vmatprep.mubr.f32.mxu0 0.0
  %848 = vmatmul.mubr.f32.gmra.mrb[0].mxu0 %v279
  %v849 = vpop.f32.mrb[0].mxu0
  %v850 = vadd.f32 %v106, %v849
  %v851 = vpop.f32.mrb[0].mxu0
  %852 = vmatprep.mubr.f32.mxu0 0.0
  %853 = vmatmul.mubr.f32.gmra.mrb[0].mxu0 %v282
  %v854 = vpop.f32.mrb[0].mxu0
  %v855 = vadd.f32 %v111, %v854
  %v856 = vpop.f32.mrb[0].mxu0
  %857 = vmatprep.mubr.f32.mxu0 0.0
  %858 = vmatmul.mubr.f32.gmra.mrb[0].mxu0 %v285
  %v859 = vpop.f32.mrb[0].mxu0
  %v860 = vadd.f32 %v116, %v859
  %v861 = vpop.f32.mrb[0].mxu0
  %862 = vmatprep.mubr.f32.mxu0 0.0
  %863 = vmatmul.mubr.f32.gmra.mrb[0].mxu0 %v288
  %v864 = vpop.f32.mrb[0].mxu0
  %v865 = vadd.f32 %v121, %v864
  %v866 = vpop.f32.mrb[0].mxu0
  %867 = vmatprep.mubr.f32.mxu0 0.0
  %868 = vmatmul.mubr.f32.gmra.mrb[0].mxu0 %v291
  %v869 = vpop.f32.mrb[0].mxu0
  %v870 = vadd.f32 %v126, %v869
  %v871 = vpop.f32.mrb[0].mxu0
  %872 = vmatprep.mubr.f32.mxu0 0.0
  %873 = vmatmul.mubr.f32.gmra.mrb[0].mxu0 %v294
  %v874 = vpop.f32.mrb[0].mxu0
  %v875 = vadd.f32 %v131, %v874
  %v876 = vpop.f32.mrb[0].mxu0
  %877 = vmatprep.mubr.f32.mxu0 0.0
  %878 = vmatmul.mubr.f32.gmra.mrb[0].mxu0 %v297
  %v879 = vpop.f32.mrb[0].mxu0
  %v880 = vadd.f32 %v136, %v879
  %v881 = vpop.f32.mrb[0].mxu0
  %882 = vmatprep.mubr.f32.mxu0 0.0
  %883 = vmatmul.mubr.f32.gmra.mrb[0].mxu0 %v300
  %v884 = vpop.f32.mrb[0].mxu0
  %v885 = vadd.f32 %v141, %v884
  %v886 = vpop.f32.mrb[0].mxu0
  %887 = vmatprep.mubr.f32.mxu0 0.0
  %888 = vmatmul.mubr.f32.gmra.mrb[0].mxu0 %v303
  %v889 = vpop.f32.mrb[0].mxu0
  %v890 = vadd.f32 %v146, %v889
  %v891 = vpop.f32.mrb[0].mxu0
  %892 = vmatprep.mubr.f32.mxu0 0.0
  %893 = vmatmul.mubr.f32.gmra.mrb[0].mxu0 %v306
  %v894 = vpop.f32.mrb[0].mxu0
  %v895 = vadd.f32 %v151, %v894
  %v896 = vpop.f32.mrb[0].mxu0
  %897 = vmatprep.mubr.f32.mxu0 0.0
  %898 = vmatmul.mubr.f32.gmra.mrb[0].mxu0 %v309
  %v899 = vpop.f32.mrb[0].mxu0
  %v900 = vadd.f32 %v156, %v899
  %v901 = vpop.f32.mrb[0].mxu0
  %902 = vmatprep.mubr.f32.mxu0 0.0
  %903 = vmatmul.mubr.f32.gmra.mrb[0].mxu0 %v312
  %v904 = vpop.f32.mrb[0].mxu0
  %v905 = vadd.f32 %v161, %v904
  %v906 = vpop.f32.mrb[0].mxu0
  %907 = vmatprep.mubr.f32.mxu0 0.0
  %908 = vmatmul.mubr.f32.gmra.mrb[0].mxu0 %v315
  %v909 = vpop.f32.mrb[0].mxu0
  %v910 = vadd.f32 %v166, %v909
  %v911 = vpop.f32.mrb[0].mxu0
  %912 = vmatprep.mubr.f32.mxu0 0.0
  %913 = vmatmul.mubr.f32.gmra.mrb[0].mxu0 %v318
  %v914 = vpop.f32.mrb[0].mxu0
  %v915 = vadd.f32 %v171, %v914
  %v916 = vpop.f32.mrb[0].mxu0
  %917 = vdwg.mxu0
  %s918 = scalar_lea.vmem %s0, 64
  %v919 = vld [vmem:[%s918] sm:$0xff]
  %v920 = vld [vmem:[%s918 + $0x8] sm:$0x3f]
  %v922 = vsel %vm320, %v920, 0
  %924 = vmatprep.subr.mxu0 0.0
  %925 = vmatpush1.msra.mxu0 %v919
  %926 = vmatprep.subr.mxu0 0.0
  %927 = vmatpush1.msra.mxu0 %v922
  %928 = vmatprep.subr.mxu0 0.0
  %929 = vmatpush1.msra.mxu0 0.0
  %930 = vmatprep.subr.mxu0 0.0
  %931 = vmatpush1.msra.mxu0 0.0
  %932 = vmatprep.subr.mxu0 0.0
  %933 = vmatpush1.msra.mxu0 0.0
  %934 = vmatprep.subr.mxu0 0.0
  %935 = vmatpush1.msra.mxu0 0.0
  %936 = vmatprep.subr.mxu0 0.0
  %937 = vmatpush1.msra.mxu0 0.0
  %938 = vmatprep.subr.mxu0 0.0
  %939 = vmatpush1.msra.mxu0 0.0
  %940 = vmatprep.subr.mxu0 0.0
  %941 = vmatpush1.msra.mxu0 0.0
  %942 = vmatprep.subr.mxu0 0.0
  %943 = vmatpush1.msra.mxu0 0.0
  %944 = vmatprep.subr.mxu0 0.0
  %945 = vmatpush1.msra.mxu0 0.0
  %946 = vmatprep.subr.mxu0 0.0
  %947 = vmatpush1.msra.mxu0 0.0
  %948 = vmatprep.subr.mxu0 0.0
  %949 = vmatpush1.msra.mxu0 0.0
  %950 = vmatprep.subr.mxu0 0.0
  %951 = vmatpush1.msra.mxu0 0.0
  %952 = vmatprep.subr.mxu0 0.0
  %953 = vmatpush1.msra.mxu0 0.0
  %954 = vmatprep.subr.mxu0 0.0
  %955 = vmatpush1.msra.mxu0 0.0
  %956 = vmatprep.subr.mxu0 0.0
  %957 = vmatpush1.msra.mxu0 0.0
  %958 = vmatprep.subr.mxu0 0.0
  %959 = vmatpush1.msra.mxu0 0.0
  %960 = vmatprep.subr.mxu0 0.0
  %961 = vmatpush1.msra.mxu0 0.0
  %962 = vmatprep.subr.mxu0 0.0
  %963 = vmatpush1.msra.mxu0 0.0
  %964 = vmatprep.subr.mxu0 0.0
  %965 = vmatpush1.msra.mxu0 0.0
  %966 = vmatprep.subr.mxu0 0.0
  %967 = vmatpush1.msra.mxu0 0.0
  %968 = vmatprep.subr.mxu0 0.0
  %969 = vmatpush1.msra.mxu0 0.0
  %970 = vmatprep.subr.mxu0 0.0
  %971 = vmatpush1.msra.mxu0 0.0
  %972 = vmatprep.subr.mxu0 0.0
  %973 = vmatpush1.msra.mxu0 0.0
  %974 = vmatprep.subr.mxu0 0.0
  %975 = vmatpush1.msra.mxu0 0.0
  %976 = vmatprep.subr.mxu0 0.0
  %977 = vmatpush1.msra.mxu0 0.0
  %978 = vmatprep.subr.mxu0 0.0
  %979 = vmatpush1.msra.mxu0 0.0
  %980 = vmatprep.subr.mxu0 0.0
  %981 = vmatpush1.msra.mxu0 0.0
  %982 = vmatprep.subr.mxu0 0.0
  %983 = vmatpush1.msra.mxu0 0.0
  %984 = vmatprep.subr.mxu0 0.0
  %985 = vmatpush1.msra.mxu0 0.0
  %986 = vmatprep.subr.mxu0 0.0
  %987 = vmatpush1.msra.mxu0 0.0
  %988 = vmatprep.mubr.f32.mxu0 0.0
  %989 = vmatmul.mubr.f32.gmra.mrb[0].mxu0 %v273
  %v990 = vpop.f32.mrb[0].mxu0
  %v991 = vadd.f32 %v96, %v990
  %v992 = vpop.f32.mrb[0].mxu0
  %993 = vmatprep.mubr.f32.mxu0 0.0
  %994 = vmatmul.mubr.f32.gmra.mrb[0].mxu0 %v276
  %v995 = vpop.f32.mrb[0].mxu0
  %v996 = vadd.f32 %v101, %v995
  %v997 = vpop.f32.mrb[0].mxu0
  %998 = vmatprep.mubr.f32.mxu0 0.0
  %999 = vmatmul.mubr.f32.gmra.mrb[0].mxu0 %v279
  %v1000 = vpop.f32.mrb[0].mxu0
  %v1001 = vadd.f32 %v106, %v1000
  %v1002 = vpop.f32.mrb[0].mxu0
  %1003 = vmatprep.mubr.f32.mxu0 0.0
  %1004 = vmatmul.mubr.f32.gmra.mrb[0].mxu0 %v282
  %v1005 = vpop.f32.mrb[0].mxu0
  %v1006 = vadd.f32 %v111, %v1005
  %v1007 = vpop.f32.mrb[0].mxu0
  %1008 = vmatprep.mubr.f32.mxu0 0.0
  %1009 = vmatmul.mubr.f32.gmra.mrb[0].mxu0 %v285
  %v1010 = vpop.f32.mrb[0].mxu0
  %v1011 = vadd.f32 %v116, %v1010
  %v1012 = vpop.f32.mrb[0].mxu0
  %1013 = vmatprep.mubr.f32.mxu0 0.0
  %1014 = vmatmul.mubr.f32.gmra.mrb[0].mxu0 %v288
  %v1015 = vpop.f32.mrb[0].mxu0
  %v1016 = vadd.f32 %v121, %v1015
  %v1017 = vpop.f32.mrb[0].mxu0
  %1018 = vmatprep.mubr.f32.mxu0 0.0
  %1019 = vmatmul.mubr.f32.gmra.mrb[0].mxu0 %v291
  %v1020 = vpop.f32.mrb[0].mxu0
  %v1021 = vadd.f32 %v126, %v1020
  %v1022 = vpop.f32.mrb[0].mxu0
  %1023 = vmatprep.mubr.f32.mxu0 0.0
  %1024 = vmatmul.mubr.f32.gmra.mrb[0].mxu0 %v294
  %v1025 = vpop.f32.mrb[0].mxu0
  %v1026 = vadd.f32 %v131, %v1025
  %v1027 = vpop.f32.mrb[0].mxu0
  %1028 = vmatprep.mubr.f32.mxu0 0.0
  %1029 = vmatmul.mubr.f32.gmra.mrb[0].mxu0 %v297
  %v1030 = vpop.f32.mrb[0].mxu0
  %v1031 = vadd.f32 %v136, %v1030
  %v1032 = vpop.f32.mrb[0].mxu0
  %1033 = vmatprep.mubr.f32.mxu0 0.0
  %1034 = vmatmul.mubr.f32.gmra.mrb[0].mxu0 %v300
  %v1035 = vpop.f32.mrb[0].mxu0
  %v1036 = vadd.f32 %v141, %v1035
  %v1037 = vpop.f32.mrb[0].mxu0
  %1038 = vmatprep.mubr.f32.mxu0 0.0
  %1039 = vmatmul.mubr.f32.gmra.mrb[0].mxu0 %v303
  %v1040 = vpop.f32.mrb[0].mxu0
  %v1041 = vadd.f32 %v146, %v1040
  %v1042 = vpop.f32.mrb[0].mxu0
  %1043 = vmatprep.mubr.f32.mxu0 0.0
  %1044 = vmatmul.mubr.f32.gmra.mrb[0].mxu0 %v306
  %v1045 = vpop.f32.mrb[0].mxu0
  %v1046 = vadd.f32 %v151, %v1045
  %v1047 = vpop.f32.mrb[0].mxu0
  %1048 = vmatprep.mubr.f32.mxu0 0.0
  %1049 = vmatmul.mubr.f32.gmra.mrb[0].mxu0 %v309
  %v1050 = vpop.f32.mrb[0].mxu0
  %v1051 = vadd.f32 %v156, %v1050
  %v1052 = vpop.f32.mrb[0].mxu0
  %1053 = vmatprep.mubr.f32.mxu0 0.0
  %1054 = vmatmul.mubr.f32.gmra.mrb[0].mxu0 %v312
  %v1055 = vpop.f32.mrb[0].mxu0
  %v1056 = vadd.f32 %v161, %v1055
  %v1057 = vpop.f32.mrb[0].mxu0
  %1058 = vmatprep.mubr.f32.mxu0 0.0
  %1059 = vmatmul.mubr.f32.gmra.mrb[0].mxu0 %v315
  %v1060 = vpop.f32.mrb[0].mxu0
  %v1061 = vadd.f32 %v166, %v1060
  %v1062 = vpop.f32.mrb[0].mxu0
  %1063 = vmatprep.mubr.f32.mxu0 0.0
  %1064 = vmatmul.mubr.f32.gmra.mrb[0].mxu0 %v318
  %v1065 = vpop.f32.mrb[0].mxu0
  %v1066 = vadd.f32 %v171, %v1065
  %v1067 = vpop.f32.mrb[0].mxu0
  %1068 = vdwg.mxu0
  %s1069 = scalar_lea.vmem %s0, 80
  %v1070 = vld [vmem:[%s1069] sm:$0xff]
  %v1071 = vld [vmem:[%s1069 + $0x8] sm:$0x3f]
  %v1073 = vsel %vm320, %v1071, 0
  %1075 = vmatprep.subr.mxu0 0.0
  %1076 = vmatpush1.msra.mxu0 %v1070
  %1077 = vmatprep.subr.mxu0 0.0
  %1078 = vmatpush1.msra.mxu0 %v1073
  %1079 = vmatprep.subr.mxu0 0.0
  %1080 = vmatpush1.msra.mxu0 0.0
  %1081 = vmatprep.subr.mxu0 0.0
  %1082 = vmatpush1.msra.mxu0 0.0
  %1083 = vmatprep.subr.mxu0 0.0
  %1084 = vmatpush1.msra.mxu0 0.0
  %1085 = vmatprep.subr.mxu0 0.0
  %1086 = vmatpush1.msra.mxu0 0.0
  %1087 = vmatprep.subr.mxu0 0.0
  %1088 = vmatpush1.msra.mxu0 0.0
  %1089 = vmatprep.subr.mxu0 0.0
  %1090 = vmatpush1.msra.mxu0 0.0
  %1091 = vmatprep.subr.mxu0 0.0
  %1092 = vmatpush1.msra.mxu0 0.0
  %1093 = vmatprep.subr.mxu0 0.0
  %1094 = vmatpush1.msra.mxu0 0.0
  %1095 = vmatprep.subr.mxu0 0.0
  %1096 = vmatpush1.msra.mxu0 0.0
  %1097 = vmatprep.subr.mxu0 0.0
  %1098 = vmatpush1.msra.mxu0 0.0
  %1099 = vmatprep.subr.mxu0 0.0
  %1100 = vmatpush1.msra.mxu0 0.0
  %1101 = vmatprep.subr.mxu0 0.0
  %1102 = vmatpush1.msra.mxu0 0.0
  %1103 = vmatprep.subr.mxu0 0.0
  %1104 = vmatpush1.msra.mxu0 0.0
  %1105 = vmatprep.subr.mxu0 0.0
  %1106 = vmatpush1.msra.mxu0 0.0
  %1107 = vmatprep.subr.mxu0 0.0
  %1108 = vmatpush1.msra.mxu0 0.0
  %1109 = vmatprep.subr.mxu0 0.0
  %1110 = vmatpush1.msra.mxu0 0.0
  %1111 = vmatprep.subr.mxu0 0.0
  %1112 = vmatpush1.msra.mxu0 0.0
  %1113 = vmatprep.subr.mxu0 0.0
  %1114 = vmatpush1.msra.mxu0 0.0
  %1115 = vmatprep.subr.mxu0 0.0
  %1116 = vmatpush1.msra.mxu0 0.0
  %1117 = vmatprep.subr.mxu0 0.0
  %1118 = vmatpush1.msra.mxu0 0.0
  %1119 = vmatprep.subr.mxu0 0.0
  %1120 = vmatpush1.msra.mxu0 0.0
  %1121 = vmatprep.subr.mxu0 0.0
  %1122 = vmatpush1.msra.mxu0 0.0
  %1123 = vmatprep.subr.mxu0 0.0
  %1124 = vmatpush1.msra.mxu0 0.0
  %1125 = vmatprep.subr.mxu0 0.0
  %1126 = vmatpush1.msra.mxu0 0.0
  %1127 = vmatprep.subr.mxu0 0.0
  %1128 = vmatpush1.msra.mxu0 0.0
  %1129 = vmatprep.subr.mxu0 0.0
  %1130 = vmatpush1.msra.mxu0 0.0
  %1131 = vmatprep.subr.mxu0 0.0
  %1132 = vmatpush1.msra.mxu0 0.0
  %1133 = vmatprep.subr.mxu0 0.0
  %1134 = vmatpush1.msra.mxu0 0.0
  %1135 = vmatprep.subr.mxu0 0.0
  %1136 = vmatpush1.msra.mxu0 0.0
  %1137 = vmatprep.subr.mxu0 0.0
  %1138 = vmatpush1.msra.mxu0 0.0
  %1139 = vmatprep.mubr.f32.mxu0 0.0
  %1140 = vmatmul.mubr.f32.gmra.mrb[0].mxu0 %v273
  %v1141 = vpop.f32.mrb[0].mxu0
  %v1142 = vadd.f32 %v96, %v1141
  %v1143 = vpop.f32.mrb[0].mxu0
  %1144 = vmatprep.mubr.f32.mxu0 0.0
  %1145 = vmatmul.mubr.f32.gmra.mrb[0].mxu0 %v276
  %v1146 = vpop.f32.mrb[0].mxu0
  %v1147 = vadd.f32 %v101, %v1146
  %v1148 = vpop.f32.mrb[0].mxu0
  %1149 = vmatprep.mubr.f32.mxu0 0.0
  %1150 = vmatmul.mubr.f32.gmra.mrb[0].mxu0 %v279
  %v1151 = vpop.f32.mrb[0].mxu0
  %v1152 = vadd.f32 %v106, %v1151
  %v1153 = vpop.f32.mrb[0].mxu0
  %1154 = vmatprep.mubr.f32.mxu0 0.0
  %1155 = vmatmul.mubr.f32.gmra.mrb[0].mxu0 %v282
  %v1156 = vpop.f32.mrb[0].mxu0
  %v1157 = vadd.f32 %v111, %v1156
  %v1158 = vpop.f32.mrb[0].mxu0
  %1159 = vmatprep.mubr.f32.mxu0 0.0
  %1160 = vmatmul.mubr.f32.gmra.mrb[0].mxu0 %v285
  %v1161 = vpop.f32.mrb[0].mxu0
  %v1162 = vadd.f32 %v116, %v1161
  %v1163 = vpop.f32.mrb[0].mxu0
  %1164 = vmatprep.mubr.f32.mxu0 0.0
  %1165 = vmatmul.mubr.f32.gmra.mrb[0].mxu0 %v288
  %v1166 = vpop.f32.mrb[0].mxu0
  %v1167 = vadd.f32 %v121, %v1166
  %v1168 = vpop.f32.mrb[0].mxu0
  %1169 = vmatprep.mubr.f32.mxu0 0.0
  %1170 = vmatmul.mubr.f32.gmra.mrb[0].mxu0 %v291
  %v1171 = vpop.f32.mrb[0].mxu0
  %v1172 = vadd.f32 %v126, %v1171
  %v1173 = vpop.f32.mrb[0].mxu0
  %1174 = vmatprep.mubr.f32.mxu0 0.0
  %1175 = vmatmul.mubr.f32.gmra.mrb[0].mxu0 %v294
  %v1176 = vpop.f32.mrb[0].mxu0
  %v1177 = vadd.f32 %v131, %v1176
  %v1178 = vpop.f32.mrb[0].mxu0
  %1179 = vmatprep.mubr.f32.mxu0 0.0
  %1180 = vmatmul.mubr.f32.gmra.mrb[0].mxu0 %v297
  %v1181 = vpop.f32.mrb[0].mxu0
  %v1182 = vadd.f32 %v136, %v1181
  %v1183 = vpop.f32.mrb[0].mxu0
  %1184 = vmatprep.mubr.f32.mxu0 0.0
  %1185 = vmatmul.mubr.f32.gmra.mrb[0].mxu0 %v300
  %v1186 = vpop.f32.mrb[0].mxu0
  %v1187 = vadd.f32 %v141, %v1186
  %v1188 = vpop.f32.mrb[0].mxu0
  %1189 = vmatprep.mubr.f32.mxu0 0.0
  %1190 = vmatmul.mubr.f32.gmra.mrb[0].mxu0 %v303
  %v1191 = vpop.f32.mrb[0].mxu0
  %v1192 = vadd.f32 %v146, %v1191
  %v1193 = vpop.f32.mrb[0].mxu0
  %1194 = vmatprep.mubr.f32.mxu0 0.0
  %1195 = vmatmul.mubr.f32.gmra.mrb[0].mxu0 %v306
  %v1196 = vpop.f32.mrb[0].mxu0
  %v1197 = vadd.f32 %v151, %v1196
  %v1198 = vpop.f32.mrb[0].mxu0
  %1199 = vmatprep.mubr.f32.mxu0 0.0
  %1200 = vmatmul.mubr.f32.gmra.mrb[0].mxu0 %v309
  %v1201 = vpop.f32.mrb[0].mxu0
  %v1202 = vadd.f32 %v156, %v1201
  %v1203 = vpop.f32.mrb[0].mxu0
  %1204 = vmatprep.mubr.f32.mxu0 0.0
  %1205 = vmatmul.mubr.f32.gmra.mrb[0].mxu0 %v312
  %v1206 = vpop.f32.mrb[0].mxu0
  %v1207 = vadd.f32 %v161, %v1206
  %v1208 = vpop.f32.mrb[0].mxu0
  %1209 = vmatprep.mubr.f32.mxu0 0.0
  %1210 = vmatmul.mubr.f32.gmra.mrb[0].mxu0 %v315
  %v1211 = vpop.f32.mrb[0].mxu0
  %v1212 = vadd.f32 %v166, %v1211
  %v1213 = vpop.f32.mrb[0].mxu0
  %1214 = vmatprep.mubr.f32.mxu0 0.0
  %1215 = vmatmul.mubr.f32.gmra.mrb[0].mxu0 %v318
  %v1216 = vpop.f32.mrb[0].mxu0
  %v1217 = vadd.f32 %v171, %v1216
  %v1218 = vpop.f32.mrb[0].mxu0
  %1219 = vdwg.mxu0
  %s1220 = scalar_lea.vmem %s0, 96
  %v1221 = vld [vmem:[%s1220] sm:$0xff]
  %v1222 = vld [vmem:[%s1220 + $0x8] sm:$0x3f]
  %v1224 = vsel %vm320, %v1222, 0
  %1226 = vmatprep.subr.mxu0 0.0
  %1227 = vmatpush1.msra.mxu0 %v1221
  %1228 = vmatprep.subr.mxu0 0.0
  %1229 = vmatpush1.msra.mxu0 %v1224
  %1230 = vmatprep.subr.mxu0 0.0
  %1231 = vmatpush1.msra.mxu0 0.0
  %1232 = vmatprep.subr.mxu0 0.0
  %1233 = vmatpush1.msra.mxu0 0.0
  %1234 = vmatprep.subr.mxu0 0.0
  %1235 = vmatpush1.msra.mxu0 0.0
  %1236 = vmatprep.subr.mxu0 0.0
  %1237 = vmatpush1.msra.mxu0 0.0
  %1238 = vmatprep.subr.mxu0 0.0
  %1239 = vmatpush1.msra.mxu0 0.0
  %1240 = vmatprep.subr.mxu0 0.0
  %1241 = vmatpush1.msra.mxu0 0.0
  %1242 = vmatprep.subr.mxu0 0.0
  %1243 = vmatpush1.msra.mxu0 0.0
  %1244 = vmatprep.subr.mxu0 0.0
  %1245 = vmatpush1.msra.mxu0 0.0
  %1246 = vmatprep.subr.mxu0 0.0
  %1247 = vmatpush1.msra.mxu0 0.0
  %1248 = vmatprep.subr.mxu0 0.0
  %1249 = vmatpush1.msra.mxu0 0.0
  %1250 = vmatprep.subr.mxu0 0.0
  %1251 = vmatpush1.msra.mxu0 0.0
  %1252 = vmatprep.subr.mxu0 0.0
  %1253 = vmatpush1.msra.mxu0 0.0
  %1254 = vmatprep.subr.mxu0 0.0
  %1255 = vmatpush1.msra.mxu0 0.0
  %1256 = vmatprep.subr.mxu0 0.0
  %1257 = vmatpush1.msra.mxu0 0.0
  %1258 = vmatprep.subr.mxu0 0.0
  %1259 = vmatpush1.msra.mxu0 0.0
  %1260 = vmatprep.subr.mxu0 0.0
  %1261 = vmatpush1.msra.mxu0 0.0
  %1262 = vmatprep.subr.mxu0 0.0
  %1263 = vmatpush1.msra.mxu0 0.0
  %1264 = vmatprep.subr.mxu0 0.0
  %1265 = vmatpush1.msra.mxu0 0.0
  %1266 = vmatprep.subr.mxu0 0.0
  %1267 = vmatpush1.msra.mxu0 0.0
  %1268 = vmatprep.subr.mxu0 0.0
  %1269 = vmatpush1.msra.mxu0 0.0
  %1270 = vmatprep.subr.mxu0 0.0
  %1271 = vmatpush1.msra.mxu0 0.0
  %1272 = vmatprep.subr.mxu0 0.0
  %1273 = vmatpush1.msra.mxu0 0.0
  %1274 = vmatprep.subr.mxu0 0.0
  %1275 = vmatpush1.msra.mxu0 0.0
  %1276 = vmatprep.subr.mxu0 0.0
  %1277 = vmatpush1.msra.mxu0 0.0
  %1278 = vmatprep.subr.mxu0 0.0
  %1279 = vmatpush1.msra.mxu0 0.0
  %1280 = vmatprep.subr.mxu0 0.0
  %1281 = vmatpush1.msra.mxu0 0.0
  %1282 = vmatprep.subr.mxu0 0.0
  %1283 = vmatpush1.msra.mxu0 0.0
  %1284 = vmatprep.subr.mxu0 0.0
  %1285 = vmatpush1.msra.mxu0 0.0
  %1286 = vmatprep.subr.mxu0 0.0
  %1287 = vmatpush1.msra.mxu0 0.0
  %1288 = vmatprep.subr.mxu0 0.0
  %1289 = vmatpush1.msra.mxu0 0.0
  %1290 = vmatprep.mubr.f32.mxu0 0.0
  %1291 = vmatmul.mubr.f32.gmra.mrb[0].mxu0 %v273
  %v1292 = vpop.f32.mrb[0].mxu0
  %v1293 = vadd.f32 %v96, %v1292
  %v1294 = vpop.f32.mrb[0].mxu0
  %1295 = vmatprep.mubr.f32.mxu0 0.0
  %1296 = vmatmul.mubr.f32.gmra.mrb[0].mxu0 %v276
  %v1297 = vpop.f32.mrb[0].mxu0
  %v1298 = vadd.f32 %v101, %v1297
  %v1299 = vpop.f32.mrb[0].mxu0
  %1300 = vmatprep.mubr.f32.mxu0 0.0
  %1301 = vmatmul.mubr.f32.gmra.mrb[0].mxu0 %v279
  %v1302 = vpop.f32.mrb[0].mxu0
  %v1303 = vadd.f32 %v106, %v1302
  %v1304 = vpop.f32.mrb[0].mxu0
  %1305 = vmatprep.mubr.f32.mxu0 0.0
  %1306 = vmatmul.mubr.f32.gmra.mrb[0].mxu0 %v282
  %v1307 = vpop.f32.mrb[0].mxu0
  %v1308 = vadd.f32 %v111, %v1307
  %v1309 = vpop.f32.mrb[0].mxu0
  %1310 = vmatprep.mubr.f32.mxu0 0.0
  %1311 = vmatmul.mubr.f32.gmra.mrb[0].mxu0 %v285
  %v1312 = vpop.f32.mrb[0].mxu0
  %v1313 = vadd.f32 %v116, %v1312
  %v1314 = vpop.f32.mrb[0].mxu0
  %1315 = vmatprep.mubr.f32.mxu0 0.0
  %1316 = vmatmul.mubr.f32.gmra.mrb[0].mxu0 %v288
  %v1317 = vpop.f32.mrb[0].mxu0
  %v1318 = vadd.f32 %v121, %v1317
  %v1319 = vpop.f32.mrb[0].mxu0
  %1320 = vmatprep.mubr.f32.mxu0 0.0
  %1321 = vmatmul.mubr.f32.gmra.mrb[0].mxu0 %v291
  %v1322 = vpop.f32.mrb[0].mxu0
  %v1323 = vadd.f32 %v126, %v1322
  %v1324 = vpop.f32.mrb[0].mxu0
  %1325 = vmatprep.mubr.f32.mxu0 0.0
  %1326 = vmatmul.mubr.f32.gmra.mrb[0].mxu0 %v294
  %v1327 = vpop.f32.mrb[0].mxu0
  %v1328 = vadd.f32 %v131, %v1327
  %v1329 = vpop.f32.mrb[0].mxu0
  %1330 = vmatprep.mubr.f32.mxu0 0.0
  %1331 = vmatmul.mubr.f32.gmra.mrb[0].mxu0 %v297
  %v1332 = vpop.f32.mrb[0].mxu0
  %v1333 = vadd.f32 %v136, %v1332
  %v1334 = vpop.f32.mrb[0].mxu0
  %1335 = vmatprep.mubr.f32.mxu0 0.0
  %1336 = vmatmul.mubr.f32.gmra.mrb[0].mxu0 %v300
  %v1337 = vpop.f32.mrb[0].mxu0
  %v1338 = vadd.f32 %v141, %v1337
  %v1339 = vpop.f32.mrb[0].mxu0
  %1340 = vmatprep.mubr.f32.mxu0 0.0
  %1341 = vmatmul.mubr.f32.gmra.mrb[0].mxu0 %v303
  %v1342 = vpop.f32.mrb[0].mxu0
  %v1343 = vadd.f32 %v146, %v1342
  %v1344 = vpop.f32.mrb[0].mxu0
  %1345 = vmatprep.mubr.f32.mxu0 0.0
  %1346 = vmatmul.mubr.f32.gmra.mrb[0].mxu0 %v306
  %v1347 = vpop.f32.mrb[0].mxu0
  %v1348 = vadd.f32 %v151, %v1347
  %v1349 = vpop.f32.mrb[0].mxu0
  %1350 = vmatprep.mubr.f32.mxu0 0.0
  %1351 = vmatmul.mubr.f32.gmra.mrb[0].mxu0 %v309
  %v1352 = vpop.f32.mrb[0].mxu0
  %v1353 = vadd.f32 %v156, %v1352
  %v1354 = vpop.f32.mrb[0].mxu0
  %1355 = vmatprep.mubr.f32.mxu0 0.0
  %1356 = vmatmul.mubr.f32.gmra.mrb[0].mxu0 %v312
  %v1357 = vpop.f32.mrb[0].mxu0
  %v1358 = vadd.f32 %v161, %v1357
  %v1359 = vpop.f32.mrb[0].mxu0
  %1360 = vmatprep.mubr.f32.mxu0 0.0
  %1361 = vmatmul.mubr.f32.gmra.mrb[0].mxu0 %v315
  %v1362 = vpop.f32.mrb[0].mxu0
  %v1363 = vadd.f32 %v166, %v1362
  %v1364 = vpop.f32.mrb[0].mxu0
  %1365 = vmatprep.mubr.f32.mxu0 0.0
  %1366 = vmatmul.mubr.f32.gmra.mrb[0].mxu0 %v318
  %v1367 = vpop.f32.mrb[0].mxu0
  %v1368 = vadd.f32 %v171, %v1367
  %v1369 = vpop.f32.mrb[0].mxu0
  %1370 = vdwg.mxu0
  %s1371 = scalar_lea.vmem %s0, 112
  %v1372 = vld [vmem:[%s1371] sm:$0xff]
  %v1373 = vld [vmem:[%s1371 + $0x8] sm:$0x3f]
  %v1375 = vsel %vm320, %v1373, 0
  %1377 = vmatprep.subr.mxu0 0.0
  %1378 = vmatpush1.msra.mxu0 %v1372
  %1379 = vmatprep.subr.mxu0 0.0
  %1380 = vmatpush1.msra.mxu0 %v1375
  %1381 = vmatprep.subr.mxu0 0.0
  %1382 = vmatpush1.msra.mxu0 0.0
  %1383 = vmatprep.subr.mxu0 0.0
  %1384 = vmatpush1.msra.mxu0 0.0
  %1385 = vmatprep.subr.mxu0 0.0
  %1386 = vmatpush1.msra.mxu0 0.0
  %1387 = vmatprep.subr.mxu0 0.0
  %1388 = vmatpush1.msra.mxu0 0.0
  %1389 = vmatprep.subr.mxu0 0.0
  %1390 = vmatpush1.msra.mxu0 0.0
  %1391 = vmatprep.subr.mxu0 0.0
  %1392 = vmatpush1.msra.mxu0 0.0
  %1393 = vmatprep.subr.mxu0 0.0
  %1394 = vmatpush1.msra.mxu0 0.0
  %1395 = vmatprep.subr.mxu0 0.0
  %1396 = vmatpush1.msra.mxu0 0.0
  %1397 = vmatprep.subr.mxu0 0.0
  %1398 = vmatpush1.msra.mxu0 0.0
  %1399 = vmatprep.subr.mxu0 0.0
  %1400 = vmatpush1.msra.mxu0 0.0
  %1401 = vmatprep.subr.mxu0 0.0
  %1402 = vmatpush1.msra.mxu0 0.0
  %1403 = vmatprep.subr.mxu0 0.0
  %1404 = vmatpush1.msra.mxu0 0.0
  %1405 = vmatprep.subr.mxu0 0.0
  %1406 = vmatpush1.msra.mxu0 0.0
  %1407 = vmatprep.subr.mxu0 0.0
  %1408 = vmatpush1.msra.mxu0 0.0
  %1409 = vmatprep.subr.mxu0 0.0
  %1410 = vmatpush1.msra.mxu0 0.0
  %1411 = vmatprep.subr.mxu0 0.0
  %1412 = vmatpush1.msra.mxu0 0.0
  %1413 = vmatprep.subr.mxu0 0.0
  %1414 = vmatpush1.msra.mxu0 0.0
  %1415 = vmatprep.subr.mxu0 0.0
  %1416 = vmatpush1.msra.mxu0 0.0
  %1417 = vmatprep.subr.mxu0 0.0
  %1418 = vmatpush1.msra.mxu0 0.0
  %1419 = vmatprep.subr.mxu0 0.0
  %1420 = vmatpush1.msra.mxu0 0.0
  %1421 = vmatprep.subr.mxu0 0.0
  %1422 = vmatpush1.msra.mxu0 0.0
  %1423 = vmatprep.subr.mxu0 0.0
  %1424 = vmatpush1.msra.mxu0 0.0
  %1425 = vmatprep.subr.mxu0 0.0
  %1426 = vmatpush1.msra.mxu0 0.0
  %1427 = vmatprep.subr.mxu0 0.0
  %1428 = vmatpush1.msra.mxu0 0.0
  %1429 = vmatprep.subr.mxu0 0.0
  %1430 = vmatpush1.msra.mxu0 0.0
  %1431 = vmatprep.subr.mxu0 0.0
  %1432 = vmatpush1.msra.mxu0 0.0
  %1433 = vmatprep.subr.mxu0 0.0
  %1434 = vmatpush1.msra.mxu0 0.0
  %1435 = vmatprep.subr.mxu0 0.0
  %1436 = vmatpush1.msra.mxu0 0.0
  %1437 = vmatprep.subr.mxu0 0.0
  %1438 = vmatpush1.msra.mxu0 0.0
  %1439 = vmatprep.subr.mxu0 0.0
  %1440 = vmatpush1.msra.mxu0 0.0
  %1441 = vmatprep.mubr.f32.mxu0 0.0
  %1442 = vmatmul.mubr.f32.gmra.mrb[0].mxu0 %v273
  %v1443 = vpop.f32.mrb[0].mxu0
  %v1444 = vadd.f32 %v96, %v1443
  %v1445 = vpop.f32.mrb[0].mxu0
  %1446 = vmatprep.mubr.f32.mxu0 0.0
  %1447 = vmatmul.mubr.f32.gmra.mrb[0].mxu0 %v276
  %v1448 = vpop.f32.mrb[0].mxu0
  %v1449 = vadd.f32 %v101, %v1448
  %v1450 = vpop.f32.mrb[0].mxu0
  %1451 = vmatprep.mubr.f32.mxu0 0.0
  %1452 = vmatmul.mubr.f32.gmra.mrb[0].mxu0 %v279
  %v1453 = vpop.f32.mrb[0].mxu0
  %v1454 = vadd.f32 %v106, %v1453
  %v1455 = vpop.f32.mrb[0].mxu0
  %1456 = vmatprep.mubr.f32.mxu0 0.0
  %1457 = vmatmul.mubr.f32.gmra.mrb[0].mxu0 %v282
  %v1458 = vpop.f32.mrb[0].mxu0
  %v1459 = vadd.f32 %v111, %v1458
  %v1460 = vpop.f32.mrb[0].mxu0
  %1461 = vmatprep.mubr.f32.mxu0 0.0
  %1462 = vmatmul.mubr.f32.gmra.mrb[0].mxu0 %v285
  %v1463 = vpop.f32.mrb[0].mxu0
  %v1464 = vadd.f32 %v116, %v1463
  %v1465 = vpop.f32.mrb[0].mxu0
  %1466 = vmatprep.mubr.f32.mxu0 0.0
  %1467 = vmatmul.mubr.f32.gmra.mrb[0].mxu0 %v288
  %v1468 = vpop.f32.mrb[0].mxu0
  %v1469 = vadd.f32 %v121, %v1468
  %v1470 = vpop.f32.mrb[0].mxu0
  %1471 = vmatprep.mubr.f32.mxu0 0.0
  %1472 = vmatmul.mubr.f32.gmra.mrb[0].mxu0 %v291
  %v1473 = vpop.f32.mrb[0].mxu0
  %v1474 = vadd.f32 %v126, %v1473
  %v1475 = vpop.f32.mrb[0].mxu0
  %1476 = vmatprep.mubr.f32.mxu0 0.0
  %1477 = vmatmul.mubr.f32.gmra.mrb[0].mxu0 %v294
  %v1478 = vpop.f32.mrb[0].mxu0
  %v1479 = vadd.f32 %v131, %v1478
  %v1480 = vpop.f32.mrb[0].mxu0
  %1481 = vmatprep.mubr.f32.mxu0 0.0
  %1482 = vmatmul.mubr.f32.gmra.mrb[0].mxu0 %v297
  %v1483 = vpop.f32.mrb[0].mxu0
  %v1484 = vadd.f32 %v136, %v1483
  %v1485 = vpop.f32.mrb[0].mxu0
  %1486 = vmatprep.mubr.f32.mxu0 0.0
  %1487 = vmatmul.mubr.f32.gmra.mrb[0].mxu0 %v300
  %v1488 = vpop.f32.mrb[0].mxu0
  %v1489 = vadd.f32 %v141, %v1488
  %v1490 = vpop.f32.mrb[0].mxu0
  %1491 = vmatprep.mubr.f32.mxu0 0.0
  %1492 = vmatmul.mubr.f32.gmra.mrb[0].mxu0 %v303
  %v1493 = vpop.f32.mrb[0].mxu0
  %v1494 = vadd.f32 %v146, %v1493
  %v1495 = vpop.f32.mrb[0].mxu0
  %1496 = vmatprep.mubr.f32.mxu0 0.0
  %1497 = vmatmul.mubr.f32.gmra.mrb[0].mxu0 %v306
  %v1498 = vpop.f32.mrb[0].mxu0
  %v1499 = vadd.f32 %v151, %v1498
  %v1500 = vpop.f32.mrb[0].mxu0
  %1501 = vmatprep.mubr.f32.mxu0 0.0
  %1502 = vmatmul.mubr.f32.gmra.mrb[0].mxu0 %v309
  %v1503 = vpop.f32.mrb[0].mxu0
  %v1504 = vadd.f32 %v156, %v1503
  %v1505 = vpop.f32.mrb[0].mxu0
  %1506 = vmatprep.mubr.f32.mxu0 0.0
  %1507 = vmatmul.mubr.f32.gmra.mrb[0].mxu0 %v312
  %v1508 = vpop.f32.mrb[0].mxu0
  %v1509 = vadd.f32 %v161, %v1508
  %v1510 = vpop.f32.mrb[0].mxu0
  %1511 = vmatprep.mubr.f32.mxu0 0.0
  %1512 = vmatmul.mubr.f32.gmra.mrb[0].mxu0 %v315
  %v1513 = vpop.f32.mrb[0].mxu0
  %v1514 = vadd.f32 %v166, %v1513
  %v1515 = vpop.f32.mrb[0].mxu0
  %1516 = vmatprep.mubr.f32.mxu0 0.0
  %1517 = vmatmul.mubr.f32.gmra.mrb[0].mxu0 %v318
  %v1518 = vpop.f32.mrb[0].mxu0
  %v1519 = vadd.f32 %v171, %v1518
  %v1520 = vpop.f32.mrb[0].mxu0
  %1521 = vdwg.mxu0
  %v1522 = vtanh.pop %v391
  %v1523 = vtanh.pop %v396
  %v1524 = vtanh.pop %v401
  %v1525 = vtanh.pop %v406
  %v1526 = vtanh.pop %v427
  %v1527 = vtanh.pop %v432
  %v1528 = vtanh.pop %v437
  %v1529 = vtanh.pop %v442
  %v1530 = vtanh.pop %v447
  %v1531 = vtanh.pop %v452
  %v1532 = vtanh.pop %v457
  %v1533 = vtanh.pop %v462
  %v1534 = vmul.f32 %v1522, 0.5
  %v1535 = vmul.f32 %v1523, 0.5
  %v1536 = vmul.f32 %v1524, 0.5
  %v1537 = vmul.f32 %v1525, 0.5
  %v1538 = vmul.f32 %v1530, 0.5
  %v1539 = vmul.f32 %v1531, 0.5
  %v1540 = vmul.f32 %v1532, 0.5
  %v1541 = vmul.f32 %v1533, 0.5
  %v1542 = vadd.f32 %v1534, 0.5
  %v1543 = vadd.f32 %v1535, 0.5
  %v1544 = vadd.f32 %v1536, 0.5
  %v1545 = vadd.f32 %v1537, 0.5
  %v1546 = vadd.f32 %v1538, 0.5
  %v1547 = vadd.f32 %v1539, 0.5
  %v1548 = vadd.f32 %v1540, 0.5
  %v1549 = vadd.f32 %v1541, 0.5
  %v1550 = vmul.f32 %v1542, %v1526
  %v1551 = vmul.f32 %v1543, %v1527
  %v1552 = vmul.f32 %v1544, %v1528
  %v1553 = vmul.f32 %v1545, %v1529
  %v1554 = vtanh.pop %v1550
  %v1555 = vtanh.pop %v1551
  %v1556 = vtanh.pop %v1552
  %v1557 = vtanh.pop %v1553
  %v1558 = vmul.f32 %v1546, %v1554
  %v1559 = vmul.f32 %v1547, %v1555
  %v1560 = vmul.f32 %v1548, %v1556
  %v1561 = vmul.f32 %v1549, %v1557
  %v1562 = vpack.c.bf16 %v1559, %v1558
  %v1563 = vpack.c.bf16 %v1561, %v1560
  %v1564 = vpack.c.bf16 0.0, 0.0
  %v1597 = vunpack.c.l.b16 %v45
  %v1598 = vunpack.c.l.b16 %v46
  %v1599 = vunpack.c.l.b16 %v47
  %v1600 = vunpack.c.l.b16 %v48
  %v1601 = vunpack.c.l.b16 %v49
  %v1602 = vunpack.c.l.b16 %v50
  %v1603 = vunpack.c.l.b16 %v51
  %v1604 = vunpack.c.l.b16 %v52
  %v1605 = vunpack.c.l.b16 %v53
  %v1606 = vunpack.c.l.b16 %v54
  %v1607 = vunpack.c.l.b16 %v55
  %v1608 = vunpack.c.l.b16 %v56
  %v1609 = vunpack.c.l.b16 %v57
  %v1610 = vunpack.c.l.b16 %v58
  %v1611 = vunpack.c.l.b16 %v59
  %v1612 = vunpack.c.l.b16 %v60
  %v1613 = vunpack.c.l.b16 %v61
  %v1614 = vunpack.c.l.b16 %v62
  %v1615 = vunpack.c.l.b16 %v63
  %v1616 = vunpack.c.l.b16 %v64
  %v1617 = vunpack.c.l.b16 %v65
  %v1618 = vunpack.c.l.b16 %v66
  %v1619 = vunpack.c.l.b16 %v67
  %v1620 = vunpack.c.l.b16 %v68
  %v1621 = vunpack.c.l.b16 %v69
  %v1622 = vunpack.c.l.b16 %v70
  %v1623 = vunpack.c.l.b16 %v71
  %v1624 = vunpack.c.l.b16 %v72
  %v1625 = vunpack.c.l.b16 %v73
  %v1626 = vunpack.c.l.b16 %v74
  %v1627 = vunpack.c.l.b16 %v75
  %v1628 = vunpack.c.l.b16 %v76
  %v1629 = vpack.c.b16 %v1598, %v1597
  %v1630 = vpack.c.b16 %v1600, %v1599
  %v1631 = vpack.c.b16 %v1602, %v1601
  %v1632 = vpack.c.b16 %v1604, %v1603
  %v1633 = vpack.c.b16 %v1606, %v1605
  %v1634 = vpack.c.b16 %v1608, %v1607
  %v1635 = vpack.c.b16 %v1610, %v1609
  %v1636 = vpack.c.b16 %v1612, %v1611
  %v1637 = vpack.c.b16 %v1614, %v1613
  %v1638 = vpack.c.b16 %v1616, %v1615
  %v1639 = vpack.c.b16 %v1618, %v1617
  %v1640 = vpack.c.b16 %v1620, %v1619
  %v1641 = vpack.c.b16 %v1622, %v1621
  %v1642 = vpack.c.b16 %v1624, %v1623
  %v1643 = vpack.c.b16 %v1626, %v1625
  %v1644 = vpack.c.b16 %v1628, %v1627
  %vm1645 = vcmask 523264
  %v1647 = vsel %vm1645, %v1629, 0
  %v1650 = vsel %vm1645, %v1630, 0
  %v1653 = vsel %vm1645, %v1631, 0
  %v1656 = vsel %vm1645, %v1632, 0
  %v1659 = vsel %vm1645, %v1633, 0
  %v1662 = vsel %vm1645, %v1634, 0
  %v1665 = vsel %vm1645, %v1635, 0
  %v1668 = vsel %vm1645, %v1636, 0
  %v1671 = vsel %vm1645, %v1637, 0
  %v1674 = vsel %vm1645, %v1638, 0
  %v1677 = vsel %vm1645, %v1639, 0
  %v1680 = vsel %vm1645, %v1640, 0
  %v1683 = vsel %vm1645, %v1641, 0
  %v1686 = vsel %vm1645, %v1642, 0
  %v1689 = vsel %vm1645, %v1643, 0
  %v1692 = vsel %vm1645, %v1644, 0
  %1694 = vmatprep.subr.bf16.mxu0 0
  %1695 = vmatpush1.bf16.msra.mxu0 %v1562
  %1696 = vmatprep.subr.bf16.mxu0 0
  %1697 = vmatpush1.bf16.msra.mxu0 %v1563
  %1698 = vmatprep.subr.bf16.mxu0 0
  %1699 = vmatpush1.bf16.msra.mxu0 %v1564
  %1700 = vmatprep.subr.bf16.mxu0 0
  %1701 = vmatpush1.bf16.msra.mxu0 %v1564
  %1702 = vmatprep.subr.bf16.mxu0 0
  %1703 = vmatpush1.bf16.msra.mxu0 0
  %1704 = vmatprep.subr.bf16.mxu0 0
  %1705 = vmatpush1.bf16.msra.mxu0 0
  %1706 = vmatprep.subr.bf16.mxu0 0
  %1707 = vmatpush1.bf16.msra.mxu0 0
  %1708 = vmatprep.subr.bf16.mxu0 0
  %1709 = vmatpush1.bf16.msra.mxu0 0
  %1710 = vmatprep.subr.bf16.mxu0 0
  %1711 = vmatpush1.bf16.msra.mxu0 0
  %1712 = vmatprep.subr.bf16.mxu0 0
  %1713 = vmatpush1.bf16.msra.mxu0 0
  %1714 = vmatprep.subr.bf16.mxu0 0
  %1715 = vmatpush1.bf16.msra.mxu0 0
  %1716 = vmatprep.subr.bf16.mxu0 0
  %1717 = vmatpush1.bf16.msra.mxu0 0
  %1718 = vmatprep.subr.bf16.mxu0 0
  %1719 = vmatpush1.bf16.msra.mxu0 0
  %1720 = vmatprep.subr.bf16.mxu0 0
  %1721 = vmatpush1.bf16.msra.mxu0 0
  %1722 = vmatprep.subr.bf16.mxu0 0
  %1723 = vmatpush1.bf16.msra.mxu0 0
  %1724 = vmatprep.subr.bf16.mxu0 0
  %1725 = vmatpush1.bf16.msra.mxu0 0
  %1726 = vmatprep.mubr.bf16.mxu0 0
  %1727 = vmatmul.mubr.bf16.gmra.mrb[0].mxu0 %v1647
  %v1728 = vpop.f32.mrb[0].mxu0
  %v1729 = vadd.f32 %v538, %v1728
  %v1730 = vpop.f32.mrb[0].mxu0
  %v1731 = vpop.f32.mrb[0].mxu0
  %v1732 = vadd.f32 %v543, %v1731
  %v1733 = vpop.f32.mrb[0].mxu0
  %1734 = vmatprep.mubr.bf16.mxu0 0
  %1735 = vmatmul.mubr.bf16.gmra.mrb[0].mxu0 %v1650
  %v1736 = vpop.f32.mrb[0].mxu0
  %v1737 = vadd.f32 %v548, %v1736
  %v1738 = vpop.f32.mrb[0].mxu0
  %v1739 = vpop.f32.mrb[0].mxu0
  %v1740 = vadd.f32 %v553, %v1739
  %v1741 = vpop.f32.mrb[0].mxu0
  %1742 = vmatprep.mubr.bf16.mxu0 0
  %1743 = vmatmul.mubr.bf16.gmra.mrb[0].mxu0 %v1653
  %v1744 = vpop.f32.mrb[0].mxu0
  %v1745 = vadd.f32 %v558, %v1744
  %v1746 = vpop.f32.mrb[0].mxu0
  %v1747 = vpop.f32.mrb[0].mxu0
  %v1748 = vadd.f32 %v563, %v1747
  %v1749 = vpop.f32.mrb[0].mxu0
  %1750 = vmatprep.mubr.bf16.mxu0 0
  %1751 = vmatmul.mubr.bf16.gmra.mrb[0].mxu0 %v1656
  %v1752 = vpop.f32.mrb[0].mxu0
  %v1753 = vadd.f32 %v568, %v1752
  %v1754 = vpop.f32.mrb[0].mxu0
  %v1755 = vpop.f32.mrb[0].mxu0
  %v1756 = vadd.f32 %v573, %v1755
  %v1757 = vpop.f32.mrb[0].mxu0
  %1758 = vmatprep.mubr.bf16.mxu0 0
  %1759 = vmatmul.mubr.bf16.gmra.mrb[0].mxu0 %v1659
  %v1760 = vpop.f32.mrb[0].mxu0
  %v1761 = vadd.f32 %v578, %v1760
  %v1762 = vpop.f32.mrb[0].mxu0
  %v1763 = vpop.f32.mrb[0].mxu0
  %v1764 = vadd.f32 %v583, %v1763
  %v1765 = vpop.f32.mrb[0].mxu0
  %1766 = vmatprep.mubr.bf16.mxu0 0
  %1767 = vmatmul.mubr.bf16.gmra.mrb[0].mxu0 %v1662
  %v1768 = vpop.f32.mrb[0].mxu0
  %v1769 = vadd.f32 %v588, %v1768
  %v1770 = vpop.f32.mrb[0].mxu0
  %v1771 = vpop.f32.mrb[0].mxu0
  %v1772 = vadd.f32 %v593, %v1771
  %v1773 = vpop.f32.mrb[0].mxu0
  %1774 = vmatprep.mubr.bf16.mxu0 0
  %1775 = vmatmul.mubr.bf16.gmra.mrb[0].mxu0 %v1665
  %v1776 = vpop.f32.mrb[0].mxu0
  %v1777 = vadd.f32 %v598, %v1776
  %v1778 = vpop.f32.mrb[0].mxu0
  %v1779 = vpop.f32.mrb[0].mxu0
  %v1780 = vadd.f32 %v603, %v1779
  %v1781 = vpop.f32.mrb[0].mxu0
  %1782 = vmatprep.mubr.bf16.mxu0 0
  %1783 = vmatmul.mubr.bf16.gmra.mrb[0].mxu0 %v1668
  %v1784 = vpop.f32.mrb[0].mxu0
  %v1785 = vadd.f32 %v608, %v1784
  %v1786 = vpop.f32.mrb[0].mxu0
  %v1787 = vpop.f32.mrb[0].mxu0
  %v1788 = vadd.f32 %v613, %v1787
  %v1789 = vpop.f32.mrb[0].mxu0
  %1790 = vmatprep.mubr.bf16.mxu0 0
  %1791 = vmatmul.mubr.bf16.gmra.mrb[0].mxu0 %v1671
  %v1792 = vpop.f32.mrb[0].mxu0
  %v1793 = vadd.f32 %v192, %v1792
  %v1794 = vpop.f32.mrb[0].mxu0
  %v1795 = vpop.f32.mrb[0].mxu0
  %v1796 = vadd.f32 %v197, %v1795
  %v1797 = vpop.f32.mrb[0].mxu0
  %1798 = vmatprep.mubr.bf16.mxu0 0
  %1799 = vmatmul.mubr.bf16.gmra.mrb[0].mxu0 %v1674
  %v1800 = vpop.f32.mrb[0].mxu0
  %v1801 = vadd.f32 %v202, %v1800
  %v1802 = vpop.f32.mrb[0].mxu0
  %v1803 = vpop.f32.mrb[0].mxu0
  %v1804 = vadd.f32 %v207, %v1803
  %v1805 = vpop.f32.mrb[0].mxu0
  %1806 = vmatprep.mubr.bf16.mxu0 0
  %1807 = vmatmul.mubr.bf16.gmra.mrb[0].mxu0 %v1677
  %v1808 = vpop.f32.mrb[0].mxu0
  %v1809 = vadd.f32 %v212, %v1808
  %v1810 = vpop.f32.mrb[0].mxu0
  %v1811 = vpop.f32.mrb[0].mxu0
  %v1812 = vadd.f32 %v217, %v1811
  %v1813 = vpop.f32.mrb[0].mxu0
  %1814 = vmatprep.mubr.bf16.mxu0 0
  %1815 = vmatmul.mubr.bf16.gmra.mrb[0].mxu0 %v1680
  %v1816 = vpop.f32.mrb[0].mxu0
  %v1817 = vadd.f32 %v222, %v1816
  %v1818 = vpop.f32.mrb[0].mxu0
  %v1819 = vpop.f32.mrb[0].mxu0
  %v1820 = vadd.f32 %v227, %v1819
  %v1821 = vpop.f32.mrb[0].mxu0
  %1822 = vmatprep.mubr.bf16.mxu0 0
  %1823 = vmatmul.mubr.bf16.gmra.mrb[0].mxu0 %v1683
  %v1824 = vpop.f32.mrb[0].mxu0
  %v1825 = vadd.f32 %v232, %v1824
  %v1826 = vpop.f32.mrb[0].mxu0
  %v1827 = vpop.f32.mrb[0].mxu0
  %v1828 = vadd.f32 %v237, %v1827
  %v1829 = vpop.f32.mrb[0].mxu0
  %1830 = vmatprep.mubr.bf16.mxu0 0
  %1831 = vmatmul.mubr.bf16.gmra.mrb[0].mxu0 %v1686
  %v1832 = vpop.f32.mrb[0].mxu0
  %v1833 = vadd.f32 %v242, %v1832
  %v1834 = vpop.f32.mrb[0].mxu0
  %v1835 = vpop.f32.mrb[0].mxu0
  %v1836 = vadd.f32 %v247, %v1835
  %v1837 = vpop.f32.mrb[0].mxu0
  %1838 = vmatprep.mubr.bf16.mxu0 0
  %1839 = vmatmul.mubr.bf16.gmra.mrb[0].mxu0 %v1689
  %v1840 = vpop.f32.mrb[0].mxu0
  %v1841 = vadd.f32 %v252, %v1840
  %v1842 = vpop.f32.mrb[0].mxu0
  %v1843 = vpop.f32.mrb[0].mxu0
  %v1844 = vadd.f32 %v257, %v1843
  %v1845 = vpop.f32.mrb[0].mxu0
  %1846 = vmatprep.mubr.bf16.mxu0 0
  %1847 = vmatmul.mubr.bf16.gmra.mrb[0].mxu0 %v1692
  %v1848 = vpop.f32.mrb[0].mxu0
  %v1849 = vadd.f32 %v262, %v1848
  %v1850 = vpop.f32.mrb[0].mxu0
  %v1851 = vpop.f32.mrb[0].mxu0
  %v1852 = vadd.f32 %v267, %v1851
  %v1853 = vpop.f32.mrb[0].mxu0
  %1854 = vdwg.mxu0
  %v1855 = vtanh.pop %v1729
  %v1856 = vtanh.pop %v1732
  %v1857 = vtanh.pop %v1737
  %v1858 = vtanh.pop %v1740
  %v1859 = vtanh.pop %v1745
  %v1860 = vtanh.pop %v1748
  %v1861 = vtanh.pop %v1753
  %v1862 = vtanh.pop %v1756
  %v1863 = vtanh.pop %v1761
  %v1864 = vtanh.pop %v1764
  %v1865 = vtanh.pop %v1769
  %v1866 = vtanh.pop %v1772
  %v1867 = vtanh.pop %v1777
  %v1868 = vtanh.pop %v1780
  %v1869 = vtanh.pop %v1785
  %v1870 = vtanh.pop %v1788
  %v1871 = vtanh.pop %v1793
  %v1872 = vtanh.pop %v1796
  %v1873 = vtanh.pop %v1801
  %v1874 = vtanh.pop %v1804
  %v1875 = vtanh.pop %v1809
  %v1876 = vtanh.pop %v1812
  %v1877 = vtanh.pop %v1817
  %v1878 = vtanh.pop %v1820
  %v1879 = vtanh.pop %v1825
  %v1880 = vtanh.pop %v1828
  %v1881 = vtanh.pop %v1833
  %v1882 = vtanh.pop %v1836
  %v1883 = vtanh.pop %v1841
  %v1884 = vtanh.pop %v1844
  %v1885 = vtanh.pop %v1849
  %v1886 = vtanh.pop %v1852
  %v1887 = vmul.f32 %v1855, 0.5
  %v1888 = vmul.f32 %v1856, 0.5
  %v1889 = vmul.f32 %v1857, 0.5
  %v1890 = vmul.f32 %v1858, 0.5
  %v1891 = vmul.f32 %v1859, 0.5
  %v1892 = vmul.f32 %v1860, 0.5
  %v1893 = vmul.f32 %v1861, 0.5
  %v1894 = vmul.f32 %v1862, 0.5
  %v1895 = vmul.f32 %v1867, 0.5
  %v1896 = vmul.f32 %v1868, 0.5
  %v1897 = vmul.f32 %v1869, 0.5
  %v1898 = vmul.f32 %v1870, 0.5
  %v1899 = vmul.f32 %v1871, 0.5
  %v1900 = vmul.f32 %v1872, 0.5
  %v1901 = vmul.f32 %v1873, 0.5
  %v1902 = vmul.f32 %v1874, 0.5
  %v1903 = vmul.f32 %v1875, 0.5
  %v1904 = vmul.f32 %v1876, 0.5
  %v1905 = vmul.f32 %v1877, 0.5
  %v1906 = vmul.f32 %v1878, 0.5
  %v1907 = vmul.f32 %v1883, 0.5
  %v1908 = vmul.f32 %v1884, 0.5
  %v1909 = vmul.f32 %v1885, 0.5
  %v1910 = vmul.f32 %v1886, 0.5
  %v1911 = vadd.f32 %v1887, 0.5
  %v1912 = vadd.f32 %v1888, 0.5
  %v1913 = vadd.f32 %v1889, 0.5
  %v1914 = vadd.f32 %v1890, 0.5
  %v1915 = vadd.f32 %v1891, 0.5
  %v1916 = vadd.f32 %v1892, 0.5
  %v1917 = vadd.f32 %v1893, 0.5
  %v1918 = vadd.f32 %v1894, 0.5
  %v1919 = vadd.f32 %v1895, 0.5
  %v1920 = vadd.f32 %v1896, 0.5
  %v1921 = vadd.f32 %v1897, 0.5
  %v1922 = vadd.f32 %v1898, 0.5
  %v1923 = vadd.f32 %v1899, 0.5
  %v1924 = vadd.f32 %v1900, 0.5
  %v1925 = vadd.f32 %v1901, 0.5
  %v1926 = vadd.f32 %v1902, 0.5
  %v1927 = vadd.f32 %v1903, 0.5
  %v1928 = vadd.f32 %v1904, 0.5
  %v1929 = vadd.f32 %v1905, 0.5
  %v1930 = vadd.f32 %v1906, 0.5
  %v1931 = vadd.f32 %v1907, 0.5
  %v1932 = vadd.f32 %v1908, 0.5
  %v1933 = vadd.f32 %v1909, 0.5
  %v1934 = vadd.f32 %v1910, 0.5
  %v1935 = vmul.f32 %v1927, 0.0
  %v1936 = vmul.f32 %v1928, 0.0
  %v1937 = vmul.f32 %v1929, 0.0
  %v1938 = vmul.f32 %v1930, 0.0
  %v1939 = vmul.f32 %v1923, %v1879
  %v1940 = vmul.f32 %v1924, %v1880
  %v1941 = vmul.f32 %v1925, %v1881
  %v1942 = vmul.f32 %v1926, %v1882
  %v1943 = vadd.f32 %v1935, %v1939
  %v1944 = vadd.f32 %v1936, %v1940
  %v1945 = vadd.f32 %v1937, %v1941
  %v1946 = vadd.f32 %v1938, %v1942
  %v1947 = vmul.f32 %v1915, %v1550
  %v1948 = vmul.f32 %v1916, %v1551
  %v1949 = vmul.f32 %v1917, %v1552
  %v1950 = vmul.f32 %v1918, %v1553
  %v1951 = vmul.f32 %v1911, %v1863
  %v1952 = vmul.f32 %v1912, %v1864
  %v1953 = vmul.f32 %v1913, %v1865
  %v1954 = vmul.f32 %v1914, %v1866
  %v1955 = vadd.f32 %v1947, %v1951
  %v1956 = vadd.f32 %v1948, %v1952
  %v1957 = vadd.f32 %v1949, %v1953
  %v1958 = vadd.f32 %v1950, %v1954
  %v1959 = vtanh.pop %v1955
  %v1960 = vtanh.pop %v1956
  %v1961 = vtanh.pop %v1957
  %v1962 = vtanh.pop %v1958
  %v1963 = vtanh.pop %v1943
  %v1964 = vtanh.pop %v1944
  %v1965 = vtanh.pop %v1945
  %v1966 = vtanh.pop %v1946
  %v1967 = vmul.f32 %v1919, %v1959
  %v1968 = vmul.f32 %v1920, %v1960
  %v1969 = vmul.f32 %v1921, %v1961
  %v1970 = vmul.f32 %v1922, %v1962
  %v1971 = vmul.f32 %v1931, %v1963
  %v1972 = vmul.f32 %v1932, %v1964
  %v1973 = vmul.f32 %v1933, %v1965
  %v1974 = vmul.f32 %v1934, %v1966
  %v1975 = vpack.c.bf16 %v1968, %v1967
  %v1976 = vpack.c.bf16 %v1970, %v1969
  %v1977 = vpack.c.bf16 %v1972, %v1971
  %v1978 = vpack.c.bf16 %v1974, %v1973
  %1979 = vmatprep.subr.bf16.mxu0 0
  %1980 = vmatpush1.bf16.msra.mxu0 %v1975
  %1981 = vmatprep.subr.bf16.mxu0 0
  %1982 = vmatpush1.bf16.msra.mxu0 %v1976
  %1983 = vmatprep.subr.bf16.mxu0 0
  %1984 = vmatpush1.bf16.msra.mxu0 %v1977
  %1985 = vmatprep.subr.bf16.mxu0 0
  %1986 = vmatpush1.bf16.msra.mxu0 %v1978
  %1987 = vmatprep.subr.bf16.mxu0 0
  %1988 = vmatpush1.bf16.msra.mxu0 0
  %1989 = vmatprep.subr.bf16.mxu0 0
  %1990 = vmatpush1.bf16.msra.mxu0 0
  %1991 = vmatprep.subr.bf16.mxu0 0
  %1992 = vmatpush1.bf16.msra.mxu0 0
  %1993 = vmatprep.subr.bf16.mxu0 0
  %1994 = vmatpush1.bf16.msra.mxu0 0
  %1995 = vmatprep.subr.bf16.mxu0 0
  %1996 = vmatpush1.bf16.msra.mxu0 0
  %1997 = vmatprep.subr.bf16.mxu0 0
  %1998 = vmatpush1.bf16.msra.mxu0 0
  %1999 = vmatprep.subr.bf16.mxu0 0
  %2000 = vmatpush1.bf16.msra.mxu0 0
  %2001 = vmatprep.subr.bf16.mxu0 0
  %2002 = vmatpush1.bf16.msra.mxu0 0
  %2003 = vmatprep.subr.bf16.mxu0 0
  %2004 = vmatpush1.bf16.msra.mxu0 0
  %2005 = vmatprep.subr.bf16.mxu0 0
  %2006 = vmatpush1.bf16.msra.mxu0 0
  %2007 = vmatprep.subr.bf16.mxu0 0
  %2008 = vmatpush1.bf16.msra.mxu0 0
  %2009 = vmatprep.subr.bf16.mxu0 0
  %2010 = vmatpush1.bf16.msra.mxu0 0
  %2011 = vmatprep.mubr.bf16.mxu0 0
  %2012 = vmatmul.mubr.bf16.gmra.mrb[0].mxu0 %v1647
  %v2013 = vpop.f32.mrb[0].mxu0
  %v2014 = vadd.f32 %v689, %v2013
  %v2015 = vpop.f32.mrb[0].mxu0
  %v2016 = vpop.f32.mrb[0].mxu0
  %v2017 = vadd.f32 %v694, %v2016
  %v2018 = vpop.f32.mrb[0].mxu0
  %2019 = vmatprep.mubr.bf16.mxu0 0
  %2020 = vmatmul.mubr.bf16.gmra.mrb[0].mxu0 %v1650
  %v2021 = vpop.f32.mrb[0].mxu0
  %v2022 = vadd.f32 %v699, %v2021
  %v2023 = vpop.f32.mrb[0].mxu0
  %v2024 = vpop.f32.mrb[0].mxu0
  %v2025 = vadd.f32 %v704, %v2024
  %v2026 = vpop.f32.mrb[0].mxu0
  %2027 = vmatprep.mubr.bf16.mxu0 0
  %2028 = vmatmul.mubr.bf16.gmra.mrb[0].mxu0 %v1653
  %v2029 = vpop.f32.mrb[0].mxu0
  %v2030 = vadd.f32 %v709, %v2029
  %v2031 = vpop.f32.mrb[0].mxu0
  %v2032 = vpop.f32.mrb[0].mxu0
  %v2033 = vadd.f32 %v714, %v2032
  %v2034 = vpop.f32.mrb[0].mxu0
  %2035 = vmatprep.mubr.bf16.mxu0 0
  %2036 = vmatmul.mubr.bf16.gmra.mrb[0].mxu0 %v1656
  %v2037 = vpop.f32.mrb[0].mxu0
  %v2038 = vadd.f32 %v719, %v2037
  %v2039 = vpop.f32.mrb[0].mxu0
  %v2040 = vpop.f32.mrb[0].mxu0
  %v2041 = vadd.f32 %v724, %v2040
  %v2042 = vpop.f32.mrb[0].mxu0
  %2043 = vmatprep.mubr.bf16.mxu0 0
  %2044 = vmatmul.mubr.bf16.gmra.mrb[0].mxu0 %v1659
  %v2045 = vpop.f32.mrb[0].mxu0
  %v2046 = vadd.f32 %v729, %v2045
  %v2047 = vpop.f32.mrb[0].mxu0
  %v2048 = vpop.f32.mrb[0].mxu0
  %v2049 = vadd.f32 %v734, %v2048
  %v2050 = vpop.f32.mrb[0].mxu0
  %2051 = vmatprep.mubr.bf16.mxu0 0
  %2052 = vmatmul.mubr.bf16.gmra.mrb[0].mxu0 %v1662
  %v2053 = vpop.f32.mrb[0].mxu0
  %v2054 = vadd.f32 %v739, %v2053
  %v2055 = vpop.f32.mrb[0].mxu0
  %v2056 = vpop.f32.mrb[0].mxu0
  %v2057 = vadd.f32 %v744, %v2056
  %v2058 = vpop.f32.mrb[0].mxu0
  %2059 = vmatprep.mubr.bf16.mxu0 0
  %2060 = vmatmul.mubr.bf16.gmra.mrb[0].mxu0 %v1665
  %v2061 = vpop.f32.mrb[0].mxu0
  %v2062 = vadd.f32 %v749, %v2061
  %v2063 = vpop.f32.mrb[0].mxu0
  %v2064 = vpop.f32.mrb[0].mxu0
  %v2065 = vadd.f32 %v754, %v2064
  %v2066 = vpop.f32.mrb[0].mxu0
  %2067 = vmatprep.mubr.bf16.mxu0 0
  %2068 = vmatmul.mubr.bf16.gmra.mrb[0].mxu0 %v1668
  %v2069 = vpop.f32.mrb[0].mxu0
  %v2070 = vadd.f32 %v759, %v2069
  %v2071 = vpop.f32.mrb[0].mxu0
  %v2072 = vpop.f32.mrb[0].mxu0
  %v2073 = vadd.f32 %v764, %v2072
  %v2074 = vpop.f32.mrb[0].mxu0
  %2075 = vmatprep.mubr.bf16.mxu0 0
  %2076 = vmatmul.mubr.bf16.gmra.mrb[0].mxu0 %v1671
  %v2077 = vpop.f32.mrb[0].mxu0
  %v2078 = vadd.f32 %v192, %v2077
  %v2079 = vpop.f32.mrb[0].mxu0
  %v2080 = vpop.f32.mrb[0].mxu0
  %v2081 = vadd.f32 %v197, %v2080
  %v2082 = vpop.f32.mrb[0].mxu0
  %2083 = vmatprep.mubr.bf16.mxu0 0
  %2084 = vmatmul.mubr.bf16.gmra.mrb[0].mxu0 %v1674
  %v2085 = vpop.f32.mrb[0].mxu0
  %v2086 = vadd.f32 %v202, %v2085
  %v2087 = vpop.f32.mrb[0].mxu0
  %v2088 = vpop.f32.mrb[0].mxu0
  %v2089 = vadd.f32 %v207, %v2088
  %v2090 = vpop.f32.mrb[0].mxu0
  %2091 = vmatprep.mubr.bf16.mxu0 0
  %2092 = vmatmul.mubr.bf16.gmra.mrb[0].mxu0 %v1677
  %v2093 = vpop.f32.mrb[0].mxu0
  %v2094 = vadd.f32 %v212, %v2093
  %v2095 = vpop.f32.mrb[0].mxu0
  %v2096 = vpop.f32.mrb[0].mxu0
  %v2097 = vadd.f32 %v217, %v2096
  %v2098 = vpop.f32.mrb[0].mxu0
  %2099 = vmatprep.mubr.bf16.mxu0 0
  %2100 = vmatmul.mubr.bf16.gmra.mrb[0].mxu0 %v1680
  %v2101 = vpop.f32.mrb[0].mxu0
  %v2102 = vadd.f32 %v222, %v2101
  %v2103 = vpop.f32.mrb[0].mxu0
  %v2104 = vpop.f32.mrb[0].mxu0
  %v2105 = vadd.f32 %v227, %v2104
  %v2106 = vpop.f32.mrb[0].mxu0
  %2107 = vmatprep.mubr.bf16.mxu0 0
  %2108 = vmatmul.mubr.bf16.gmra.mrb[0].mxu0 %v1683
  %v2109 = vpop.f32.mrb[0].mxu0
  %v2110 = vadd.f32 %v232, %v2109
  %v2111 = vpop.f32.mrb[0].mxu0
  %v2112 = vpop.f32.mrb[0].mxu0
  %v2113 = vadd.f32 %v237, %v2112
  %v2114 = vpop.f32.mrb[0].mxu0
  %2115 = vmatprep.mubr.bf16.mxu0 0
  %2116 = vmatmul.mubr.bf16.gmra.mrb[0].mxu0 %v1686
  %v2117 = vpop.f32.mrb[0].mxu0
  %v2118 = vadd.f32 %v242, %v2117
  %v2119 = vpop.f32.mrb[0].mxu0
  %v2120 = vpop.f32.mrb[0].mxu0
  %v2121 = vadd.f32 %v247, %v2120
  %v2122 = vpop.f32.mrb[0].mxu0
  %2123 = vmatprep.mubr.bf16.mxu0 0
  %2124 = vmatmul.mubr.bf16.gmra.mrb[0].mxu0 %v1689
  %v2125 = vpop.f32.mrb[0].mxu0
  %v2126 = vadd.f32 %v252, %v2125
  %v2127 = vpop.f32.mrb[0].mxu0
  %v2128 = vpop.f32.mrb[0].mxu0
  %v2129 = vadd.f32 %v257, %v2128
  %v2130 = vpop.f32.mrb[0].mxu0
  %2131 = vmatprep.mubr.bf16.mxu0 0
  %2132 = vmatmul.mubr.bf16.gmra.mrb[0].mxu0 %v1692
  %v2133 = vpop.f32.mrb[0].mxu0
  %v2134 = vadd.f32 %v262, %v2133
  %v2135 = vpop.f32.mrb[0].mxu0
  %v2136 = vpop.f32.mrb[0].mxu0
  %v2137 = vadd.f32 %v267, %v2136
  %v2138 = vpop.f32.mrb[0].mxu0
  %2139 = vdwg.mxu0
  %v2140 = vtanh.pop %v2014
  %v2141 = vtanh.pop %v2017
  %v2142 = vtanh.pop %v2022
  %v2143 = vtanh.pop %v2025
  %v2144 = vtanh.pop %v2030
  %v2145 = vtanh.pop %v2033
  %v2146 = vtanh.pop %v2038
  %v2147 = vtanh.pop %v2041
  %v2148 = vtanh.pop %v2046
  %v2149 = vtanh.pop %v2049
  %v2150 = vtanh.pop %v2054
  %v2151 = vtanh.pop %v2057
  %v2152 = vtanh.pop %v2062
  %v2153 = vtanh.pop %v2065
  %v2154 = vtanh.pop %v2070
  %v2155 = vtanh.pop %v2073
  %v2156 = vtanh.pop %v2078
  %v2157 = vtanh.pop %v2081
  %v2158 = vtanh.pop %v2086
  %v2159 = vtanh.pop %v2089
  %v2160 = vtanh.pop %v2094
  %v2161 = vtanh.pop %v2097
  %v2162 = vtanh.pop %v2102
  %v2163 = vtanh.pop %v2105
  %v2164 = vtanh.pop %v2110
  %v2165 = vtanh.pop %v2113
  %v2166 = vtanh.pop %v2118
  %v2167 = vtanh.pop %v2121
  %v2168 = vtanh.pop %v2126
  %v2169 = vtanh.pop %v2129
  %v2170 = vtanh.pop %v2134
  %v2171 = vtanh.pop %v2137
  %v2172 = vmul.f32 %v2140, 0.5
  %v2173 = vmul.f32 %v2141, 0.5
  %v2174 = vmul.f32 %v2142, 0.5
  %v2175 = vmul.f32 %v2143, 0.5
  %v2176 = vmul.f32 %v2144, 0.5
  %v2177 = vmul.f32 %v2145, 0.5
  %v2178 = vmul.f32 %v2146, 0.5
  %v2179 = vmul.f32 %v2147, 0.5
  %v2180 = vmul.f32 %v2152, 0.5
  %v2181 = vmul.f32 %v2153, 0.5
  %v2182 = vmul.f32 %v2154, 0.5
  %v2183 = vmul.f32 %v2155, 0.5
  %v2184 = vmul.f32 %v2156, 0.5
  %v2185 = vmul.f32 %v2157, 0.5
  %v2186 = vmul.f32 %v2158, 0.5
  %v2187 = vmul.f32 %v2159, 0.5
  %v2188 = vmul.f32 %v2160, 0.5
  %v2189 = vmul.f32 %v2161, 0.5
  %v2190 = vmul.f32 %v2162, 0.5
  %v2191 = vmul.f32 %v2163, 0.5
  %v2192 = vmul.f32 %v2168, 0.5
  %v2193 = vmul.f32 %v2169, 0.5
  %v2194 = vmul.f32 %v2170, 0.5
  %v2195 = vmul.f32 %v2171, 0.5
  %v2196 = vadd.f32 %v2172, 0.5
  %v2197 = vadd.f32 %v2173, 0.5
  %v2198 = vadd.f32 %v2174, 0.5
  %v2199 = vadd.f32 %v2175, 0.5
  %v2200 = vadd.f32 %v2176, 0.5
  %v2201 = vadd.f32 %v2177, 0.5
  %v2202 = vadd.f32 %v2178, 0.5
  %v2203 = vadd.f32 %v2179, 0.5
  %v2204 = vadd.f32 %v2180, 0.5
  %v2205 = vadd.f32 %v2181, 0.5
  %v2206 = vadd.f32 %v2182, 0.5
  %v2207 = vadd.f32 %v2183, 0.5
  %v2208 = vadd.f32 %v2184, 0.5
  %v2209 = vadd.f32 %v2185, 0.5
  %v2210 = vadd.f32 %v2186, 0.5
  %v2211 = vadd.f32 %v2187, 0.5
  %v2212 = vadd.f32 %v2188, 0.5
  %v2213 = vadd.f32 %v2189, 0.5
  %v2214 = vadd.f32 %v2190, 0.5
  %v2215 = vadd.f32 %v2191, 0.5
  %v2216 = vadd.f32 %v2192, 0.5
  %v2217 = vadd.f32 %v2193, 0.5
  %v2218 = vadd.f32 %v2194, 0.5
  %v2219 = vadd.f32 %v2195, 0.5
  %v2220 = vmul.f32 %v2212, %v1943
  %v2221 = vmul.f32 %v2213, %v1944
  %v2222 = vmul.f32 %v2214, %v1945
  %v2223 = vmul.f32 %v2215, %v1946
  %v2224 = vmul.f32 %v2208, %v2164
  %v2225 = vmul.f32 %v2209, %v2165
  %v2226 = vmul.f32 %v2210, %v2166
  %v2227 = vmul.f32 %v2211, %v2167
  %v2228 = vadd.f32 %v2220, %v2224
  %v2229 = vadd.f32 %v2221, %v2225
  %v2230 = vadd.f32 %v2222, %v2226
  %v2231 = vadd.f32 %v2223, %v2227
  %v2232 = vmul.f32 %v2200, %v1955
  %v2233 = vmul.f32 %v2201, %v1956
  %v2234 = vmul.f32 %v2202, %v1957
  %v2235 = vmul.f32 %v2203, %v1958
  %v2236 = vmul.f32 %v2196, %v2148
  %v2237 = vmul.f32 %v2197, %v2149
  %v2238 = vmul.f32 %v2198, %v2150
  %v2239 = vmul.f32 %v2199, %v2151
  %v2240 = vadd.f32 %v2232, %v2236
  %v2241 = vadd.f32 %v2233, %v2237
  %v2242 = vadd.f32 %v2234, %v2238
  %v2243 = vadd.f32 %v2235, %v2239
  %v2244 = vtanh.pop %v2240
  %v2245 = vtanh.pop %v2241
  %v2246 = vtanh.pop %v2242
  %v2247 = vtanh.pop %v2243
  %v2248 = vtanh.pop %v2228
  %v2249 = vtanh.pop %v2229
  %v2250 = vtanh.pop %v2230
  %v2251 = vtanh.pop %v2231
  %v2252 = vmul.f32 %v2204, %v2244
  %v2253 = vmul.f32 %v2205, %v2245
  %v2254 = vmul.f32 %v2206, %v2246
  %v2255 = vmul.f32 %v2207, %v2247
  %v2256 = vmul.f32 %v2216, %v2248
  %v2257 = vmul.f32 %v2217, %v2249
  %v2258 = vmul.f32 %v2218, %v2250
  %v2259 = vmul.f32 %v2219, %v2251
  %v2260 = vpack.c.bf16 %v2253, %v2252
  %v2261 = vpack.c.bf16 %v2255, %v2254
  %v2262 = vpack.c.bf16 %v2257, %v2256
  %v2263 = vpack.c.bf16 %v2259, %v2258
  %2264 = vmatprep.subr.bf16.mxu0 0
  %2265 = vmatpush1.bf16.msra.mxu0 %v2260
  %2266 = vmatprep.subr.bf16.mxu0 0
  %2267 = vmatpush1.bf16.msra.mxu0 %v2261
  %2268 = vmatprep.subr.bf16.mxu0 0
  %2269 = vmatpush1.bf16.msra.mxu0 %v2262
  %2270 = vmatprep.subr.bf16.mxu0 0
  %2271 = vmatpush1.bf16.msra.mxu0 %v2263
  %2272 = vmatprep.subr.bf16.mxu0 0
  %2273 = vmatpush1.bf16.msra.mxu0 0
  %2274 = vmatprep.subr.bf16.mxu0 0
  %2275 = vmatpush1.bf16.msra.mxu0 0
  %2276 = vmatprep.subr.bf16.mxu0 0
  %2277 = vmatpush1.bf16.msra.mxu0 0
  %2278 = vmatprep.subr.bf16.mxu0 0
  %2279 = vmatpush1.bf16.msra.mxu0 0
  %2280 = vmatprep.subr.bf16.mxu0 0
  %2281 = vmatpush1.bf16.msra.mxu0 0
  %2282 = vmatprep.subr.bf16.mxu0 0
  %2283 = vmatpush1.bf16.msra.mxu0 0
  %2284 = vmatprep.subr.bf16.mxu0 0
  %2285 = vmatpush1.bf16.msra.mxu0 0
  %2286 = vmatprep.subr.bf16.mxu0 0
  %2287 = vmatpush1.bf16.msra.mxu0 0
  %2288 = vmatprep.subr.bf16.mxu0 0
  %2289 = vmatpush1.bf16.msra.mxu0 0
  %2290 = vmatprep.subr.bf16.mxu0 0
  %2291 = vmatpush1.bf16.msra.mxu0 0
  %2292 = vmatprep.subr.bf16.mxu0 0
  %2293 = vmatpush1.bf16.msra.mxu0 0
  %2294 = vmatprep.subr.bf16.mxu0 0
  %2295 = vmatpush1.bf16.msra.mxu0 0
  %2296 = vmatprep.mubr.bf16.mxu0 0
  %2297 = vmatmul.mubr.bf16.gmra.mrb[0].mxu0 %v1647
  %v2298 = vpop.f32.mrb[0].mxu0
  %v2299 = vadd.f32 %v840, %v2298
  %v2300 = vpop.f32.mrb[0].mxu0
  %v2301 = vpop.f32.mrb[0].mxu0
  %v2302 = vadd.f32 %v845, %v2301
  %v2303 = vpop.f32.mrb[0].mxu0
  %2304 = vmatprep.mubr.bf16.mxu0 0
  %2305 = vmatmul.mubr.bf16.gmra.mrb[0].mxu0 %v1650
  %v2306 = vpop.f32.mrb[0].mxu0
  %v2307 = vadd.f32 %v850, %v2306
  %v2308 = vpop.f32.mrb[0].mxu0
  %v2309 = vpop.f32.mrb[0].mxu0
  %v2310 = vadd.f32 %v855, %v2309
  %v2311 = vpop.f32.mrb[0].mxu0
  %2312 = vmatprep.mubr.bf16.mxu0 0
  %2313 = vmatmul.mubr.bf16.gmra.mrb[0].mxu0 %v1653
  %v2314 = vpop.f32.mrb[0].mxu0
  %v2315 = vadd.f32 %v860, %v2314
  %v2316 = vpop.f32.mrb[0].mxu0
  %v2317 = vpop.f32.mrb[0].mxu0
  %v2318 = vadd.f32 %v865, %v2317
  %v2319 = vpop.f32.mrb[0].mxu0
  %2320 = vmatprep.mubr.bf16.mxu0 0
  %2321 = vmatmul.mubr.bf16.gmra.mrb[0].mxu0 %v1656
  %v2322 = vpop.f32.mrb[0].mxu0
  %v2323 = vadd.f32 %v870, %v2322
  %v2324 = vpop.f32.mrb[0].mxu0
  %v2325 = vpop.f32.mrb[0].mxu0
  %v2326 = vadd.f32 %v875, %v2325
  %v2327 = vpop.f32.mrb[0].mxu0
  %2328 = vmatprep.mubr.bf16.mxu0 0
  %2329 = vmatmul.mubr.bf16.gmra.mrb[0].mxu0 %v1659
  %v2330 = vpop.f32.mrb[0].mxu0
  %v2331 = vadd.f32 %v880, %v2330
  %v2332 = vpop.f32.mrb[0].mxu0
  %v2333 = vpop.f32.mrb[0].mxu0
  %v2334 = vadd.f32 %v885, %v2333
  %v2335 = vpop.f32.mrb[0].mxu0
  %2336 = vmatprep.mubr.bf16.mxu0 0
  %2337 = vmatmul.mubr.bf16.gmra.mrb[0].mxu0 %v1662
  %v2338 = vpop.f32.mrb[0].mxu0
  %v2339 = vadd.f32 %v890, %v2338
  %v2340 = vpop.f32.mrb[0].mxu0
  %v2341 = vpop.f32.mrb[0].mxu0
  %v2342 = vadd.f32 %v895, %v2341
  %v2343 = vpop.f32.mrb[0].mxu0
  %2344 = vmatprep.mubr.bf16.mxu0 0
  %2345 = vmatmul.mubr.bf16.gmra.mrb[0].mxu0 %v1665
  %v2346 = vpop.f32.mrb[0].mxu0
  %v2347 = vadd.f32 %v900, %v2346
  %v2348 = vpop.f32.mrb[0].mxu0
  %v2349 = vpop.f32.mrb[0].mxu0
  %v2350 = vadd.f32 %v905, %v2349
  %v2351 = vpop.f32.mrb[0].mxu0
  %2352 = vmatprep.mubr.bf16.mxu0 0
  %2353 = vmatmul.mubr.bf16.gmra.mrb[0].mxu0 %v1668
  %v2354 = vpop.f32.mrb[0].mxu0
  %v2355 = vadd.f32 %v910, %v2354
  %v2356 = vpop.f32.mrb[0].mxu0
  %v2357 = vpop.f32.mrb[0].mxu0
  %v2358 = vadd.f32 %v915, %v2357
  %v2359 = vpop.f32.mrb[0].mxu0
  %2360 = vmatprep.mubr.bf16.mxu0 0
  %2361 = vmatmul.mubr.bf16.gmra.mrb[0].mxu0 %v1671
  %v2362 = vpop.f32.mrb[0].mxu0
  %v2363 = vadd.f32 %v192, %v2362
  %v2364 = vpop.f32.mrb[0].mxu0
  %v2365 = vpop.f32.mrb[0].mxu0
  %v2366 = vadd.f32 %v197, %v2365
  %v2367 = vpop.f32.mrb[0].mxu0
  %2368 = vmatprep.mubr.bf16.mxu0 0
  %2369 = vmatmul.mubr.bf16.gmra.mrb[0].mxu0 %v1674
  %v2370 = vpop.f32.mrb[0].mxu0
  %v2371 = vadd.f32 %v202, %v2370
  %v2372 = vpop.f32.mrb[0].mxu0
  %v2373 = vpop.f32.mrb[0].mxu0
  %v2374 = vadd.f32 %v207, %v2373
  %v2375 = vpop.f32.mrb[0].mxu0
  %2376 = vmatprep.mubr.bf16.mxu0 0
  %2377 = vmatmul.mubr.bf16.gmra.mrb[0].mxu0 %v1677
  %v2378 = vpop.f32.mrb[0].mxu0
  %v2379 = vadd.f32 %v212, %v2378
  %v2380 = vpop.f32.mrb[0].mxu0
  %v2381 = vpop.f32.mrb[0].mxu0
  %v2382 = vadd.f32 %v217, %v2381
  %v2383 = vpop.f32.mrb[0].mxu0
  %2384 = vmatprep.mubr.bf16.mxu0 0
  %2385 = vmatmul.mubr.bf16.gmra.mrb[0].mxu0 %v1680
  %v2386 = vpop.f32.mrb[0].mxu0
  %v2387 = vadd.f32 %v222, %v2386
  %v2388 = vpop.f32.mrb[0].mxu0
  %v2389 = vpop.f32.mrb[0].mxu0
  %v2390 = vadd.f32 %v227, %v2389
  %v2391 = vpop.f32.mrb[0].mxu0
  %2392 = vmatprep.mubr.bf16.mxu0 0
  %2393 = vmatmul.mubr.bf16.gmra.mrb[0].mxu0 %v1683
  %v2394 = vpop.f32.mrb[0].mxu0
  %v2395 = vadd.f32 %v232, %v2394
  %v2396 = vpop.f32.mrb[0].mxu0
  %v2397 = vpop.f32.mrb[0].mxu0
  %v2398 = vadd.f32 %v237, %v2397
  %v2399 = vpop.f32.mrb[0].mxu0
  %2400 = vmatprep.mubr.bf16.mxu0 0
  %2401 = vmatmul.mubr.bf16.gmra.mrb[0].mxu0 %v1686
  %v2402 = vpop.f32.mrb[0].mxu0
  %v2403 = vadd.f32 %v242, %v2402
  %v2404 = vpop.f32.mrb[0].mxu0
  %v2405 = vpop.f32.mrb[0].mxu0
  %v2406 = vadd.f32 %v247, %v2405
  %v2407 = vpop.f32.mrb[0].mxu0
  %2408 = vmatprep.mubr.bf16.mxu0 0
  %2409 = vmatmul.mubr.bf16.gmra.mrb[0].mxu0 %v1689
  %v2410 = vpop.f32.mrb[0].mxu0
  %v2411 = vadd.f32 %v252, %v2410
  %v2412 = vpop.f32.mrb[0].mxu0
  %v2413 = vpop.f32.mrb[0].mxu0
  %v2414 = vadd.f32 %v257, %v2413
  %v2415 = vpop.f32.mrb[0].mxu0
  %2416 = vmatprep.mubr.bf16.mxu0 0
  %2417 = vmatmul.mubr.bf16.gmra.mrb[0].mxu0 %v1692
  %v2418 = vpop.f32.mrb[0].mxu0
  %v2419 = vadd.f32 %v262, %v2418
  %v2420 = vpop.f32.mrb[0].mxu0
  %v2421 = vpop.f32.mrb[0].mxu0
  %v2422 = vadd.f32 %v267, %v2421
  %v2423 = vpop.f32.mrb[0].mxu0
  %2424 = vdwg.mxu0
  %v2425 = vtanh.pop %v2299
  %v2426 = vtanh.pop %v2302
  %v2427 = vtanh.pop %v2307
  %v2428 = vtanh.pop %v2310
  %v2429 = vtanh.pop %v2315
  %v2430 = vtanh.pop %v2318
  %v2431 = vtanh.pop %v2323
  %v2432 = vtanh.pop %v2326
  %v2433 = vtanh.pop %v2331
  %v2434 = vtanh.pop %v2334
  %v2435 = vtanh.pop %v2339
  %v2436 = vtanh.pop %v2342
  %v2437 = vtanh.pop %v2347
  %v2438 = vtanh.pop %v2350
  %v2439 = vtanh.pop %v2355
  %v2440 = vtanh.pop %v2358
  %v2441 = vtanh.pop %v2363
  %v2442 = vtanh.pop %v2366
  %v2443 = vtanh.pop %v2371
  %v2444 = vtanh.pop %v2374
  %v2445 = vtanh.pop %v2379
  %v2446 = vtanh.pop %v2382
  %v2447 = vtanh.pop %v2387
  %v2448 = vtanh.pop %v2390
  %v2449 = vtanh.pop %v2395
  %v2450 = vtanh.pop %v2398
  %v2451 = vtanh.pop %v2403
  %v2452 = vtanh.pop %v2406
  %v2453 = vtanh.pop %v2411
  %v2454 = vtanh.pop %v2414
  %v2455 = vtanh.pop %v2419
  %v2456 = vtanh.pop %v2422
  %v2457 = vmul.f32 %v2425, 0.5
  %v2458 = vmul.f32 %v2426, 0.5
  %v2459 = vmul.f32 %v2427, 0.5
  %v2460 = vmul.f32 %v2428, 0.5
  %v2461 = vmul.f32 %v2429, 0.5
  %v2462 = vmul.f32 %v2430, 0.5
  %v2463 = vmul.f32 %v2431, 0.5
  %v2464 = vmul.f32 %v2432, 0.5
  %v2465 = vmul.f32 %v2437, 0.5
  %v2466 = vmul.f32 %v2438, 0.5
  %v2467 = vmul.f32 %v2439, 0.5
  %v2468 = vmul.f32 %v2440, 0.5
  %v2469 = vmul.f32 %v2441, 0.5
  %v2470 = vmul.f32 %v2442, 0.5
  %v2471 = vmul.f32 %v2443, 0.5
  %v2472 = vmul.f32 %v2444, 0.5
  %v2473 = vmul.f32 %v2445, 0.5
  %v2474 = vmul.f32 %v2446, 0.5
  %v2475 = vmul.f32 %v2447, 0.5
  %v2476 = vmul.f32 %v2448, 0.5
  %v2477 = vmul.f32 %v2453, 0.5
  %v2478 = vmul.f32 %v2454, 0.5
  %v2479 = vmul.f32 %v2455, 0.5
  %v2480 = vmul.f32 %v2456, 0.5
  %v2481 = vadd.f32 %v2457, 0.5
  %v2482 = vadd.f32 %v2458, 0.5
  %v2483 = vadd.f32 %v2459, 0.5
  %v2484 = vadd.f32 %v2460, 0.5
  %v2485 = vadd.f32 %v2461, 0.5
  %v2486 = vadd.f32 %v2462, 0.5
  %v2487 = vadd.f32 %v2463, 0.5
  %v2488 = vadd.f32 %v2464, 0.5
  %v2489 = vadd.f32 %v2465, 0.5
  %v2490 = vadd.f32 %v2466, 0.5
  %v2491 = vadd.f32 %v2467, 0.5
  %v2492 = vadd.f32 %v2468, 0.5
  %v2493 = vadd.f32 %v2469, 0.5
  %v2494 = vadd.f32 %v2470, 0.5
  %v2495 = vadd.f32 %v2471, 0.5
  %v2496 = vadd.f32 %v2472, 0.5
  %v2497 = vadd.f32 %v2473, 0.5
  %v2498 = vadd.f32 %v2474, 0.5
  %v2499 = vadd.f32 %v2475, 0.5
  %v2500 = vadd.f32 %v2476, 0.5
  %v2501 = vadd.f32 %v2477, 0.5
  %v2502 = vadd.f32 %v2478, 0.5
  %v2503 = vadd.f32 %v2479, 0.5
  %v2504 = vadd.f32 %v2480, 0.5
  %v2505 = vmul.f32 %v2497, %v2228
  %v2506 = vmul.f32 %v2498, %v2229
  %v2507 = vmul.f32 %v2499, %v2230
  %v2508 = vmul.f32 %v2500, %v2231
  %v2509 = vmul.f32 %v2493, %v2449
  %v2510 = vmul.f32 %v2494, %v2450
  %v2511 = vmul.f32 %v2495, %v2451
  %v2512 = vmul.f32 %v2496, %v2452
  %v2513 = vadd.f32 %v2505, %v2509
  %v2514 = vadd.f32 %v2506, %v2510
  %v2515 = vadd.f32 %v2507, %v2511
  %v2516 = vadd.f32 %v2508, %v2512
  %v2517 = vmul.f32 %v2485, %v2240
  %v2518 = vmul.f32 %v2486, %v2241
  %v2519 = vmul.f32 %v2487, %v2242
  %v2520 = vmul.f32 %v2488, %v2243
  %v2521 = vmul.f32 %v2481, %v2433
  %v2522 = vmul.f32 %v2482, %v2434
  %v2523 = vmul.f32 %v2483, %v2435
  %v2524 = vmul.f32 %v2484, %v2436
  %v2525 = vadd.f32 %v2517, %v2521
  %v2526 = vadd.f32 %v2518, %v2522
  %v2527 = vadd.f32 %v2519, %v2523
  %v2528 = vadd.f32 %v2520, %v2524
  %v2529 = vtanh.pop %v2525
  %v2530 = vtanh.pop %v2526
  %v2531 = vtanh.pop %v2527
  %v2532 = vtanh.pop %v2528
  %v2533 = vtanh.pop %v2513
  %v2534 = vtanh.pop %v2514
  %v2535 = vtanh.pop %v2515
  %v2536 = vtanh.pop %v2516
  %v2537 = vmul.f32 %v2489, %v2529
  %v2538 = vmul.f32 %v2490, %v2530
  %v2539 = vmul.f32 %v2491, %v2531
  %v2540 = vmul.f32 %v2492, %v2532
  %v2541 = vmul.f32 %v2501, %v2533
  %v2542 = vmul.f32 %v2502, %v2534
  %v2543 = vmul.f32 %v2503, %v2535
  %v2544 = vmul.f32 %v2504, %v2536
  %v2545 = vpack.c.bf16 %v2538, %v2537
  %v2546 = vpack.c.bf16 %v2540, %v2539
  %v2547 = vpack.c.bf16 %v2542, %v2541
  %v2548 = vpack.c.bf16 %v2544, %v2543
  %2549 = vmatprep.subr.bf16.mxu0 0
  %2550 = vmatpush1.bf16.msra.mxu0 %v2545
  %2551 = vmatprep.subr.bf16.mxu0 0
  %2552 = vmatpush1.bf16.msra.mxu0 %v2546
  %2553 = vmatprep.subr.bf16.mxu0 0
  %2554 = vmatpush1.bf16.msra.mxu0 %v2547
  %2555 = vmatprep.subr.bf16.mxu0 0
  %2556 = vmatpush1.bf16.msra.mxu0 %v2548
  %2557 = vmatprep.subr.bf16.mxu0 0
  %2558 = vmatpush1.bf16.msra.mxu0 0
  %2559 = vmatprep.subr.bf16.mxu0 0
  %2560 = vmatpush1.bf16.msra.mxu0 0
  %2561 = vmatprep.subr.bf16.mxu0 0
  %2562 = vmatpush1.bf16.msra.mxu0 0
  %2563 = vmatprep.subr.bf16.mxu0 0
  %2564 = vmatpush1.bf16.msra.mxu0 0
  %2565 = vmatprep.subr.bf16.mxu0 0
  %2566 = vmatpush1.bf16.msra.mxu0 0
  %2567 = vmatprep.subr.bf16.mxu0 0
  %2568 = vmatpush1.bf16.msra.mxu0 0
  %2569 = vmatprep.subr.bf16.mxu0 0
  %2570 = vmatpush1.bf16.msra.mxu0 0
  %2571 = vmatprep.subr.bf16.mxu0 0
  %2572 = vmatpush1.bf16.msra.mxu0 0
  %2573 = vmatprep.subr.bf16.mxu0 0
  %2574 = vmatpush1.bf16.msra.mxu0 0
  %2575 = vmatprep.subr.bf16.mxu0 0
  %2576 = vmatpush1.bf16.msra.mxu0 0
  %2577 = vmatprep.subr.bf16.mxu0 0
  %2578 = vmatpush1.bf16.msra.mxu0 0
  %2579 = vmatprep.subr.bf16.mxu0 0
  %2580 = vmatpush1.bf16.msra.mxu0 0
  %2581 = vmatprep.mubr.bf16.mxu0 0
  %2582 = vmatmul.mubr.bf16.gmra.mrb[0].mxu0 %v1647
  %v2583 = vpop.f32.mrb[0].mxu0
  %v2584 = vadd.f32 %v991, %v2583
  %v2585 = vpop.f32.mrb[0].mxu0
  %v2586 = vpop.f32.mrb[0].mxu0
  %v2587 = vadd.f32 %v996, %v2586
  %v2588 = vpop.f32.mrb[0].mxu0
  %2589 = vmatprep.mubr.bf16.mxu0 0
  %2590 = vmatmul.mubr.bf16.gmra.mrb[0].mxu0 %v1650
  %v2591 = vpop.f32.mrb[0].mxu0
  %v2592 = vadd.f32 %v1001, %v2591
  %v2593 = vpop.f32.mrb[0].mxu0
  %v2594 = vpop.f32.mrb[0].mxu0
  %v2595 = vadd.f32 %v1006, %v2594
  %v2596 = vpop.f32.mrb[0].mxu0
  %2597 = vmatprep.mubr.bf16.mxu0 0
  %2598 = vmatmul.mubr.bf16.gmra.mrb[0].mxu0 %v1653
  %v2599 = vpop.f32.mrb[0].mxu0
  %v2600 = vadd.f32 %v1011, %v2599
  %v2601 = vpop.f32.mrb[0].mxu0
  %v2602 = vpop.f32.mrb[0].mxu0
  %v2603 = vadd.f32 %v1016, %v2602
  %v2604 = vpop.f32.mrb[0].mxu0
  %2605 = vmatprep.mubr.bf16.mxu0 0
  %2606 = vmatmul.mubr.bf16.gmra.mrb[0].mxu0 %v1656
  %v2607 = vpop.f32.mrb[0].mxu0
  %v2608 = vadd.f32 %v1021, %v2607
  %v2609 = vpop.f32.mrb[0].mxu0
  %v2610 = vpop.f32.mrb[0].mxu0
  %v2611 = vadd.f32 %v1026, %v2610
  %v2612 = vpop.f32.mrb[0].mxu0
  %2613 = vmatprep.mubr.bf16.mxu0 0
  %2614 = vmatmul.mubr.bf16.gmra.mrb[0].mxu0 %v1659
  %v2615 = vpop.f32.mrb[0].mxu0
  %v2616 = vadd.f32 %v1031, %v2615
  %v2617 = vpop.f32.mrb[0].mxu0
  %v2618 = vpop.f32.mrb[0].mxu0
  %v2619 = vadd.f32 %v1036, %v2618
  %v2620 = vpop.f32.mrb[0].mxu0
  %2621 = vmatprep.mubr.bf16.mxu0 0
  %2622 = vmatmul.mubr.bf16.gmra.mrb[0].mxu0 %v1662
  %v2623 = vpop.f32.mrb[0].mxu0
  %v2624 = vadd.f32 %v1041, %v2623
  %v2625 = vpop.f32.mrb[0].mxu0
  %v2626 = vpop.f32.mrb[0].mxu0
  %v2627 = vadd.f32 %v1046, %v2626
  %v2628 = vpop.f32.mrb[0].mxu0
  %2629 = vmatprep.mubr.bf16.mxu0 0
  %2630 = vmatmul.mubr.bf16.gmra.mrb[0].mxu0 %v1665
  %v2631 = vpop.f32.mrb[0].mxu0
  %v2632 = vadd.f32 %v1051, %v2631
  %v2633 = vpop.f32.mrb[0].mxu0
  %v2634 = vpop.f32.mrb[0].mxu0
  %v2635 = vadd.f32 %v1056, %v2634
  %v2636 = vpop.f32.mrb[0].mxu0
  %2637 = vmatprep.mubr.bf16.mxu0 0
  %2638 = vmatmul.mubr.bf16.gmra.mrb[0].mxu0 %v1668
  %v2639 = vpop.f32.mrb[0].mxu0
  %v2640 = vadd.f32 %v1061, %v2639
  %v2641 = vpop.f32.mrb[0].mxu0
  %v2642 = vpop.f32.mrb[0].mxu0
  %v2643 = vadd.f32 %v1066, %v2642
  %v2644 = vpop.f32.mrb[0].mxu0
  %2645 = vmatprep.mubr.bf16.mxu0 0
  %2646 = vmatmul.mubr.bf16.gmra.mrb[0].mxu0 %v1671
  %v2647 = vpop.f32.mrb[0].mxu0
  %v2648 = vadd.f32 %v192, %v2647
  %v2649 = vpop.f32.mrb[0].mxu0
  %v2650 = vpop.f32.mrb[0].mxu0
  %v2651 = vadd.f32 %v197, %v2650
  %v2652 = vpop.f32.mrb[0].mxu0
  %2653 = vmatprep.mubr.bf16.mxu0 0
  %2654 = vmatmul.mubr.bf16.gmra.mrb[0].mxu0 %v1674
  %v2655 = vpop.f32.mrb[0].mxu0
  %v2656 = vadd.f32 %v202, %v2655
  %v2657 = vpop.f32.mrb[0].mxu0
  %v2658 = vpop.f32.mrb[0].mxu0
  %v2659 = vadd.f32 %v207, %v2658
  %v2660 = vpop.f32.mrb[0].mxu0
  %2661 = vmatprep.mubr.bf16.mxu0 0
  %2662 = vmatmul.mubr.bf16.gmra.mrb[0].mxu0 %v1677
  %v2663 = vpop.f32.mrb[0].mxu0
  %v2664 = vadd.f32 %v212, %v2663
  %v2665 = vpop.f32.mrb[0].mxu0
  %v2666 = vpop.f32.mrb[0].mxu0
  %v2667 = vadd.f32 %v217, %v2666
  %v2668 = vpop.f32.mrb[0].mxu0
  %2669 = vmatprep.mubr.bf16.mxu0 0
  %2670 = vmatmul.mubr.bf16.gmra.mrb[0].mxu0 %v1680
  %v2671 = vpop.f32.mrb[0].mxu0
  %v2672 = vadd.f32 %v222, %v2671
  %v2673 = vpop.f32.mrb[0].mxu0
  %v2674 = vpop.f32.mrb[0].mxu0
  %v2675 = vadd.f32 %v227, %v2674
  %v2676 = vpop.f32.mrb[0].mxu0
  %2677 = vmatprep.mubr.bf16.mxu0 0
  %2678 = vmatmul.mubr.bf16.gmra.mrb[0].mxu0 %v1683
  %v2679 = vpop.f32.mrb[0].mxu0
  %v2680 = vadd.f32 %v232, %v2679
  %v2681 = vpop.f32.mrb[0].mxu0
  %v2682 = vpop.f32.mrb[0].mxu0
  %v2683 = vadd.f32 %v237, %v2682
  %v2684 = vpop.f32.mrb[0].mxu0
  %2685 = vmatprep.mubr.bf16.mxu0 0
  %2686 = vmatmul.mubr.bf16.gmra.mrb[0].mxu0 %v1686
  %v2687 = vpop.f32.mrb[0].mxu0
  %v2688 = vadd.f32 %v242, %v2687
  %v2689 = vpop.f32.mrb[0].mxu0
  %v2690 = vpop.f32.mrb[0].mxu0
  %v2691 = vadd.f32 %v247, %v2690
  %v2692 = vpop.f32.mrb[0].mxu0
  %2693 = vmatprep.mubr.bf16.mxu0 0
  %2694 = vmatmul.mubr.bf16.gmra.mrb[0].mxu0 %v1689
  %v2695 = vpop.f32.mrb[0].mxu0
  %v2696 = vadd.f32 %v252, %v2695
  %v2697 = vpop.f32.mrb[0].mxu0
  %v2698 = vpop.f32.mrb[0].mxu0
  %v2699 = vadd.f32 %v257, %v2698
  %v2700 = vpop.f32.mrb[0].mxu0
  %2701 = vmatprep.mubr.bf16.mxu0 0
  %2702 = vmatmul.mubr.bf16.gmra.mrb[0].mxu0 %v1692
  %v2703 = vpop.f32.mrb[0].mxu0
  %v2704 = vadd.f32 %v262, %v2703
  %v2705 = vpop.f32.mrb[0].mxu0
  %v2706 = vpop.f32.mrb[0].mxu0
  %v2707 = vadd.f32 %v267, %v2706
  %v2708 = vpop.f32.mrb[0].mxu0
  %2709 = vdwg.mxu0
  %v2710 = vtanh.pop %v2584
  %v2711 = vtanh.pop %v2587
  %v2712 = vtanh.pop %v2592
  %v2713 = vtanh.pop %v2595
  %v2714 = vtanh.pop %v2600
  %v2715 = vtanh.pop %v2603
  %v2716 = vtanh.pop %v2608
  %v2717 = vtanh.pop %v2611
  %v2718 = vtanh.pop %v2616
  %v2719 = vtanh.pop %v2619
  %v2720 = vtanh.pop %v2624
  %v2721 = vtanh.pop %v2627
  %v2722 = vtanh.pop %v2632
  %v2723 = vtanh.pop %v2635
  %v2724 = vtanh.pop %v2640
  %v2725 = vtanh.pop %v2643
  %v2726 = vtanh.pop %v2648
  %v2727 = vtanh.pop %v2651
  %v2728 = vtanh.pop %v2656
  %v2729 = vtanh.pop %v2659
  %v2730 = vtanh.pop %v2664
  %v2731 = vtanh.pop %v2667
  %v2732 = vtanh.pop %v2672
  %v2733 = vtanh.pop %v2675
  %v2734 = vtanh.pop %v2680
  %v2735 = vtanh.pop %v2683
  %v2736 = vtanh.pop %v2688
  %v2737 = vtanh.pop %v2691
  %v2738 = vtanh.pop %v2696
  %v2739 = vtanh.pop %v2699
  %v2740 = vtanh.pop %v2704
  %v2741 = vtanh.pop %v2707
  %v2742 = vmul.f32 %v2710, 0.5
  %v2743 = vmul.f32 %v2711, 0.5
  %v2744 = vmul.f32 %v2712, 0.5
  %v2745 = vmul.f32 %v2713, 0.5
  %v2746 = vmul.f32 %v2714, 0.5
  %v2747 = vmul.f32 %v2715, 0.5
  %v2748 = vmul.f32 %v2716, 0.5
  %v2749 = vmul.f32 %v2717, 0.5
  %v2750 = vmul.f32 %v2722, 0.5
  %v2751 = vmul.f32 %v2723, 0.5
  %v2752 = vmul.f32 %v2724, 0.5
  %v2753 = vmul.f32 %v2725, 0.5
  %v2754 = vmul.f32 %v2726, 0.5
  %v2755 = vmul.f32 %v2727, 0.5
  %v2756 = vmul.f32 %v2728, 0.5
  %v2757 = vmul.f32 %v2729, 0.5
  %v2758 = vmul.f32 %v2730, 0.5
  %v2759 = vmul.f32 %v2731, 0.5
  %v2760 = vmul.f32 %v2732, 0.5
  %v2761 = vmul.f32 %v2733, 0.5
  %v2762 = vmul.f32 %v2738, 0.5
  %v2763 = vmul.f32 %v2739, 0.5
  %v2764 = vmul.f32 %v2740, 0.5
  %v2765 = vmul.f32 %v2741, 0.5
  %v2766 = vadd.f32 %v2742, 0.5
  %v2767 = vadd.f32 %v2743, 0.5
  %v2768 = vadd.f32 %v2744, 0.5
  %v2769 = vadd.f32 %v2745, 0.5
  %v2770 = vadd.f32 %v2746, 0.5
  %v2771 = vadd.f32 %v2747, 0.5
  %v2772 = vadd.f32 %v2748, 0.5
  %v2773 = vadd.f32 %v2749, 0.5
  %v2774 = vadd.f32 %v2750, 0.5
  %v2775 = vadd.f32 %v2751, 0.5
  %v2776 = vadd.f32 %v2752, 0.5
  %v2777 = vadd.f32 %v2753, 0.5
  %v2778 = vadd.f32 %v2754, 0.5
  %v2779 = vadd.f32 %v2755, 0.5
  %v2780 = vadd.f32 %v2756, 0.5
  %v2781 = vadd.f32 %v2757, 0.5
  %v2782 = vadd.f32 %v2758, 0.5
  %v2783 = vadd.f32 %v2759, 0.5
  %v2784 = vadd.f32 %v2760, 0.5
  %v2785 = vadd.f32 %v2761, 0.5
  %v2786 = vadd.f32 %v2762, 0.5
  %v2787 = vadd.f32 %v2763, 0.5
  %v2788 = vadd.f32 %v2764, 0.5
  %v2789 = vadd.f32 %v2765, 0.5
  %v2790 = vmul.f32 %v2782, %v2513
  %v2791 = vmul.f32 %v2783, %v2514
  %v2792 = vmul.f32 %v2784, %v2515
  %v2793 = vmul.f32 %v2785, %v2516
  %v2794 = vmul.f32 %v2778, %v2734
  %v2795 = vmul.f32 %v2779, %v2735
  %v2796 = vmul.f32 %v2780, %v2736
  %v2797 = vmul.f32 %v2781, %v2737
  %v2798 = vadd.f32 %v2790, %v2794
  %v2799 = vadd.f32 %v2791, %v2795
  %v2800 = vadd.f32 %v2792, %v2796
  %v2801 = vadd.f32 %v2793, %v2797
  %v2802 = vmul.f32 %v2770, %v2525
  %v2803 = vmul.f32 %v2771, %v2526
  %v2804 = vmul.f32 %v2772, %v2527
  %v2805 = vmul.f32 %v2773, %v2528
  %v2806 = vmul.f32 %v2766, %v2718
  %v2807 = vmul.f32 %v2767, %v2719
  %v2808 = vmul.f32 %v2768, %v2720
  %v2809 = vmul.f32 %v2769, %v2721
  %v2810 = vadd.f32 %v2802, %v2806
  %v2811 = vadd.f32 %v2803, %v2807
  %v2812 = vadd.f32 %v2804, %v2808
  %v2813 = vadd.f32 %v2805, %v2809
  %v2814 = vtanh.pop %v2810
  %v2815 = vtanh.pop %v2811
  %v2816 = vtanh.pop %v2812
  %v2817 = vtanh.pop %v2813
  %v2818 = vtanh.pop %v2798
  %v2819 = vtanh.pop %v2799
  %v2820 = vtanh.pop %v2800
  %v2821 = vtanh.pop %v2801
  %v2822 = vmul.f32 %v2774, %v2814
  %v2823 = vmul.f32 %v2775, %v2815
  %v2824 = vmul.f32 %v2776, %v2816
  %v2825 = vmul.f32 %v2777, %v2817
  %v2826 = vmul.f32 %v2786, %v2818
  %v2827 = vmul.f32 %v2787, %v2819
  %v2828 = vmul.f32 %v2788, %v2820
  %v2829 = vmul.f32 %v2789, %v2821
  %v2830 = vpack.c.bf16 %v2823, %v2822
  %v2831 = vpack.c.bf16 %v2825, %v2824
  %v2832 = vpack.c.bf16 %v2827, %v2826
  %v2833 = vpack.c.bf16 %v2829, %v2828
  %2834 = vmatprep.subr.bf16.mxu0 0
  %2835 = vmatpush1.bf16.msra.mxu0 %v2830
  %2836 = vmatprep.subr.bf16.mxu0 0
  %2837 = vmatpush1.bf16.msra.mxu0 %v2831
  %2838 = vmatprep.subr.bf16.mxu0 0
  %2839 = vmatpush1.bf16.msra.mxu0 %v2832
  %2840 = vmatprep.subr.bf16.mxu0 0
  %2841 = vmatpush1.bf16.msra.mxu0 %v2833
  %2842 = vmatprep.subr.bf16.mxu0 0
  %2843 = vmatpush1.bf16.msra.mxu0 0
  %2844 = vmatprep.subr.bf16.mxu0 0
  %2845 = vmatpush1.bf16.msra.mxu0 0
  %2846 = vmatprep.subr.bf16.mxu0 0
  %2847 = vmatpush1.bf16.msra.mxu0 0
  %2848 = vmatprep.subr.bf16.mxu0 0
  %2849 = vmatpush1.bf16.msra.mxu0 0
  %2850 = vmatprep.subr.bf16.mxu0 0
  %2851 = vmatpush1.bf16.msra.mxu0 0
  %2852 = vmatprep.subr.bf16.mxu0 0
  %2853 = vmatpush1.bf16.msra.mxu0 0
  %2854 = vmatprep.subr.bf16.mxu0 0
  %2855 = vmatpush1.bf16.msra.mxu0 0
  %2856 = vmatprep.subr.bf16.mxu0 0
  %2857 = vmatpush1.bf16.msra.mxu0 0
  %2858 = vmatprep.subr.bf16.mxu0 0
  %2859 = vmatpush1.bf16.msra.mxu0 0
  %2860 = vmatprep.subr.bf16.mxu0 0
  %2861 = vmatpush1.bf16.msra.mxu0 0
  %2862 = vmatprep.subr.bf16.mxu0 0
  %2863 = vmatpush1.bf16.msra.mxu0 0
  %2864 = vmatprep.subr.bf16.mxu0 0
  %2865 = vmatpush1.bf16.msra.mxu0 0
  %2866 = vmatprep.mubr.bf16.mxu0 0
  %2867 = vmatmul.mubr.bf16.gmra.mrb[0].mxu0 %v1647
  %v2868 = vpop.f32.mrb[0].mxu0
  %v2869 = vadd.f32 %v1142, %v2868
  %v2870 = vpop.f32.mrb[0].mxu0
  %v2871 = vpop.f32.mrb[0].mxu0
  %v2872 = vadd.f32 %v1147, %v2871
  %v2873 = vpop.f32.mrb[0].mxu0
  %2874 = vmatprep.mubr.bf16.mxu0 0
  %2875 = vmatmul.mubr.bf16.gmra.mrb[0].mxu0 %v1650
  %v2876 = vpop.f32.mrb[0].mxu0
  %v2877 = vadd.f32 %v1152, %v2876
  %v2878 = vpop.f32.mrb[0].mxu0
  %v2879 = vpop.f32.mrb[0].mxu0
  %v2880 = vadd.f32 %v1157, %v2879
  %v2881 = vpop.f32.mrb[0].mxu0
  %2882 = vmatprep.mubr.bf16.mxu0 0
  %2883 = vmatmul.mubr.bf16.gmra.mrb[0].mxu0 %v1653
  %v2884 = vpop.f32.mrb[0].mxu0
  %v2885 = vadd.f32 %v1162, %v2884
  %v2886 = vpop.f32.mrb[0].mxu0
  %v2887 = vpop.f32.mrb[0].mxu0
  %v2888 = vadd.f32 %v1167, %v2887
  %v2889 = vpop.f32.mrb[0].mxu0
  %2890 = vmatprep.mubr.bf16.mxu0 0
  %2891 = vmatmul.mubr.bf16.gmra.mrb[0].mxu0 %v1656
  %v2892 = vpop.f32.mrb[0].mxu0
  %v2893 = vadd.f32 %v1172, %v2892
  %v2894 = vpop.f32.mrb[0].mxu0
  %v2895 = vpop.f32.mrb[0].mxu0
  %v2896 = vadd.f32 %v1177, %v2895
  %v2897 = vpop.f32.mrb[0].mxu0
  %2898 = vmatprep.mubr.bf16.mxu0 0
  %2899 = vmatmul.mubr.bf16.gmra.mrb[0].mxu0 %v1659
  %v2900 = vpop.f32.mrb[0].mxu0
  %v2901 = vadd.f32 %v1182, %v2900
  %v2902 = vpop.f32.mrb[0].mxu0
  %v2903 = vpop.f32.mrb[0].mxu0
  %v2904 = vadd.f32 %v1187, %v2903
  %v2905 = vpop.f32.mrb[0].mxu0
  %2906 = vmatprep.mubr.bf16.mxu0 0
  %2907 = vmatmul.mubr.bf16.gmra.mrb[0].mxu0 %v1662
  %v2908 = vpop.f32.mrb[0].mxu0
  %v2909 = vadd.f32 %v1192, %v2908
  %v2910 = vpop.f32.mrb[0].mxu0
  %v2911 = vpop.f32.mrb[0].mxu0
  %v2912 = vadd.f32 %v1197, %v2911
  %v2913 = vpop.f32.mrb[0].mxu0
  %2914 = vmatprep.mubr.bf16.mxu0 0
  %2915 = vmatmul.mubr.bf16.gmra.mrb[0].mxu0 %v1665
  %v2916 = vpop.f32.mrb[0].mxu0
  %v2917 = vadd.f32 %v1202, %v2916
  %v2918 = vpop.f32.mrb[0].mxu0
  %v2919 = vpop.f32.mrb[0].mxu0
  %v2920 = vadd.f32 %v1207, %v2919
  %v2921 = vpop.f32.mrb[0].mxu0
  %2922 = vmatprep.mubr.bf16.mxu0 0
  %2923 = vmatmul.mubr.bf16.gmra.mrb[0].mxu0 %v1668
  %v2924 = vpop.f32.mrb[0].mxu0
  %v2925 = vadd.f32 %v1212, %v2924
  %v2926 = vpop.f32.mrb[0].mxu0
  %v2927 = vpop.f32.mrb[0].mxu0
  %v2928 = vadd.f32 %v1217, %v2927
  %v2929 = vpop.f32.mrb[0].mxu0
  %2930 = vmatprep.mubr.bf16.mxu0 0
  %2931 = vmatmul.mubr.bf16.gmra.mrb[0].mxu0 %v1671
  %v2932 = vpop.f32.mrb[0].mxu0
  %v2933 = vadd.f32 %v192, %v2932
  %v2934 = vpop.f32.mrb[0].mxu0
  %v2935 = vpop.f32.mrb[0].mxu0
  %v2936 = vadd.f32 %v197, %v2935
  %v2937 = vpop.f32.mrb[0].mxu0
  %2938 = vmatprep.mubr.bf16.mxu0 0
  %2939 = vmatmul.mubr.bf16.gmra.mrb[0].mxu0 %v1674
  %v2940 = vpop.f32.mrb[0].mxu0
  %v2941 = vadd.f32 %v202, %v2940
  %v2942 = vpop.f32.mrb[0].mxu0
  %v2943 = vpop.f32.mrb[0].mxu0
  %v2944 = vadd.f32 %v207, %v2943
  %v2945 = vpop.f32.mrb[0].mxu0
  %2946 = vmatprep.mubr.bf16.mxu0 0
  %2947 = vmatmul.mubr.bf16.gmra.mrb[0].mxu0 %v1677
  %v2948 = vpop.f32.mrb[0].mxu0
  %v2949 = vadd.f32 %v212, %v2948
  %v2950 = vpop.f32.mrb[0].mxu0
  %v2951 = vpop.f32.mrb[0].mxu0
  %v2952 = vadd.f32 %v217, %v2951
  %v2953 = vpop.f32.mrb[0].mxu0
  %2954 = vmatprep.mubr.bf16.mxu0 0
  %2955 = vmatmul.mubr.bf16.gmra.mrb[0].mxu0 %v1680
  %v2956 = vpop.f32.mrb[0].mxu0
  %v2957 = vadd.f32 %v222, %v2956
  %v2958 = vpop.f32.mrb[0].mxu0
  %v2959 = vpop.f32.mrb[0].mxu0
  %v2960 = vadd.f32 %v227, %v2959
  %v2961 = vpop.f32.mrb[0].mxu0
  %2962 = vmatprep.mubr.bf16.mxu0 0
  %2963 = vmatmul.mubr.bf16.gmra.mrb[0].mxu0 %v1683
  %v2964 = vpop.f32.mrb[0].mxu0
  %v2965 = vadd.f32 %v232, %v2964
  %v2966 = vpop.f32.mrb[0].mxu0
  %v2967 = vpop.f32.mrb[0].mxu0
  %v2968 = vadd.f32 %v237, %v2967
  %v2969 = vpop.f32.mrb[0].mxu0
  %2970 = vmatprep.mubr.bf16.mxu0 0
  %2971 = vmatmul.mubr.bf16.gmra.mrb[0].mxu0 %v1686
  %v2972 = vpop.f32.mrb[0].mxu0
  %v2973 = vadd.f32 %v242, %v2972
  %v2974 = vpop.f32.mrb[0].mxu0
  %v2975 = vpop.f32.mrb[0].mxu0
  %v2976 = vadd.f32 %v247, %v2975
  %v2977 = vpop.f32.mrb[0].mxu0
  %2978 = vmatprep.mubr.bf16.mxu0 0
  %2979 = vmatmul.mubr.bf16.gmra.mrb[0].mxu0 %v1689
  %v2980 = vpop.f32.mrb[0].mxu0
  %v2981 = vadd.f32 %v252, %v2980
  %v2982 = vpop.f32.mrb[0].mxu0
  %v2983 = vpop.f32.mrb[0].mxu0
  %v2984 = vadd.f32 %v257, %v2983
  %v2985 = vpop.f32.mrb[0].mxu0
  %2986 = vmatprep.mubr.bf16.mxu0 0
  %2987 = vmatmul.mubr.bf16.gmra.mrb[0].mxu0 %v1692
  %v2988 = vpop.f32.mrb[0].mxu0
  %v2989 = vadd.f32 %v262, %v2988
  %v2990 = vpop.f32.mrb[0].mxu0
  %v2991 = vpop.f32.mrb[0].mxu0
  %v2992 = vadd.f32 %v267, %v2991
  %v2993 = vpop.f32.mrb[0].mxu0
  %2994 = vdwg.mxu0
  %v2995 = vtanh.pop %v2869
  %v2996 = vtanh.pop %v2872
  %v2997 = vtanh.pop %v2877
  %v2998 = vtanh.pop %v2880
  %v2999 = vtanh.pop %v2885
  %v3000 = vtanh.pop %v2888
  %v3001 = vtanh.pop %v2893
  %v3002 = vtanh.pop %v2896
  %v3003 = vtanh.pop %v2901
  %v3004 = vtanh.pop %v2904
  %v3005 = vtanh.pop %v2909
  %v3006 = vtanh.pop %v2912
  %v3007 = vtanh.pop %v2917
  %v3008 = vtanh.pop %v2920
  %v3009 = vtanh.pop %v2925
  %v3010 = vtanh.pop %v2928
  %v3011 = vtanh.pop %v2933
  %v3012 = vtanh.pop %v2936
  %v3013 = vtanh.pop %v2941
  %v3014 = vtanh.pop %v2944
  %v3015 = vtanh.pop %v2949
  %v3016 = vtanh.pop %v2952
  %v3017 = vtanh.pop %v2957
  %v3018 = vtanh.pop %v2960
  %v3019 = vtanh.pop %v2965
  %v3020 = vtanh.pop %v2968
  %v3021 = vtanh.pop %v2973
  %v3022 = vtanh.pop %v2976
  %v3023 = vtanh.pop %v2981
  %v3024 = vtanh.pop %v2984
  %v3025 = vtanh.pop %v2989
  %v3026 = vtanh.pop %v2992
  %v3027 = vmul.f32 %v2995, 0.5
  %v3028 = vmul.f32 %v2996, 0.5
  %v3029 = vmul.f32 %v2997, 0.5
  %v3030 = vmul.f32 %v2998, 0.5
  %v3031 = vmul.f32 %v2999, 0.5
  %v3032 = vmul.f32 %v3000, 0.5
  %v3033 = vmul.f32 %v3001, 0.5
  %v3034 = vmul.f32 %v3002, 0.5
  %v3035 = vmul.f32 %v3007, 0.5
  %v3036 = vmul.f32 %v3008, 0.5
  %v3037 = vmul.f32 %v3009, 0.5
  %v3038 = vmul.f32 %v3010, 0.5
  %v3039 = vmul.f32 %v3011, 0.5
  %v3040 = vmul.f32 %v3012, 0.5
  %v3041 = vmul.f32 %v3013, 0.5
  %v3042 = vmul.f32 %v3014, 0.5
  %v3043 = vmul.f32 %v3015, 0.5
  %v3044 = vmul.f32 %v3016, 0.5
  %v3045 = vmul.f32 %v3017, 0.5
  %v3046 = vmul.f32 %v3018, 0.5
  %v3047 = vmul.f32 %v3023, 0.5
  %v3048 = vmul.f32 %v3024, 0.5
  %v3049 = vmul.f32 %v3025, 0.5
  %v3050 = vmul.f32 %v3026, 0.5
  %v3051 = vadd.f32 %v3027, 0.5
  %v3052 = vadd.f32 %v3028, 0.5
  %v3053 = vadd.f32 %v3029, 0.5
  %v3054 = vadd.f32 %v3030, 0.5
  %v3055 = vadd.f32 %v3031, 0.5
  %v3056 = vadd.f32 %v3032, 0.5
  %v3057 = vadd.f32 %v3033, 0.5
  %v3058 = vadd.f32 %v3034, 0.5
  %v3059 = vadd.f32 %v3035, 0.5
  %v3060 = vadd.f32 %v3036, 0.5
  %v3061 = vadd.f32 %v3037, 0.5
  %v3062 = vadd.f32 %v3038, 0.5
  %v3063 = vadd.f32 %v3039, 0.5
  %v3064 = vadd.f32 %v3040, 0.5
  %v3065 = vadd.f32 %v3041, 0.5
  %v3066 = vadd.f32 %v3042, 0.5
  %v3067 = vadd.f32 %v3043, 0.5
  %v3068 = vadd.f32 %v3044, 0.5
  %v3069 = vadd.f32 %v3045, 0.5
  %v3070 = vadd.f32 %v3046, 0.5
  %v3071 = vadd.f32 %v3047, 0.5
  %v3072 = vadd.f32 %v3048, 0.5
  %v3073 = vadd.f32 %v3049, 0.5
  %v3074 = vadd.f32 %v3050, 0.5
  %v3075 = vmul.f32 %v3067, %v2798
  %v3076 = vmul.f32 %v3068, %v2799
  %v3077 = vmul.f32 %v3069, %v2800
  %v3078 = vmul.f32 %v3070, %v2801
  %v3079 = vmul.f32 %v3063, %v3019
  %v3080 = vmul.f32 %v3064, %v3020
  %v3081 = vmul.f32 %v3065, %v3021
  %v3082 = vmul.f32 %v3066, %v3022
  %v3083 = vadd.f32 %v3075, %v3079
  %v3084 = vadd.f32 %v3076, %v3080
  %v3085 = vadd.f32 %v3077, %v3081
  %v3086 = vadd.f32 %v3078, %v3082
  %v3087 = vmul.f32 %v3055, %v2810
  %v3088 = vmul.f32 %v3056, %v2811
  %v3089 = vmul.f32 %v3057, %v2812
  %v3090 = vmul.f32 %v3058, %v2813
  %v3091 = vmul.f32 %v3051, %v3003
  %v3092 = vmul.f32 %v3052, %v3004
  %v3093 = vmul.f32 %v3053, %v3005
  %v3094 = vmul.f32 %v3054, %v3006
  %v3095 = vadd.f32 %v3087, %v3091
  %v3096 = vadd.f32 %v3088, %v3092
  %v3097 = vadd.f32 %v3089, %v3093
  %v3098 = vadd.f32 %v3090, %v3094
  %v3099 = vtanh.pop %v3095
  %v3100 = vtanh.pop %v3096
  %v3101 = vtanh.pop %v3097
  %v3102 = vtanh.pop %v3098
  %v3103 = vtanh.pop %v3083
  %v3104 = vtanh.pop %v3084
  %v3105 = vtanh.pop %v3085
  %v3106 = vtanh.pop %v3086
  %v3107 = vmul.f32 %v3059, %v3099
  %v3108 = vmul.f32 %v3060, %v3100
  %v3109 = vmul.f32 %v3061, %v3101
  %v3110 = vmul.f32 %v3062, %v3102
  %v3111 = vmul.f32 %v3071, %v3103
  %v3112 = vmul.f32 %v3072, %v3104
  %v3113 = vmul.f32 %v3073, %v3105
  %v3114 = vmul.f32 %v3074, %v3106
  %v3115 = vpack.c.bf16 %v3108, %v3107
  %v3116 = vpack.c.bf16 %v3110, %v3109
  %v3117 = vpack.c.bf16 %v3112, %v3111
  %v3118 = vpack.c.bf16 %v3114, %v3113
  %3119 = vmatprep.subr.bf16.mxu0 0
  %3120 = vmatpush1.bf16.msra.mxu0 %v3115
  %3121 = vmatprep.subr.bf16.mxu0 0
  %3122 = vmatpush1.bf16.msra.mxu0 %v3116
  %3123 = vmatprep.subr.bf16.mxu0 0
  %3124 = vmatpush1.bf16.msra.mxu0 %v3117
  %3125 = vmatprep.subr.bf16.mxu0 0
  %3126 = vmatpush1.bf16.msra.mxu0 %v3118
  %3127 = vmatprep.subr.bf16.mxu0 0
  %3128 = vmatpush1.bf16.msra.mxu0 0
  %3129 = vmatprep.subr.bf16.mxu0 0
  %3130 = vmatpush1.bf16.msra.mxu0 0
  %3131 = vmatprep.subr.bf16.mxu0 0
  %3132 = vmatpush1.bf16.msra.mxu0 0
  %3133 = vmatprep.subr.bf16.mxu0 0
  %3134 = vmatpush1.bf16.msra.mxu0 0
  %3135 = vmatprep.subr.bf16.mxu0 0
  %3136 = vmatpush1.bf16.msra.mxu0 0
  %3137 = vmatprep.subr.bf16.mxu0 0
  %3138 = vmatpush1.bf16.msra.mxu0 0
  %3139 = vmatprep.subr.bf16.mxu0 0
  %3140 = vmatpush1.bf16.msra.mxu0 0
  %3141 = vmatprep.subr.bf16.mxu0 0
  %3142 = vmatpush1.bf16.msra.mxu0 0
  %3143 = vmatprep.subr.bf16.mxu0 0
  %3144 = vmatpush1.bf16.msra.mxu0 0
  %3145 = vmatprep.subr.bf16.mxu0 0
  %3146 = vmatpush1.bf16.msra.mxu0 0
  %3147 = vmatprep.subr.bf16.mxu0 0
  %3148 = vmatpush1.bf16.msra.mxu0 0
  %3149 = vmatprep.subr.bf16.mxu0 0
  %3150 = vmatpush1.bf16.msra.mxu0 0
  %3151 = vmatprep.mubr.bf16.mxu0 0
  %3152 = vmatmul.mubr.bf16.gmra.mrb[0].mxu0 %v1647
  %v3153 = vpop.f32.mrb[0].mxu0
  %v3154 = vadd.f32 %v1293, %v3153
  %v3155 = vpop.f32.mrb[0].mxu0
  %v3156 = vpop.f32.mrb[0].mxu0
  %v3157 = vadd.f32 %v1298, %v3156
  %v3158 = vpop.f32.mrb[0].mxu0
  %3159 = vmatprep.mubr.bf16.mxu0 0
  %3160 = vmatmul.mubr.bf16.gmra.mrb[0].mxu0 %v1650
  %v3161 = vpop.f32.mrb[0].mxu0
  %v3162 = vadd.f32 %v1303, %v3161
  %v3163 = vpop.f32.mrb[0].mxu0
  %v3164 = vpop.f32.mrb[0].mxu0
  %v3165 = vadd.f32 %v1308, %v3164
  %v3166 = vpop.f32.mrb[0].mxu0
  %3167 = vmatprep.mubr.bf16.mxu0 0
  %3168 = vmatmul.mubr.bf16.gmra.mrb[0].mxu0 %v1653
  %v3169 = vpop.f32.mrb[0].mxu0
  %v3170 = vadd.f32 %v1313, %v3169
  %v3171 = vpop.f32.mrb[0].mxu0
  %v3172 = vpop.f32.mrb[0].mxu0
  %v3173 = vadd.f32 %v1318, %v3172
  %v3174 = vpop.f32.mrb[0].mxu0
  %3175 = vmatprep.mubr.bf16.mxu0 0
  %3176 = vmatmul.mubr.bf16.gmra.mrb[0].mxu0 %v1656
  %v3177 = vpop.f32.mrb[0].mxu0
  %v3178 = vadd.f32 %v1323, %v3177
  %v3179 = vpop.f32.mrb[0].mxu0
  %v3180 = vpop.f32.mrb[0].mxu0
  %v3181 = vadd.f32 %v1328, %v3180
  %v3182 = vpop.f32.mrb[0].mxu0
  %3183 = vmatprep.mubr.bf16.mxu0 0
  %3184 = vmatmul.mubr.bf16.gmra.mrb[0].mxu0 %v1659
  %v3185 = vpop.f32.mrb[0].mxu0
  %v3186 = vadd.f32 %v1333, %v3185
  %v3187 = vpop.f32.mrb[0].mxu0
  %v3188 = vpop.f32.mrb[0].mxu0
  %v3189 = vadd.f32 %v1338, %v3188
  %v3190 = vpop.f32.mrb[0].mxu0
  %3191 = vmatprep.mubr.bf16.mxu0 0
  %3192 = vmatmul.mubr.bf16.gmra.mrb[0].mxu0 %v1662
  %v3193 = vpop.f32.mrb[0].mxu0
  %v3194 = vadd.f32 %v1343, %v3193
  %v3195 = vpop.f32.mrb[0].mxu0
  %v3196 = vpop.f32.mrb[0].mxu0
  %v3197 = vadd.f32 %v1348, %v3196
  %v3198 = vpop.f32.mrb[0].mxu0
  %3199 = vmatprep.mubr.bf16.mxu0 0
  %3200 = vmatmul.mubr.bf16.gmra.mrb[0].mxu0 %v1665
  %v3201 = vpop.f32.mrb[0].mxu0
  %v3202 = vadd.f32 %v1353, %v3201
  %v3203 = vpop.f32.mrb[0].mxu0
  %v3204 = vpop.f32.mrb[0].mxu0
  %v3205 = vadd.f32 %v1358, %v3204
  %v3206 = vpop.f32.mrb[0].mxu0
  %3207 = vmatprep.mubr.bf16.mxu0 0
  %3208 = vmatmul.mubr.bf16.gmra.mrb[0].mxu0 %v1668
  %v3209 = vpop.f32.mrb[0].mxu0
  %v3210 = vadd.f32 %v1363, %v3209
  %v3211 = vpop.f32.mrb[0].mxu0
  %v3212 = vpop.f32.mrb[0].mxu0
  %v3213 = vadd.f32 %v1368, %v3212
  %v3214 = vpop.f32.mrb[0].mxu0
  %3215 = vmatprep.mubr.bf16.mxu0 0
  %3216 = vmatmul.mubr.bf16.gmra.mrb[0].mxu0 %v1671
  %v3217 = vpop.f32.mrb[0].mxu0
  %v3218 = vadd.f32 %v192, %v3217
  %v3219 = vpop.f32.mrb[0].mxu0
  %v3220 = vpop.f32.mrb[0].mxu0
  %v3221 = vadd.f32 %v197, %v3220
  %v3222 = vpop.f32.mrb[0].mxu0
  %3223 = vmatprep.mubr.bf16.mxu0 0
  %3224 = vmatmul.mubr.bf16.gmra.mrb[0].mxu0 %v1674
  %v3225 = vpop.f32.mrb[0].mxu0
  %v3226 = vadd.f32 %v202, %v3225
  %v3227 = vpop.f32.mrb[0].mxu0
  %v3228 = vpop.f32.mrb[0].mxu0
  %v3229 = vadd.f32 %v207, %v3228
  %v3230 = vpop.f32.mrb[0].mxu0
  %3231 = vmatprep.mubr.bf16.mxu0 0
  %3232 = vmatmul.mubr.bf16.gmra.mrb[0].mxu0 %v1677
  %v3233 = vpop.f32.mrb[0].mxu0
  %v3234 = vadd.f32 %v212, %v3233
  %v3235 = vpop.f32.mrb[0].mxu0
  %v3236 = vpop.f32.mrb[0].mxu0
  %v3237 = vadd.f32 %v217, %v3236
  %v3238 = vpop.f32.mrb[0].mxu0
  %3239 = vmatprep.mubr.bf16.mxu0 0
  %3240 = vmatmul.mubr.bf16.gmra.mrb[0].mxu0 %v1680
  %v3241 = vpop.f32.mrb[0].mxu0
  %v3242 = vadd.f32 %v222, %v3241
  %v3243 = vpop.f32.mrb[0].mxu0
  %v3244 = vpop.f32.mrb[0].mxu0
  %v3245 = vadd.f32 %v227, %v3244
  %v3246 = vpop.f32.mrb[0].mxu0
  %3247 = vmatprep.mubr.bf16.mxu0 0
  %3248 = vmatmul.mubr.bf16.gmra.mrb[0].mxu0 %v1683
  %v3249 = vpop.f32.mrb[0].mxu0
  %v3250 = vadd.f32 %v232, %v3249
  %v3251 = vpop.f32.mrb[0].mxu0
  %v3252 = vpop.f32.mrb[0].mxu0
  %v3253 = vadd.f32 %v237, %v3252
  %v3254 = vpop.f32.mrb[0].mxu0
  %3255 = vmatprep.mubr.bf16.mxu0 0
  %3256 = vmatmul.mubr.bf16.gmra.mrb[0].mxu0 %v1686
  %v3257 = vpop.f32.mrb[0].mxu0
  %v3258 = vadd.f32 %v242, %v3257
  %v3259 = vpop.f32.mrb[0].mxu0
  %v3260 = vpop.f32.mrb[0].mxu0
  %v3261 = vadd.f32 %v247, %v3260
  %v3262 = vpop.f32.mrb[0].mxu0
  %3263 = vmatprep.mubr.bf16.mxu0 0
  %3264 = vmatmul.mubr.bf16.gmra.mrb[0].mxu0 %v1689
  %v3265 = vpop.f32.mrb[0].mxu0
  %v3266 = vadd.f32 %v252, %v3265
  %v3267 = vpop.f32.mrb[0].mxu0
  %v3268 = vpop.f32.mrb[0].mxu0
  %v3269 = vadd.f32 %v257, %v3268
  %v3270 = vpop.f32.mrb[0].mxu0
  %3271 = vmatprep.mubr.bf16.mxu0 0
  %3272 = vmatmul.mubr.bf16.gmra.mrb[0].mxu0 %v1692
  %v3273 = vpop.f32.mrb[0].mxu0
  %v3274 = vadd.f32 %v262, %v3273
  %v3275 = vpop.f32.mrb[0].mxu0
  %v3276 = vpop.f32.mrb[0].mxu0
  %v3277 = vadd.f32 %v267, %v3276
  %v3278 = vpop.f32.mrb[0].mxu0
  %3279 = vdwg.mxu0
  %v3280 = vtanh.pop %v3154
  %v3281 = vtanh.pop %v3157
  %v3282 = vtanh.pop %v3162
  %v3283 = vtanh.pop %v3165
  %v3284 = vtanh.pop %v3170
  %v3285 = vtanh.pop %v3173
  %v3286 = vtanh.pop %v3178
  %v3287 = vtanh.pop %v3181
  %v3288 = vtanh.pop %v3186
  %v3289 = vtanh.pop %v3189
  %v3290 = vtanh.pop %v3194
  %v3291 = vtanh.pop %v3197
  %v3292 = vtanh.pop %v3202
  %v3293 = vtanh.pop %v3205
  %v3294 = vtanh.pop %v3210
  %v3295 = vtanh.pop %v3213
  %v3296 = vtanh.pop %v3218
  %v3297 = vtanh.pop %v3221
  %v3298 = vtanh.pop %v3226
  %v3299 = vtanh.pop %v3229
  %v3300 = vtanh.pop %v3234
  %v3301 = vtanh.pop %v3237
  %v3302 = vtanh.pop %v3242
  %v3303 = vtanh.pop %v3245
  %v3304 = vtanh.pop %v3250
  %v3305 = vtanh.pop %v3253
  %v3306 = vtanh.pop %v3258
  %v3307 = vtanh.pop %v3261
  %v3308 = vtanh.pop %v3266
  %v3309 = vtanh.pop %v3269
  %v3310 = vtanh.pop %v3274
  %v3311 = vtanh.pop %v3277
  %v3312 = vmul.f32 %v3280, 0.5
  %v3313 = vmul.f32 %v3281, 0.5
  %v3314 = vmul.f32 %v3282, 0.5
  %v3315 = vmul.f32 %v3283, 0.5
  %v3316 = vmul.f32 %v3284, 0.5
  %v3317 = vmul.f32 %v3285, 0.5
  %v3318 = vmul.f32 %v3286, 0.5
  %v3319 = vmul.f32 %v3287, 0.5
  %v3320 = vmul.f32 %v3292, 0.5
  %v3321 = vmul.f32 %v3293, 0.5
  %v3322 = vmul.f32 %v3294, 0.5
  %v3323 = vmul.f32 %v3295, 0.5
  %v3324 = vmul.f32 %v3296, 0.5
  %v3325 = vmul.f32 %v3297, 0.5
  %v3326 = vmul.f32 %v3298, 0.5
  %v3327 = vmul.f32 %v3299, 0.5
  %v3328 = vmul.f32 %v3300, 0.5
  %v3329 = vmul.f32 %v3301, 0.5
  %v3330 = vmul.f32 %v3302, 0.5
  %v3331 = vmul.f32 %v3303, 0.5
  %v3332 = vmul.f32 %v3308, 0.5
  %v3333 = vmul.f32 %v3309, 0.5
  %v3334 = vmul.f32 %v3310, 0.5
  %v3335 = vmul.f32 %v3311, 0.5
  %v3336 = vadd.f32 %v3312, 0.5
  %v3337 = vadd.f32 %v3313, 0.5
  %v3338 = vadd.f32 %v3314, 0.5
  %v3339 = vadd.f32 %v3315, 0.5
  %v3340 = vadd.f32 %v3316, 0.5
  %v3341 = vadd.f32 %v3317, 0.5
  %v3342 = vadd.f32 %v3318, 0.5
  %v3343 = vadd.f32 %v3319, 0.5
  %v3344 = vadd.f32 %v3320, 0.5
  %v3345 = vadd.f32 %v3321, 0.5
  %v3346 = vadd.f32 %v3322, 0.5
  %v3347 = vadd.f32 %v3323, 0.5
  %v3348 = vadd.f32 %v3324, 0.5
  %v3349 = vadd.f32 %v3325, 0.5
  %v3350 = vadd.f32 %v3326, 0.5
  %v3351 = vadd.f32 %v3327, 0.5
  %v3352 = vadd.f32 %v3328, 0.5
  %v3353 = vadd.f32 %v3329, 0.5
  %v3354 = vadd.f32 %v3330, 0.5
  %v3355 = vadd.f32 %v3331, 0.5
  %v3356 = vadd.f32 %v3332, 0.5
  %v3357 = vadd.f32 %v3333, 0.5
  %v3358 = vadd.f32 %v3334, 0.5
  %v3359 = vadd.f32 %v3335, 0.5
  %v3360 = vmul.f32 %v3352, %v3083
  %v3361 = vmul.f32 %v3353, %v3084
  %v3362 = vmul.f32 %v3354, %v3085
  %v3363 = vmul.f32 %v3355, %v3086
  %v3364 = vmul.f32 %v3348, %v3304
  %v3365 = vmul.f32 %v3349, %v3305
  %v3366 = vmul.f32 %v3350, %v3306
  %v3367 = vmul.f32 %v3351, %v3307
  %v3368 = vadd.f32 %v3360, %v3364
  %v3369 = vadd.f32 %v3361, %v3365
  %v3370 = vadd.f32 %v3362, %v3366
  %v3371 = vadd.f32 %v3363, %v3367
  %v3372 = vmul.f32 %v3340, %v3095
  %v3373 = vmul.f32 %v3341, %v3096
  %v3374 = vmul.f32 %v3342, %v3097
  %v3375 = vmul.f32 %v3343, %v3098
  %v3376 = vmul.f32 %v3336, %v3288
  %v3377 = vmul.f32 %v3337, %v3289
  %v3378 = vmul.f32 %v3338, %v3290
  %v3379 = vmul.f32 %v3339, %v3291
  %v3380 = vadd.f32 %v3372, %v3376
  %v3381 = vadd.f32 %v3373, %v3377
  %v3382 = vadd.f32 %v3374, %v3378
  %v3383 = vadd.f32 %v3375, %v3379
  %v3384 = vtanh.pop %v3380
  %v3385 = vtanh.pop %v3381
  %v3386 = vtanh.pop %v3382
  %v3387 = vtanh.pop %v3383
  %v3388 = vtanh.pop %v3368
  %v3389 = vtanh.pop %v3369
  %v3390 = vtanh.pop %v3370
  %v3391 = vtanh.pop %v3371
  %v3392 = vmul.f32 %v3344, %v3384
  %v3393 = vmul.f32 %v3345, %v3385
  %v3394 = vmul.f32 %v3346, %v3386
  %v3395 = vmul.f32 %v3347, %v3387
  %v3396 = vmul.f32 %v3356, %v3388
  %v3397 = vmul.f32 %v3357, %v3389
  %v3398 = vmul.f32 %v3358, %v3390
  %v3399 = vmul.f32 %v3359, %v3391
  %v3400 = vpack.c.bf16 %v3393, %v3392
  %v3401 = vpack.c.bf16 %v3395, %v3394
  %v3402 = vpack.c.bf16 %v3397, %v3396
  %v3403 = vpack.c.bf16 %v3399, %v3398
  %3404 = vmatprep.subr.bf16.mxu0 0
  %3405 = vmatpush1.bf16.msra.mxu0 %v3400
  %3406 = vmatprep.subr.bf16.mxu0 0
  %3407 = vmatpush1.bf16.msra.mxu0 %v3401
  %3408 = vmatprep.subr.bf16.mxu0 0
  %3409 = vmatpush1.bf16.msra.mxu0 %v3402
  %3410 = vmatprep.subr.bf16.mxu0 0
  %3411 = vmatpush1.bf16.msra.mxu0 %v3403
  %3412 = vmatprep.subr.bf16.mxu0 0
  %3413 = vmatpush1.bf16.msra.mxu0 0
  %3414 = vmatprep.subr.bf16.mxu0 0
  %3415 = vmatpush1.bf16.msra.mxu0 0
  %3416 = vmatprep.subr.bf16.mxu0 0
  %3417 = vmatpush1.bf16.msra.mxu0 0
  %3418 = vmatprep.subr.bf16.mxu0 0
  %3419 = vmatpush1.bf16.msra.mxu0 0
  %3420 = vmatprep.subr.bf16.mxu0 0
  %3421 = vmatpush1.bf16.msra.mxu0 0
  %3422 = vmatprep.subr.bf16.mxu0 0
  %3423 = vmatpush1.bf16.msra.mxu0 0
  %3424 = vmatprep.subr.bf16.mxu0 0
  %3425 = vmatpush1.bf16.msra.mxu0 0
  %3426 = vmatprep.subr.bf16.mxu0 0
  %3427 = vmatpush1.bf16.msra.mxu0 0
  %3428 = vmatprep.subr.bf16.mxu0 0
  %3429 = vmatpush1.bf16.msra.mxu0 0
  %3430 = vmatprep.subr.bf16.mxu0 0
  %3431 = vmatpush1.bf16.msra.mxu0 0
  %3432 = vmatprep.subr.bf16.mxu0 0
  %3433 = vmatpush1.bf16.msra.mxu0 0
  %3434 = vmatprep.subr.bf16.mxu0 0
  %3435 = vmatpush1.bf16.msra.mxu0 0
  %3436 = vmatprep.mubr.bf16.mxu0 0
  %3437 = vmatmul.mubr.bf16.gmra.mrb[0].mxu0 %v1647
  %v3438 = vpop.f32.mrb[0].mxu0
  %v3439 = vadd.f32 %v1444, %v3438
  %v3440 = vpop.f32.mrb[0].mxu0
  %v3441 = vpop.f32.mrb[0].mxu0
  %v3442 = vadd.f32 %v1449, %v3441
  %v3443 = vpop.f32.mrb[0].mxu0
  %3444 = vmatprep.mubr.bf16.mxu0 0
  %3445 = vmatmul.mubr.bf16.gmra.mrb[0].mxu0 %v1650
  %v3446 = vpop.f32.mrb[0].mxu0
  %v3447 = vadd.f32 %v1454, %v3446
  %v3448 = vpop.f32.mrb[0].mxu0
  %v3449 = vpop.f32.mrb[0].mxu0
  %v3450 = vadd.f32 %v1459, %v3449
  %v3451 = vpop.f32.mrb[0].mxu0
  %3452 = vmatprep.mubr.bf16.mxu0 0
  %3453 = vmatmul.mubr.bf16.gmra.mrb[0].mxu0 %v1653
  %v3454 = vpop.f32.mrb[0].mxu0
  %v3455 = vadd.f32 %v1464, %v3454
  %v3456 = vpop.f32.mrb[0].mxu0
  %v3457 = vpop.f32.mrb[0].mxu0
  %v3458 = vadd.f32 %v1469, %v3457
  %v3459 = vpop.f32.mrb[0].mxu0
  %3460 = vmatprep.mubr.bf16.mxu0 0
  %3461 = vmatmul.mubr.bf16.gmra.mrb[0].mxu0 %v1656
  %v3462 = vpop.f32.mrb[0].mxu0
  %v3463 = vadd.f32 %v1474, %v3462
  %v3464 = vpop.f32.mrb[0].mxu0
  %v3465 = vpop.f32.mrb[0].mxu0
  %v3466 = vadd.f32 %v1479, %v3465
  %v3467 = vpop.f32.mrb[0].mxu0
  %3468 = vmatprep.mubr.bf16.mxu0 0
  %3469 = vmatmul.mubr.bf16.gmra.mrb[0].mxu0 %v1659
  %v3470 = vpop.f32.mrb[0].mxu0
  %v3471 = vadd.f32 %v1484, %v3470
  %v3472 = vpop.f32.mrb[0].mxu0
  %v3473 = vpop.f32.mrb[0].mxu0
  %v3474 = vadd.f32 %v1489, %v3473
  %v3475 = vpop.f32.mrb[0].mxu0
  %3476 = vmatprep.mubr.bf16.mxu0 0
  %3477 = vmatmul.mubr.bf16.gmra.mrb[0].mxu0 %v1662
  %v3478 = vpop.f32.mrb[0].mxu0
  %v3479 = vadd.f32 %v1494, %v3478
  %v3480 = vpop.f32.mrb[0].mxu0
  %v3481 = vpop.f32.mrb[0].mxu0
  %v3482 = vadd.f32 %v1499, %v3481
  %v3483 = vpop.f32.mrb[0].mxu0
  %3484 = vmatprep.mubr.bf16.mxu0 0
  %3485 = vmatmul.mubr.bf16.gmra.mrb[0].mxu0 %v1665
  %v3486 = vpop.f32.mrb[0].mxu0
  %v3487 = vadd.f32 %v1504, %v3486
  %v3488 = vpop.f32.mrb[0].mxu0
  %v3489 = vpop.f32.mrb[0].mxu0
  %v3490 = vadd.f32 %v1509, %v3489
  %v3491 = vpop.f32.mrb[0].mxu0
  %3492 = vmatprep.mubr.bf16.mxu0 0
  %3493 = vmatmul.mubr.bf16.gmra.mrb[0].mxu0 %v1668
  %v3494 = vpop.f32.mrb[0].mxu0
  %v3495 = vadd.f32 %v1514, %v3494
  %v3496 = vpop.f32.mrb[0].mxu0
  %v3497 = vpop.f32.mrb[0].mxu0
  %v3498 = vadd.f32 %v1519, %v3497
  %v3499 = vpop.f32.mrb[0].mxu0
  %3500 = vmatprep.mubr.bf16.mxu0 0
  %3501 = vmatmul.mubr.bf16.gmra.mrb[0].mxu0 %v1671
  %v3502 = vpop.f32.mrb[0].mxu0
  %v3503 = vadd.f32 %v192, %v3502
  %v3504 = vpop.f32.mrb[0].mxu0
  %v3505 = vpop.f32.mrb[0].mxu0
  %v3506 = vadd.f32 %v197, %v3505
  %v3507 = vpop.f32.mrb[0].mxu0
  %3508 = vmatprep.mubr.bf16.mxu0 0
  %3509 = vmatmul.mubr.bf16.gmra.mrb[0].mxu0 %v1674
  %v3510 = vpop.f32.mrb[0].mxu0
  %v3511 = vadd.f32 %v202, %v3510
  %v3512 = vpop.f32.mrb[0].mxu0
  %v3513 = vpop.f32.mrb[0].mxu0
  %v3514 = vadd.f32 %v207, %v3513
  %v3515 = vpop.f32.mrb[0].mxu0
  %3516 = vmatprep.mubr.bf16.mxu0 0
  %3517 = vmatmul.mubr.bf16.gmra.mrb[0].mxu0 %v1677
  %v3518 = vpop.f32.mrb[0].mxu0
  %v3519 = vadd.f32 %v212, %v3518
  %v3520 = vpop.f32.mrb[0].mxu0
  %v3521 = vpop.f32.mrb[0].mxu0
  %v3522 = vadd.f32 %v217, %v3521
  %v3523 = vpop.f32.mrb[0].mxu0
  %3524 = vmatprep.mubr.bf16.mxu0 0
  %3525 = vmatmul.mubr.bf16.gmra.mrb[0].mxu0 %v1680
  %v3526 = vpop.f32.mrb[0].mxu0
  %v3527 = vadd.f32 %v222, %v3526
  %v3528 = vpop.f32.mrb[0].mxu0
  %v3529 = vpop.f32.mrb[0].mxu0
  %v3530 = vadd.f32 %v227, %v3529
  %v3531 = vpop.f32.mrb[0].mxu0
  %3532 = vmatprep.mubr.bf16.mxu0 0
  %3533 = vmatmul.mubr.bf16.gmra.mrb[0].mxu0 %v1683
  %v3534 = vpop.f32.mrb[0].mxu0
  %v3535 = vadd.f32 %v232, %v3534
  %v3536 = vpop.f32.mrb[0].mxu0
  %v3537 = vpop.f32.mrb[0].mxu0
  %v3538 = vadd.f32 %v237, %v3537
  %v3539 = vpop.f32.mrb[0].mxu0
  %3540 = vmatprep.mubr.bf16.mxu0 0
  %3541 = vmatmul.mubr.bf16.gmra.mrb[0].mxu0 %v1686
  %v3542 = vpop.f32.mrb[0].mxu0
  %v3543 = vadd.f32 %v242, %v3542
  %v3544 = vpop.f32.mrb[0].mxu0
  %v3545 = vpop.f32.mrb[0].mxu0
  %v3546 = vadd.f32 %v247, %v3545
  %v3547 = vpop.f32.mrb[0].mxu0
  %3548 = vmatprep.mubr.bf16.mxu0 0
  %3549 = vmatmul.mubr.bf16.gmra.mrb[0].mxu0 %v1689
  %v3550 = vpop.f32.mrb[0].mxu0
  %v3551 = vadd.f32 %v252, %v3550
  %v3552 = vpop.f32.mrb[0].mxu0
  %v3553 = vpop.f32.mrb[0].mxu0
  %v3554 = vadd.f32 %v257, %v3553
  %v3555 = vpop.f32.mrb[0].mxu0
  %3556 = vmatprep.mubr.bf16.mxu0 0
  %3557 = vmatmul.mubr.bf16.gmra.mrb[0].mxu0 %v1692
  %v3558 = vpop.f32.mrb[0].mxu0
  %v3559 = vadd.f32 %v262, %v3558
  %v3560 = vpop.f32.mrb[0].mxu0
  %v3561 = vpop.f32.mrb[0].mxu0
  %v3562 = vadd.f32 %v267, %v3561
  %v3563 = vpop.f32.mrb[0].mxu0
  %3564 = vdwg.mxu0
  %v3565 = vtanh.pop %v3439
  %v3566 = vtanh.pop %v3442
  %v3567 = vtanh.pop %v3447
  %v3568 = vtanh.pop %v3450
  %v3569 = vtanh.pop %v3455
  %v3570 = vtanh.pop %v3458
  %v3571 = vtanh.pop %v3463
  %v3572 = vtanh.pop %v3466
  %v3573 = vtanh.pop %v3471
  %v3574 = vtanh.pop %v3474
  %v3575 = vtanh.pop %v3479
  %v3576 = vtanh.pop %v3482
  %v3577 = vtanh.pop %v3487
  %v3578 = vtanh.pop %v3490
  %v3579 = vtanh.pop %v3495
  %v3580 = vtanh.pop %v3498
  %v3581 = vtanh.pop %v3503
  %v3582 = vtanh.pop %v3506
  %v3583 = vtanh.pop %v3511
  %v3584 = vtanh.pop %v3514
  %v3585 = vtanh.pop %v3519
  %v3586 = vtanh.pop %v3522
  %v3587 = vtanh.pop %v3527
  %v3588 = vtanh.pop %v3530
  %v3589 = vtanh.pop %v3535
  %v3590 = vtanh.pop %v3538
  %v3591 = vtanh.pop %v3543
  %v3592 = vtanh.pop %v3546
  %v3593 = vtanh.pop %v3551
  %v3594 = vtanh.pop %v3554
  %v3595 = vtanh.pop %v3559
  %v3596 = vtanh.pop %v3562
  %v3597 = vmul.f32 %v3565, 0.5
  %v3598 = vmul.f32 %v3566, 0.5
  %v3599 = vmul.f32 %v3567, 0.5
  %v3600 = vmul.f32 %v3568, 0.5
  %v3601 = vmul.f32 %v3569, 0.5
  %v3602 = vmul.f32 %v3570, 0.5
  %v3603 = vmul.f32 %v3571, 0.5
  %v3604 = vmul.f32 %v3572, 0.5
  %v3605 = vmul.f32 %v3577, 0.5
  %v3606 = vmul.f32 %v3578, 0.5
  %v3607 = vmul.f32 %v3579, 0.5
  %v3608 = vmul.f32 %v3580, 0.5
  %v3609 = vmul.f32 %v3581, 0.5
  %v3610 = vmul.f32 %v3582, 0.5
  %v3611 = vmul.f32 %v3583, 0.5
  %v3612 = vmul.f32 %v3584, 0.5
  %v3613 = vmul.f32 %v3585, 0.5
  %v3614 = vmul.f32 %v3586, 0.5
  %v3615 = vmul.f32 %v3587, 0.5
  %v3616 = vmul.f32 %v3588, 0.5
  %v3617 = vmul.f32 %v3593, 0.5
  %v3618 = vmul.f32 %v3594, 0.5
  %v3619 = vmul.f32 %v3595, 0.5
  %v3620 = vmul.f32 %v3596, 0.5
  %v3621 = vadd.f32 %v3597, 0.5
  %v3622 = vadd.f32 %v3598, 0.5
  %v3623 = vadd.f32 %v3599, 0.5
  %v3624 = vadd.f32 %v3600, 0.5
  %v3625 = vadd.f32 %v3601, 0.5
  %v3626 = vadd.f32 %v3602, 0.5
  %v3627 = vadd.f32 %v3603, 0.5
  %v3628 = vadd.f32 %v3604, 0.5
  %v3629 = vadd.f32 %v3605, 0.5
  %v3630 = vadd.f32 %v3606, 0.5
  %v3631 = vadd.f32 %v3607, 0.5
  %v3632 = vadd.f32 %v3608, 0.5
  %v3633 = vadd.f32 %v3609, 0.5
  %v3634 = vadd.f32 %v3610, 0.5
  %v3635 = vadd.f32 %v3611, 0.5
  %v3636 = vadd.f32 %v3612, 0.5
  %v3637 = vadd.f32 %v3613, 0.5
  %v3638 = vadd.f32 %v3614, 0.5
  %v3639 = vadd.f32 %v3615, 0.5
  %v3640 = vadd.f32 %v3616, 0.5
  %v3641 = vadd.f32 %v3617, 0.5
  %v3642 = vadd.f32 %v3618, 0.5
  %v3643 = vadd.f32 %v3619, 0.5
  %v3644 = vadd.f32 %v3620, 0.5
  %v3645 = vmul.f32 %v3637, %v3368
  %v3646 = vmul.f32 %v3638, %v3369
  %v3647 = vmul.f32 %v3639, %v3370
  %v3648 = vmul.f32 %v3640, %v3371
  %v3649 = vmul.f32 %v3633, %v3589
  %v3650 = vmul.f32 %v3634, %v3590
  %v3651 = vmul.f32 %v3635, %v3591
  %v3652 = vmul.f32 %v3636, %v3592
  %v3653 = vadd.f32 %v3645, %v3649
  %v3654 = vadd.f32 %v3646, %v3650
  %v3655 = vadd.f32 %v3647, %v3651
  %v3656 = vadd.f32 %v3648, %v3652
  %v3657 = vmul.f32 %v3625, %v3380
  %v3658 = vmul.f32 %v3626, %v3381
  %v3659 = vmul.f32 %v3627, %v3382
  %v3660 = vmul.f32 %v3628, %v3383
  %v3661 = vmul.f32 %v3621, %v3573
  %v3662 = vmul.f32 %v3622, %v3574
  %v3663 = vmul.f32 %v3623, %v3575
  %v3664 = vmul.f32 %v3624, %v3576
  %v3665 = vadd.f32 %v3657, %v3661
  %v3666 = vadd.f32 %v3658, %v3662
  %v3667 = vadd.f32 %v3659, %v3663
  %v3668 = vadd.f32 %v3660, %v3664
  %v3669 = vtanh.pop %v3665
  %v3670 = vtanh.pop %v3666
  %v3671 = vtanh.pop %v3667
  %v3672 = vtanh.pop %v3668
  %v3673 = vtanh.pop %v3653
  %v3674 = vtanh.pop %v3654
  %v3675 = vtanh.pop %v3655
  %v3676 = vtanh.pop %v3656
  %v3677 = vmul.f32 %v3629, %v3669
  %v3678 = vmul.f32 %v3630, %v3670
  %v3679 = vmul.f32 %v3631, %v3671
  %v3680 = vmul.f32 %v3632, %v3672
  %v3681 = vmul.f32 %v3641, %v3673
  %v3682 = vmul.f32 %v3642, %v3674
  %v3683 = vmul.f32 %v3643, %v3675
  %v3684 = vmul.f32 %v3644, %v3676
  %v3685 = vpack.c.bf16 %v3678, %v3677
  %v3686 = vpack.c.bf16 %v3680, %v3679
  %v3687 = vpack.c.bf16 %v3682, %v3681
  %v3688 = vpack.c.bf16 %v3684, %v3683
  %3689 = vmatprep.subr.bf16.mxu0 0
  %3690 = vmatpush1.bf16.msra.mxu0 %v3685
  %3691 = vmatprep.subr.bf16.mxu0 0
  %3692 = vmatpush1.bf16.msra.mxu0 %v3686
  %3693 = vmatprep.subr.bf16.mxu0 0
  %3694 = vmatpush1.bf16.msra.mxu0 %v3687
  %3695 = vmatprep.subr.bf16.mxu0 0
  %3696 = vmatpush1.bf16.msra.mxu0 %v3688
  %3697 = vmatprep.subr.bf16.mxu0 0
  %3698 = vmatpush1.bf16.msra.mxu0 0
  %3699 = vmatprep.subr.bf16.mxu0 0
  %3700 = vmatpush1.bf16.msra.mxu0 0
  %3701 = vmatprep.subr.bf16.mxu0 0
  %3702 = vmatpush1.bf16.msra.mxu0 0
  %3703 = vmatprep.subr.bf16.mxu0 0
  %3704 = vmatpush1.bf16.msra.mxu0 0
  %3705 = vmatprep.subr.bf16.mxu0 0
  %3706 = vmatpush1.bf16.msra.mxu0 0
  %3707 = vmatprep.subr.bf16.mxu0 0
  %3708 = vmatpush1.bf16.msra.mxu0 0
  %3709 = vmatprep.subr.bf16.mxu0 0
  %3710 = vmatpush1.bf16.msra.mxu0 0
  %3711 = vmatprep.subr.bf16.mxu0 0
  %3712 = vmatpush1.bf16.msra.mxu0 0
  %3713 = vmatprep.subr.bf16.mxu0 0
  %3714 = vmatpush1.bf16.msra.mxu0 0
  %3715 = vmatprep.subr.bf16.mxu0 0
  %3716 = vmatpush1.bf16.msra.mxu0 0
  %3717 = vmatprep.subr.bf16.mxu0 0
  %3718 = vmatpush1.bf16.msra.mxu0 0
  %3719 = vmatprep.subr.bf16.mxu0 0
  %3720 = vmatpush1.bf16.msra.mxu0 0
  %3721 = vmatprep.mubr.bf16.mxu0 0
  %3722 = vmatmul.mubr.bf16.gmra.mrb[0].mxu0 %v1671
  %v3723 = vpop.f32.mrb[0].mxu0
  %v3724 = vadd.f32 %v192, %v3723
  %v3725 = vpop.f32.mrb[0].mxu0
  %v3726 = vpop.f32.mrb[0].mxu0
  %v3727 = vadd.f32 %v197, %v3726
  %v3728 = vpop.f32.mrb[0].mxu0
  %3729 = vmatprep.mubr.bf16.mxu0 0
  %3730 = vmatmul.mubr.bf16.gmra.mrb[0].mxu0 %v1674
  %v3731 = vpop.f32.mrb[0].mxu0
  %v3732 = vadd.f32 %v202, %v3731
  %v3733 = vpop.f32.mrb[0].mxu0
  %v3734 = vpop.f32.mrb[0].mxu0
  %v3735 = vadd.f32 %v207, %v3734
  %v3736 = vpop.f32.mrb[0].mxu0
  %3737 = vmatprep.mubr.bf16.mxu0 0
  %3738 = vmatmul.mubr.bf16.gmra.mrb[0].mxu0 %v1677
  %v3739 = vpop.f32.mrb[0].mxu0
  %v3740 = vadd.f32 %v212, %v3739
  %v3741 = vpop.f32.mrb[0].mxu0
  %v3742 = vpop.f32.mrb[0].mxu0
  %v3743 = vadd.f32 %v217, %v3742
  %v3744 = vpop.f32.mrb[0].mxu0
  %3745 = vmatprep.mubr.bf16.mxu0 0
  %3746 = vmatmul.mubr.bf16.gmra.mrb[0].mxu0 %v1680
  %v3747 = vpop.f32.mrb[0].mxu0
  %v3748 = vadd.f32 %v222, %v3747
  %v3749 = vpop.f32.mrb[0].mxu0
  %v3750 = vpop.f32.mrb[0].mxu0
  %v3751 = vadd.f32 %v227, %v3750
  %v3752 = vpop.f32.mrb[0].mxu0
  %3753 = vmatprep.mubr.bf16.mxu0 0
  %3754 = vmatmul.mubr.bf16.gmra.mrb[0].mxu0 %v1683
  %v3755 = vpop.f32.mrb[0].mxu0
  %v3756 = vadd.f32 %v232, %v3755
  %v3757 = vpop.f32.mrb[0].mxu0
  %v3758 = vpop.f32.mrb[0].mxu0
  %v3759 = vadd.f32 %v237, %v3758
  %v3760 = vpop.f32.mrb[0].mxu0
  %3761 = vmatprep.mubr.bf16.mxu0 0
  %3762 = vmatmul.mubr.bf16.gmra.mrb[0].mxu0 %v1686
  %v3763 = vpop.f32.mrb[0].mxu0
  %v3764 = vadd.f32 %v242, %v3763
  %v3765 = vpop.f32.mrb[0].mxu0
  %v3766 = vpop.f32.mrb[0].mxu0
  %v3767 = vadd.f32 %v247, %v3766
  %v3768 = vpop.f32.mrb[0].mxu0
  %3769 = vmatprep.mubr.bf16.mxu0 0
  %3770 = vmatmul.mubr.bf16.gmra.mrb[0].mxu0 %v1689
  %v3771 = vpop.f32.mrb[0].mxu0
  %v3772 = vadd.f32 %v252, %v3771
  %v3773 = vpop.f32.mrb[0].mxu0
  %v3774 = vpop.f32.mrb[0].mxu0
  %v3775 = vadd.f32 %v257, %v3774
  %v3776 = vpop.f32.mrb[0].mxu0
  %3777 = vmatprep.mubr.bf16.mxu0 0
  %3778 = vmatmul.mubr.bf16.gmra.mrb[0].mxu0 %v1692
  %v3779 = vpop.f32.mrb[0].mxu0
  %v3780 = vadd.f32 %v262, %v3779
  %v3781 = vpop.f32.mrb[0].mxu0
  %v3782 = vpop.f32.mrb[0].mxu0
  %v3783 = vadd.f32 %v267, %v3782
  %v3784 = vpop.f32.mrb[0].mxu0
  %3785 = vdwg.mxu0
  %v3786 = vtanh.pop %v3724
  %v3787 = vtanh.pop %v3727
  %v3788 = vtanh.pop %v3732
  %v3789 = vtanh.pop %v3735
  %v3790 = vtanh.pop %v3740
  %v3791 = vtanh.pop %v3743
  %v3792 = vtanh.pop %v3748
  %v3793 = vtanh.pop %v3751
  %v3794 = vtanh.pop %v3756
  %v3795 = vtanh.pop %v3759
  %v3796 = vtanh.pop %v3764
  %v3797 = vtanh.pop %v3767
  %v3798 = vtanh.pop %v3772
  %v3799 = vtanh.pop %v3775
  %v3800 = vtanh.pop %v3780
  %v3801 = vtanh.pop %v3783
  %v3802 = vmul.f32 %v3786, 0.5
  %v3803 = vmul.f32 %v3787, 0.5
  %v3804 = vmul.f32 %v3788, 0.5
  %v3805 = vmul.f32 %v3789, 0.5
  %v3806 = vmul.f32 %v3790, 0.5
  %v3807 = vmul.f32 %v3791, 0.5
  %v3808 = vmul.f32 %v3792, 0.5
  %v3809 = vmul.f32 %v3793, 0.5
  %v3810 = vmul.f32 %v3798, 0.5
  %v3811 = vmul.f32 %v3799, 0.5
  %v3812 = vmul.f32 %v3800, 0.5
  %v3813 = vmul.f32 %v3801, 0.5
  %v3814 = vadd.f32 %v3802, 0.5
  %v3815 = vadd.f32 %v3803, 0.5
  %v3816 = vadd.f32 %v3804, 0.5
  %v3817 = vadd.f32 %v3805, 0.5
  %v3818 = vadd.f32 %v3806, 0.5
  %v3819 = vadd.f32 %v3807, 0.5
  %v3820 = vadd.f32 %v3808, 0.5
  %v3821 = vadd.f32 %v3809, 0.5
  %v3822 = vadd.f32 %v3810, 0.5
  %v3823 = vadd.f32 %v3811, 0.5
  %v3824 = vadd.f32 %v3812, 0.5
  %v3825 = vadd.f32 %v3813, 0.5
  %v3826 = vmul.f32 %v3818, %v3653
  %v3827 = vmul.f32 %v3819, %v3654
  %v3828 = vmul.f32 %v3820, %v3655
  %v3829 = vmul.f32 %v3821, %v3656
  %v3830 = vmul.f32 %v3814, %v3794
  %v3831 = vmul.f32 %v3815, %v3795
  %v3832 = vmul.f32 %v3816, %v3796
  %v3833 = vmul.f32 %v3817, %v3797
  %v3834 = vadd.f32 %v3826, %v3830
  %v3835 = vadd.f32 %v3827, %v3831
  %v3836 = vadd.f32 %v3828, %v3832
  %v3837 = vadd.f32 %v3829, %v3833
  %v3838 = vtanh.pop %v3834
  %v3839 = vtanh.pop %v3835
  %v3840 = vtanh.pop %v3836
  %v3841 = vtanh.pop %v3837
  %v3842 = vmul.f32 %v3822, %v3838
  %v3843 = vmul.f32 %v3823, %v3839
  %v3844 = vmul.f32 %v3824, %v3840
  %v3845 = vmul.f32 %v3825, %v3841
  %v3846 = vld [vmem:[%s5] sm:$0xff]
  %v3847 = vld [vmem:[%s5 + $0x8] sm:$0xff]
  %v3848 = vld [vmem:[%s5 + $0x10] sm:$0xff]
  %v3849 = vld [vmem:[%s5 + $0x18] sm:$0xff]
  %3851 = vset.pattern.permute.xlu0 0
  %3852 = vperm.xlu0 %3851, %v3846
  %v3853 = vpop.permute.xlu0 %3852
  %3856 = vset.pattern.permute.xlu0 0
  %3857 = vperm.xlu0 %3856, %v3847
  %v3858 = vpop.permute.xlu0 %3857
  %3861 = vset.pattern.permute.xlu0 0
  %3862 = vperm.xlu0 %3861, %v3848
  %v3863 = vpop.permute.xlu0 %3862
  %3866 = vset.pattern.permute.xlu0 0
  %3867 = vperm.xlu0 %3866, %v3849
  %v3868 = vpop.permute.xlu0 %3867
  %v3870 = vmul.f32 %v3842, %v3853
  %v3871 = vmul.f32 %v3843, %v3858
  %v3872 = vmul.f32 %v3844, %v3863
  %v3873 = vmul.f32 %v3845, %v3868
  %v3874 = vadd.f32 %v3870, %v3871
  %v3875 = vadd.f32 %v3874, %v3872
  %v3876 = vadd.f32 %v3875, %v3873
  %v3877 = vrot.slane %v3876, 4
  %v3878 = vadd.f32 %v3876, %v3877
  %v3879 = vrot.slane %v3878, 2
  %v3880 = vadd.f32 %v3878, %v3879
  %v3881 = vrot.slane %v3880, 1
  %v3882 = vadd.f32 %v3880, %v3881
  %v3883 = vld [vmem:[#allocation2] sm:$0x1]
  %3885 = vset.pattern.permute.xlu0 0
  %3886 = vperm.xlu0 %3885, %v3883
  %v3887 = vpop.permute.xlu0 %3886
  %v3889 = vlaneseq
  %v3890 = vshrl.u32 %v3889, 7
  %v3891 = vsub.s32 0, %v3890
  %v3892 = vrot.slane %v3887, %v3891
  %v3893 = vadd.f32 %v3882, %v3892
  %v3894 = vxor.u32 %v3893, 2147483648
  %v3895 = vmul.f32 %v3894, 1.442695
  %v3896 = vpow.pop %v3895
  %v3897 = vadd.f32 %v3896, 1.0
  %v3898 = vrcp.pop %v3897
  %v3899 = vmul.f32 1.0, %v3898
  %3900 = vst [vmem:[%s7] sm:$0x1] %v3899
  // Predicated region
  $region30: #{lstm_model_forward.1} parent=0 // pred_check
    _
  $region31: #{lstm_model_forward.1} parent=0 // pred_check_branch
    %3902 = sbr.rel (0) target = $region33
  $region32: #{lstm_model_forward.1} parent=0 // pred_region
    _
  $region33: #{lstm_model_forward.1} parent=0 // pred_fallthru
    _
  // Predicated region
  $region34: #{lstm_model_forward.1} parent=0 // pred_check
    _
  $region35: #{lstm_model_forward.1} parent=0 // pred_check_branch
    %3904 = sbr.rel (0) target = $region37
  $region36: #{lstm_model_forward.1} parent=0 // pred_region
    _
  $region37: #{lstm_model_forward.1} parent=0 // pred_fallthru
    _

</llo_original>
